<compile_context>
chip_gen: v7x
topology: tpu7x:2x2x1
jax: 0.10.0
libtpu: 0.0.40
codegen_flags: <defaults>
</compile_context>

<pallas_src>
import math

import jax
import jax.numpy as jnp
from jax.experimental import pallas as pl
from jax.experimental.pallas import tpu as pltpu

# ---- problem sizes (small, consistent with the module) ----
B, T = 2, 8                 # batch, sequence length
H = 32                      # key/query/value/hidden size == norm_shape
NUM_HEADS = 4
HEAD_DIM = H // NUM_HEADS
FFN_H = 64                  # ffn_hidden_size
LN_EPS = 1e-5
NEG_INF = -1e6


# ----------------------------- Pallas kernel -----------------------------
def _layer_norm(x, gamma, beta):
    mu = jnp.mean(x, axis=-1, keepdims=True)
    var = jnp.mean((x - mu) ** 2, axis=-1, keepdims=True)
    return (x - mu) * jax.lax.rsqrt(var + LN_EPS) * gamma + beta


def _dot_t(a, b):
    """a @ b.T via dot_general contracting the last dim of both (MXU friendly)."""
    return jax.lax.dot_general(a, b, (((1,), (1,)), ((), ())),
                               preferred_element_type=jnp.float32)


def encoder_block_kernel(lens_ref,                      # scalar prefetch: (B,) int32 SMEM
                         x_ref,                         # (B*T, H) VMEM
                         attn_w_ref,                    # (4*NUM_HEADS, H, HEAD_DIM)
                         ffn_w_ref,                     # (2, H, FFN_H): [wf1, wf2.T]
                         vec_ref,                       # (8, H): g1,b1,bf2,g2,b2,pad
                         bf1_ref,                       # (1, FFN_H)
                         out_ref):                      # (B*T, H)
    X = x_ref[...]                                      # (B*T, H)

    vecs = vec_ref[...]
    g1, b1 = vecs[0:1], vecs[1:2]
    bf2, g2, b2 = vecs[2:3], vecs[3:4], vecs[4:5]
    bf1 = bf1_ref[...]

    # head-invariant masks, hoisted out of the head loop
    col = jax.lax.broadcasted_iota(jnp.int32, (T, T), 1)
    masks = [col < lens_ref[b] for b in range(B)]

    scale = 1.0 / math.sqrt(HEAD_DIM)

    # ---- multi-head self-attention ----
    O = jnp.zeros((B * T, H), jnp.float32)
    for h in range(NUM_HEADS):                          # static unroll over heads
        wq_h = attn_w_ref[h]                            # (H, HEAD_DIM)
        wk_h = attn_w_ref[NUM_HEADS + h]
        wv_h = attn_w_ref[2 * NUM_HEADS + h]
        wo_ht = attn_w_ref[3 * NUM_HEADS + h]           # (H, HEAD_DIM) == Wo_h.T

        Qa = jnp.dot(X, wq_h, preferred_element_type=jnp.float32) * scale  # (B*T, D)
        Ka = jnp.dot(X, wk_h, preferred_element_type=jnp.float32)
        Va = jnp.dot(X, wv_h, preferred_element_type=jnp.float32)

        heads = []
        for b in range(B):                              # keep score matrices per batch
            sl = slice(b * T, (b + 1) * T)              # sublane-aligned row slice
            s = _dot_t(Qa[sl], Ka[sl])                  # (T, T)
            s = jnp.where(masks[b], s, NEG_INF)
            s = s - jnp.max(s, axis=-1, keepdims=True)
            p = jnp.exp(s)
            p = p * pl.reciprocal(jnp.sum(p, axis=-1, keepdims=True), approx=True)
            heads.append(jnp.dot(p, Va[sl], preferred_element_type=jnp.float32))
        head_all = jnp.concatenate(heads, axis=0)       # (B*T, D) sublane concat
        # concat(heads) @ Wo == sum_h head_h @ Wo_h
        O = O + _dot_t(head_all, wo_ht)                 # (B*T, H)

    Y = _layer_norm(X + O, g1, b1)

    # ---- position-wise FFN ----
    hidden = jnp.maximum(
        jnp.dot(Y, ffn_w_ref[0], preferred_element_type=jnp.float32) + bf1, 0.0)
    ffn_out = _dot_t(hidden, ffn_w_ref[1]) + bf2        # ffn_w_ref[1] == wf2.T

    out_ref[...] = _layer_norm(Y + ffn_out, g2, b2)


# ----------------------------- wrapper -----------------------------
def _pack_params(params):
    (wq, wk, wv, wo, g1, b1, wf1, bf1, wf2, bf2, g2, b2) = params

    def cols_to_heads(w):                               # (H, H) -> (NUM_HEADS, H, HEAD_DIM)
        return w.reshape(H, NUM_HEADS, HEAD_DIM).transpose(1, 0, 2)

    wo_t = wo.reshape(NUM_HEADS, HEAD_DIM, H).transpose(0, 2, 1)   # per-head Wo_h^T
    attn_w = jnp.concatenate(
        [cols_to_heads(wq), cols_to_heads(wk), cols_to_heads(wv), wo_t],
        axis=0)                                         # (4*NUM_HEADS, H, HEAD_DIM)
    ffn_w = jnp.stack([wf1, wf2.T], axis=0)             # (2, H, FFN_H)
    vecs = jnp.concatenate(
        [g1, b1, bf2, g2, b2, jnp.zeros((3, H), jnp.float32)], axis=0)  # (8, H)
    return attn_w, ffn_w, vecs, bf1


def encoder_block(x, valid_lens, params):
    attn_w, ffn_w, vecs, bf1 = _pack_params(params)
    x2 = x.reshape(B * T, H)                            # free bitcast outside the kernel

    out = pl.pallas_call(
        encoder_block_kernel,
        out_shape=jax.ShapeDtypeStruct((B * T, H), jnp.float32),
        grid_spec=pltpu.PrefetchScalarGridSpec(
            num_scalar_prefetch=1,
            grid=(1,),                                  # single invocation: no per-step overhead
            in_specs=[
                pl.BlockSpec((B * T, H), lambda i, lens: (0, 0)),
                pl.BlockSpec(attn_w.shape, lambda i, lens: (0, 0, 0)),
                pl.BlockSpec(ffn_w.shape, lambda i, lens: (0, 0, 0)),
                pl.BlockSpec(vecs.shape, lambda i, lens: (0, 0)),
                pl.BlockSpec(bf1.shape, lambda i, lens: (0, 0)),
            ],
            out_specs=pl.BlockSpec((B * T, H), lambda i, lens: (0, 0)),
        ),
        compiler_params=pltpu.CompilerParams(dimension_semantics=("arbitrary",)),
    )(valid_lens, x2, attn_w, ffn_w, vecs, bf1)
    return out.reshape(B, T, H)


# ----------------------------- pure-JAX reference -----------------------------
def reference(x, lens, params):
    (wq, wk, wv, wo, g1, b1, wf1, bf1, wf2, bf2, g2, b2) = params

    def ln(v, g, bb):
        mu = v.mean(-1, keepdims=True)
        var = ((v - mu) ** 2).mean(-1, keepdims=True)
        return (v - mu) / jnp.sqrt(var + LN_EPS) * g + bb

    Q, K, V = x @ wq, x @ wk, x @ wv
    Bq, Tq, _ = Q.shape
    Qh = Q.reshape(Bq, Tq, NUM_HEADS, HEAD_DIM).transpose(0, 2, 1, 3)
    Kh = K.reshape(Bq, Tq, NUM_HEADS, HEAD_DIM).transpose(0, 2, 1, 3)
    Vh = V.reshape(Bq, Tq, NUM_HEADS, HEAD_DIM).transpose(0, 2, 1, 3)
    s = jnp.einsum('bhqd,bhkd->bhqk', Qh, Kh) / math.sqrt(HEAD_DIM)
    col = jnp.arange(Tq)[None, None, None, :]
    s = jnp.where(col < lens[:, None, None, None], s, NEG_INF)
    p = jax.nn.softmax(s, axis=-1)
    o = jnp.einsum('bhqk,bhkd->bhqd', p, Vh).transpose(0, 2, 1, 3).reshape(Bq, Tq, H)
    attn = o @ wo
    Y = ln(x + attn, g1, b1)
    ffn = jnp.maximum(Y @ wf1 + bf1, 0.0) @ wf2 + bf2
    return ln(Y + ffn, g2, b2)


# ----------------------------- main -----------------------------
if __name__ == "__main__":
    key = jax.random.PRNGKey(0)
    ks = jax.random.split(key, 16)

    x = jax.random.normal(ks[0], (B, T, H), jnp.float32)
    valid_lens = jnp.array([3, 8], dtype=jnp.int32)

    def w(k, shape, scale=0.1):
        return (scale * jax.random.normal(k, shape)).astype(jnp.float32)

    params = [
        # MultiHeadAttention: W_q, W_k, W_v, W_o (bias=False as in d2l)
        w(ks[1], (H, H)), w(ks[2], (H, H)), w(ks[3], (H, H)), w(ks[4], (H, H)),
        # LayerNorm1 gamma/beta
        (1.0 + 0.1 * jax.random.normal(ks[5], (1, H))).astype(jnp.float32),
        w(ks[6], (1, H), 0.05),
        # FFN dense1 / dense2 (with bias)
        w(ks[7], (H, FFN_H)), w(ks[8], (1, FFN_H), 0.05),
        w(ks[9], (FFN_H, H)), w(ks[10], (1, H), 0.05),
        # LayerNorm2 gamma/beta
        (1.0 + 0.1 * jax.random.normal(ks[11], (1, H))).astype(jnp.float32),
        w(ks[12], (1, H), 0.05),
    ]

    out = encoder_block(x, valid_lens, params)
    out = jax.block_until_ready(out)

    ref = reference(x, valid_lens, params)
    assert out.shape == (B, T, H)
    # tolerance loosened slightly vs 1e-4 because of the approximate (EUP) softmax reciprocal
    err = float(jnp.max(jnp.abs(out - ref)))
    assert jnp.allclose(out, ref, atol=2e-3, rtol=2e-3), err

    print("KERNEL_OK")
</pallas_src>

<mosaic_0001>
module attributes {stable_mosaic.version = 11 : i64} {
  func.func @encoder_block_kernel(%arg0: i32, %arg1: memref<2xi32, #tpu.memory_space<smem>>, %arg2: memref<16x32xf32, #tpu.memory_space<vmem>>, %arg3: memref<16x32x8xf32, #tpu.memory_space<vmem>>, %arg4: memref<2x32x64xf32, #tpu.memory_space<vmem>>, %arg5: memref<8x32xf32, #tpu.memory_space<vmem>>, %arg6: memref<1x64xf32, #tpu.memory_space<vmem>>, %arg7: memref<16x32xf32, #tpu.memory_space<vmem>>) attributes {dimension_semantics = [#tpu.dimension_semantics<arbitrary>], iteration_bounds = array<i64: 1>, scalar_prefetch = 1 : i64, scratch_operands = 0 : i64, tpu.core_type = #tpu.core_type<tc>, window_params = [{pipeline_mode = #tpu.pipeline_mode<synchronous>, transform_indices = @transform_0, window_bounds = array<i64: 16, 32>}, {pipeline_mode = #tpu.pipeline_mode<synchronous>, transform_indices = @transform_1, window_bounds = array<i64: 16, 32, 8>}, {pipeline_mode = #tpu.pipeline_mode<synchronous>, transform_indices = @transform_2, window_bounds = array<i64: 2, 32, 64>}, {pipeline_mode = #tpu.pipeline_mode<synchronous>, transform_indices = @transform_3, window_bounds = array<i64: 8, 32>}, {pipeline_mode = #tpu.pipeline_mode<synchronous>, transform_indices = @transform_4, window_bounds = array<i64: 1, 64>}, {pipeline_mode = #tpu.pipeline_mode<synchronous>, transform_indices = @transform_5, window_bounds = array<i64: 16, 32>}]} {
    %c0 = arith.constant 0 : index
    %c0_0 = arith.constant 0 : index
    %0 = vector.load %arg2[%c0, %c0_0] : memref<16x32xf32, #tpu.memory_space<vmem>>, vector<16x32xf32>
    %c0_1 = arith.constant 0 : index
    %c0_2 = arith.constant 0 : index
    %1 = vector.load %arg5[%c0_1, %c0_2] : memref<8x32xf32, #tpu.memory_space<vmem>>, vector<8x32xf32>
    %2 = vector.extract_strided_slice %1 {offsets = [0, 0], sizes = [1, 32], strides = [1, 1]} : vector<8x32xf32> to vector<1x32xf32>
    %3 = vector.extract_strided_slice %1 {offsets = [1, 0], sizes = [1, 32], strides = [1, 1]} : vector<8x32xf32> to vector<1x32xf32>
    %4 = vector.extract_strided_slice %1 {offsets = [2, 0], sizes = [1, 32], strides = [1, 1]} : vector<8x32xf32> to vector<1x32xf32>
    %5 = vector.extract_strided_slice %1 {offsets = [3, 0], sizes = [1, 32], strides = [1, 1]} : vector<8x32xf32> to vector<1x32xf32>
    %6 = vector.extract_strided_slice %1 {offsets = [4, 0], sizes = [1, 32], strides = [1, 1]} : vector<8x32xf32> to vector<1x32xf32>
    %c0_3 = arith.constant 0 : index
    %c0_4 = arith.constant 0 : index
    %7 = vector.load %arg6[%c0_3, %c0_4] : memref<1x64xf32, #tpu.memory_space<vmem>>, vector<1x64xf32>
    %8 = tpu.iota {dimensions = array<i32: 1>} : vector<8x8xi32>
    %c0_5 = arith.constant 0 : index
    %9 = memref.load %arg1[%c0_5] : memref<2xi32, #tpu.memory_space<smem>>
    %10 = vector.broadcast %9 : i32 to vector<8x8xi32>
    %11 = arith.cmpi slt, %8, %10 : vector<8x8xi32>
    %c1 = arith.constant 1 : index
    %12 = memref.load %arg1[%c1] : memref<2xi32, #tpu.memory_space<smem>>
    %13 = vector.broadcast %12 : i32 to vector<8x8xi32>
    %14 = arith.cmpi slt, %8, %13 : vector<8x8xi32>
    %cst = arith.constant 0.000000e+00 : f32
    %15 = vector.broadcast %cst : f32 to vector<16x32xf32>
    %c0_6 = arith.constant 0 : index
    %c0_7 = arith.constant 0 : index
    %c0_8 = arith.constant 0 : index
    %16 = vector.load %arg3[%c0_6, %c0_7, %c0_8] : memref<16x32x8xf32, #tpu.memory_space<vmem>>, vector<1x32x8xf32>
    %17 = vector.shape_cast %16 : vector<1x32x8xf32> to vector<32x8xf32>
    %c4 = arith.constant 4 : index
    %c0_9 = arith.constant 0 : index
    %c0_10 = arith.constant 0 : index
    %18 = vector.load %arg3[%c4, %c0_9, %c0_10] : memref<16x32x8xf32, #tpu.memory_space<vmem>>, vector<1x32x8xf32>
    %19 = vector.shape_cast %18 : vector<1x32x8xf32> to vector<32x8xf32>
    %c8 = arith.constant 8 : index
    %c0_11 = arith.constant 0 : index
    %c0_12 = arith.constant 0 : index
    %20 = vector.load %arg3[%c8, %c0_11, %c0_12] : memref<16x32x8xf32, #tpu.memory_space<vmem>>, vector<1x32x8xf32>
    %21 = vector.shape_cast %20 : vector<1x32x8xf32> to vector<32x8xf32>
    %c12 = arith.constant 12 : index
    %c0_13 = arith.constant 0 : index
    %c0_14 = arith.constant 0 : index
    %22 = vector.load %arg3[%c12, %c0_13, %c0_14] : memref<16x32x8xf32, #tpu.memory_space<vmem>>, vector<1x32x8xf32>
    %23 = vector.shape_cast %22 : vector<1x32x8xf32> to vector<32x8xf32>
    %cst_15 = arith.constant dense<0.000000e+00> : vector<16x8xf32>
    %24 = tpu.matmul %0, %17, %cst_15 {dimension_numbers = #tpu.dot_dimension_numbers<[1], [0], [0], [1], [0, 0, 1, 1], [], []>} : vector<16x32xf32>, vector<32x8xf32>, vector<16x8xf32> -> vector<16x8xf32>
    %cst_16 = arith.constant 0.353553385 : f32
    %25 = vector.broadcast %cst_16 : f32 to vector<16x8xf32>
    %26 = arith.mulf %24, %25 : vector<16x8xf32>
    %cst_17 = arith.constant dense<0.000000e+00> : vector<16x8xf32>
    %27 = tpu.matmul %0, %19, %cst_17 {dimension_numbers = #tpu.dot_dimension_numbers<[1], [0], [0], [1], [0, 0, 1, 1], [], []>} : vector<16x32xf32>, vector<32x8xf32>, vector<16x8xf32> -> vector<16x8xf32>
    %cst_18 = arith.constant dense<0.000000e+00> : vector<16x8xf32>
    %28 = tpu.matmul %0, %21, %cst_18 {dimension_numbers = #tpu.dot_dimension_numbers<[1], [0], [0], [1], [0, 0, 1, 1], [], []>} : vector<16x32xf32>, vector<32x8xf32>, vector<16x8xf32> -> vector<16x8xf32>
    %29 = vector.extract_strided_slice %26 {offsets = [0, 0], sizes = [8, 8], strides = [1, 1]} : vector<16x8xf32> to vector<8x8xf32>
    %30 = vector.extract_strided_slice %27 {offsets = [0, 0], sizes = [8, 8], strides = [1, 1]} : vector<16x8xf32> to vector<8x8xf32>
    %cst_19 = arith.constant dense<0.000000e+00> : vector<8x8xf32>
    %31 = tpu.matmul %29, %30, %cst_19 {dimension_numbers = #tpu.dot_dimension_numbers<[1], [1], [0], [0], [0, 0, 1, 0], [], []>} : vector<8x8xf32>, vector<8x8xf32>, vector<8x8xf32> -> vector<8x8xf32>
    %cst_20 = arith.constant -1.000000e+06 : f32
    %32 = vector.broadcast %cst_20 : f32 to vector<8x8xf32>
    %33 = arith.select %11, %31, %32 : vector<8x8xi1>, vector<8x8xf32>
    %cst_21 = arith.constant dense<0xFF800000> : vector<8xf32>
    %34 = vector.multi_reduction <maximumf>, %33, %cst_21 [1] : vector<8x8xf32> to vector<8xf32>
    %35 = vector.shape_cast %34 : vector<8xf32> to vector<8x1xf32>
    %36 = vector.broadcast %35 : vector<8x1xf32> to vector<8x8xf32>
    %37 = arith.subf %33, %36 : vector<8x8xf32>
    %38 = math.exp %37 : vector<8x8xf32>
    %cst_22 = arith.constant dense<0.000000e+00> : vector<8xf32>
    %39 = vector.multi_reduction <add>, %38, %cst_22 [1] : vector<8x8xf32> to vector<8xf32>
    %40 = vector.shape_cast %39 : vector<8xf32> to vector<8x1xf32>
    %41 = tpu.reciprocal %40 {approx = true} : vector<8x1xf32> -> vector<8x1xf32>
    %42 = vector.broadcast %41 : vector<8x1xf32> to vector<8x8xf32>
    %43 = arith.mulf %38, %42 : vector<8x8xf32>
    %44 = vector.extract_strided_slice %28 {offsets = [0, 0], sizes = [8, 8], strides = [1, 1]} : vector<16x8xf32> to vector<8x8xf32>
    %cst_23 = arith.constant dense<0.000000e+00> : vector<8x8xf32>
    %45 = tpu.matmul %43, %44, %cst_23 {dimension_numbers = #tpu.dot_dimension_numbers<[1], [0], [0], [1], [0, 0, 1, 1], [], []>} : vector<8x8xf32>, vector<8x8xf32>, vector<8x8xf32> -> vector<8x8xf32>
    %46 = vector.extract_strided_slice %26 {offsets = [8, 0], sizes = [8, 8], strides = [1, 1]} : vector<16x8xf32> to vector<8x8xf32>
    %47 = vector.extract_strided_slice %27 {offsets = [8, 0], sizes = [8, 8], strides = [1, 1]} : vector<16x8xf32> to vector<8x8xf32>
    %cst_24 = arith.constant dense<0.000000e+00> : vector<8x8xf32>
    %48 = tpu.matmul %46, %47, %cst_24 {dimension_numbers = #tpu.dot_dimension_numbers<[1], [1], [0], [0], [0, 0, 1, 0], [], []>} : vector<8x8xf32>, vector<8x8xf32>, vector<8x8xf32> -> vector<8x8xf32>
    %cst_25 = arith.constant -1.000000e+06 : f32
    %49 = vector.broadcast %cst_25 : f32 to vector<8x8xf32>
    %50 = arith.select %14, %48, %49 : vector<8x8xi1>, vector<8x8xf32>
    %cst_26 = arith.constant dense<0xFF800000> : vector<8xf32>
    %51 = vector.multi_reduction <maximumf>, %50, %cst_26 [1] : vector<8x8xf32> to vector<8xf32>
    %52 = vector.shape_cast %51 : vector<8xf32> to vector<8x1xf32>
    %53 = vector.broadcast %52 : vector<8x1xf32> to vector<8x8xf32>
    %54 = arith.subf %50, %53 : vector<8x8xf32>
    %55 = math.exp %54 : vector<8x8xf32>
    %cst_27 = arith.constant dense<0.000000e+00> : vector<8xf32>
    %56 = vector.multi_reduction <add>, %55, %cst_27 [1] : vector<8x8xf32> to vector<8xf32>
    %57 = vector.shape_cast %56 : vector<8xf32> to vector<8x1xf32>
    %58 = tpu.reciprocal %57 {approx = true} : vector<8x1xf32> -> vector<8x1xf32>
    %59 = vector.broadcast %58 : vector<8x1xf32> to vector<8x8xf32>
    %60 = arith.mulf %55, %59 : vector<8x8xf32>
    %61 = vector.extract_strided_slice %28 {offsets = [8, 0], sizes = [8, 8], strides = [1, 1]} : vector<16x8xf32> to vector<8x8xf32>
    %cst_28 = arith.constant dense<0.000000e+00> : vector<8x8xf32>
    %62 = tpu.matmul %60, %61, %cst_28 {dimension_numbers = #tpu.dot_dimension_numbers<[1], [0], [0], [1], [0, 0, 1, 1], [], []>} : vector<8x8xf32>, vector<8x8xf32>, vector<8x8xf32> -> vector<8x8xf32>
    %63 = tpu.concatenate %45, %62 in 0 : vector<8x8xf32>, vector<8x8xf32> -> vector<16x8xf32>
    %cst_29 = arith.constant dense<0.000000e+00> : vector<16x32xf32>
    %64 = tpu.matmul %63, %23, %cst_29 {dimension_numbers = #tpu.dot_dimension_numbers<[1], [1], [0], [0], [0, 0, 1, 0], [], []>} : vector<16x8xf32>, vector<32x8xf32>, vector<16x32xf32> -> vector<16x32xf32>
    %65 = arith.addf %15, %64 : vector<16x32xf32>
    %c1_30 = arith.constant 1 : index
    %c0_31 = arith.constant 0 : index
    %c0_32 = arith.constant 0 : index
    %66 = vector.load %arg3[%c1_30, %c0_31, %c0_32] : memref<16x32x8xf32, #tpu.memory_space<vmem>>, vector<1x32x8xf32>
    %67 = vector.shape_cast %66 : vector<1x32x8xf32> to vector<32x8xf32>
    %c5 = arith.constant 5 : index
    %c0_33 = arith.constant 0 : index
    %c0_34 = arith.constant 0 : index
    %68 = vector.load %arg3[%c5, %c0_33, %c0_34] : memref<16x32x8xf32, #tpu.memory_space<vmem>>, vector<1x32x8xf32>
    %69 = vector.shape_cast %68 : vector<1x32x8xf32> to vector<32x8xf32>
    %c9 = arith.constant 9 : index
    %c0_35 = arith.constant 0 : index
    %c0_36 = arith.constant 0 : index
    %70 = vector.load %arg3[%c9, %c0_35, %c0_36] : memref<16x32x8xf32, #tpu.memory_space<vmem>>, vector<1x32x8xf32>
    %71 = vector.shape_cast %70 : vector<1x32x8xf32> to vector<32x8xf32>
    %c13 = arith.constant 13 : index
    %c0_37 = arith.constant 0 : index
    %c0_38 = arith.constant 0 : index
    %72 = vector.load %arg3[%c13, %c0_37, %c0_38] : memref<16x32x8xf32, #tpu.memory_space<vmem>>, vector<1x32x8xf32>
    %73 = vector.shape_cast %72 : vector<1x32x8xf32> to vector<32x8xf32>
    %cst_39 = arith.constant dense<0.000000e+00> : vector<16x8xf32>
    %74 = tpu.matmul %0, %67, %cst_39 {dimension_numbers = #tpu.dot_dimension_numbers<[1], [0], [0], [1], [0, 0, 1, 1], [], []>} : vector<16x32xf32>, vector<32x8xf32>, vector<16x8xf32> -> vector<16x8xf32>
    %cst_40 = arith.constant 0.353553385 : f32
    %75 = vector.broadcast %cst_40 : f32 to vector<16x8xf32>
    %76 = arith.mulf %74, %75 : vector<16x8xf32>
    %cst_41 = arith.constant dense<0.000000e+00> : vector<16x8xf32>
    %77 = tpu.matmul %0, %69, %cst_41 {dimension_numbers = #tpu.dot_dimension_numbers<[1], [0], [0], [1], [0, 0, 1, 1], [], []>} : vector<16x32xf32>, vector<32x8xf32>, vector<16x8xf32> -> vector<16x8xf32>
    %cst_42 = arith.constant dense<0.000000e+00> : vector<16x8xf32>
    %78 = tpu.matmul %0, %71, %cst_42 {dimension_numbers = #tpu.dot_dimension_numbers<[1], [0], [0], [1], [0, 0, 1, 1], [], []>} : vector<16x32xf32>, vector<32x8xf32>, vector<16x8xf32> -> vector<16x8xf32>
    %79 = vector.extract_strided_slice %76 {offsets = [0, 0], sizes = [8, 8], strides = [1, 1]} : vector<16x8xf32> to vector<8x8xf32>
    %80 = vector.extract_strided_slice %77 {offsets = [0, 0], sizes = [8, 8], strides = [1, 1]} : vector<16x8xf32> to vector<8x8xf32>
    %cst_43 = arith.constant dense<0.000000e+00> : vector<8x8xf32>
    %81 = tpu.matmul %79, %80, %cst_43 {dimension_numbers = #tpu.dot_dimension_numbers<[1], [1], [0], [0], [0, 0, 1, 0], [], []>} : vector<8x8xf32>, vector<8x8xf32>, vector<8x8xf32> -> vector<8x8xf32>
    %cst_44 = arith.constant -1.000000e+06 : f32
    %82 = vector.broadcast %cst_44 : f32 to vector<8x8xf32>
    %83 = arith.select %11, %81, %82 : vector<8x8xi1>, vector<8x8xf32>
    %cst_45 = arith.constant dense<0xFF800000> : vector<8xf32>
    %84 = vector.multi_reduction <maximumf>, %83, %cst_45 [1] : vector<8x8xf32> to vector<8xf32>
    %85 = vector.shape_cast %84 : vector<8xf32> to vector<8x1xf32>
    %86 = vector.broadcast %85 : vector<8x1xf32> to vector<8x8xf32>
    %87 = arith.subf %83, %86 : vector<8x8xf32>
    %88 = math.exp %87 : vector<8x8xf32>
    %cst_46 = arith.constant dense<0.000000e+00> : vector<8xf32>
    %89 = vector.multi_reduction <add>, %88, %cst_46 [1] : vector<8x8xf32> to vector<8xf32>
    %90 = vector.shape_cast %89 : vector<8xf32> to vector<8x1xf32>
    %91 = tpu.reciprocal %90 {approx = true} : vector<8x1xf32> -> vector<8x1xf32>
    %92 = vector.broadcast %91 : vector<8x1xf32> to vector<8x8xf32>
    %93 = arith.mulf %88, %92 : vector<8x8xf32>
    %94 = vector.extract_strided_slice %78 {offsets = [0, 0], sizes = [8, 8], strides = [1, 1]} : vector<16x8xf32> to vector<8x8xf32>
    %cst_47 = arith.constant dense<0.000000e+00> : vector<8x8xf32>
    %95 = tpu.matmul %93, %94, %cst_47 {dimension_numbers = #tpu.dot_dimension_numbers<[1], [0], [0], [1], [0, 0, 1, 1], [], []>} : vector<8x8xf32>, vector<8x8xf32>, vector<8x8xf32> -> vector<8x8xf32>
    %96 = vector.extract_strided_slice %76 {offsets = [8, 0], sizes = [8, 8], strides = [1, 1]} : vector<16x8xf32> to vector<8x8xf32>
    %97 = vector.extract_strided_slice %77 {offsets = [8, 0], sizes = [8, 8], strides = [1, 1]} : vector<16x8xf32> to vector<8x8xf32>
    %cst_48 = arith.constant dense<0.000000e+00> : vector<8x8xf32>
    %98 = tpu.matmul %96, %97, %cst_48 {dimension_numbers = #tpu.dot_dimension_numbers<[1], [1], [0], [0], [0, 0, 1, 0], [], []>} : vector<8x8xf32>, vector<8x8xf32>, vector<8x8xf32> -> vector<8x8xf32>
    %cst_49 = arith.constant -1.000000e+06 : f32
    %99 = vector.broadcast %cst_49 : f32 to vector<8x8xf32>
    %100 = arith.select %14, %98, %99 : vector<8x8xi1>, vector<8x8xf32>
    %cst_50 = arith.constant dense<0xFF800000> : vector<8xf32>
    %101 = vector.multi_reduction <maximumf>, %100, %cst_50 [1] : vector<8x8xf32> to vector<8xf32>
    %102 = vector.shape_cast %101 : vector<8xf32> to vector<8x1xf32>
    %103 = vector.broadcast %102 : vector<8x1xf32> to vector<8x8xf32>
    %104 = arith.subf %100, %103 : vector<8x8xf32>
    %105 = math.exp %104 : vector<8x8xf32>
    %cst_51 = arith.constant dense<0.000000e+00> : vector<8xf32>
    %106 = vector.multi_reduction <add>, %105, %cst_51 [1] : vector<8x8xf32> to vector<8xf32>
    %107 = vector.shape_cast %106 : vector<8xf32> to vector<8x1xf32>
    %108 = tpu.reciprocal %107 {approx = true} : vector<8x1xf32> -> vector<8x1xf32>
    %109 = vector.broadcast %108 : vector<8x1xf32> to vector<8x8xf32>
    %110 = arith.mulf %105, %109 : vector<8x8xf32>
    %111 = vector.extract_strided_slice %78 {offsets = [8, 0], sizes = [8, 8], strides = [1, 1]} : vector<16x8xf32> to vector<8x8xf32>
    %cst_52 = arith.constant dense<0.000000e+00> : vector<8x8xf32>
    %112 = tpu.matmul %110, %111, %cst_52 {dimension_numbers = #tpu.dot_dimension_numbers<[1], [0], [0], [1], [0, 0, 1, 1], [], []>} : vector<8x8xf32>, vector<8x8xf32>, vector<8x8xf32> -> vector<8x8xf32>
    %113 = tpu.concatenate %95, %112 in 0 : vector<8x8xf32>, vector<8x8xf32> -> vector<16x8xf32>
    %cst_53 = arith.constant dense<0.000000e+00> : vector<16x32xf32>
    %114 = tpu.matmul %113, %73, %cst_53 {dimension_numbers = #tpu.dot_dimension_numbers<[1], [1], [0], [0], [0, 0, 1, 0], [], []>} : vector<16x8xf32>, vector<32x8xf32>, vector<16x32xf32> -> vector<16x32xf32>
    %115 = arith.addf %65, %114 : vector<16x32xf32>
    %c2 = arith.constant 2 : index
    %c0_54 = arith.constant 0 : index
    %c0_55 = arith.constant 0 : index
    %116 = vector.load %arg3[%c2, %c0_54, %c0_55] : memref<16x32x8xf32, #tpu.memory_space<vmem>>, vector<1x32x8xf32>
    %117 = vector.shape_cast %116 : vector<1x32x8xf32> to vector<32x8xf32>
    %c6 = arith.constant 6 : index
    %c0_56 = arith.constant 0 : index
    %c0_57 = arith.constant 0 : index
    %118 = vector.load %arg3[%c6, %c0_56, %c0_57] : memref<16x32x8xf32, #tpu.memory_space<vmem>>, vector<1x32x8xf32>
    %119 = vector.shape_cast %118 : vector<1x32x8xf32> to vector<32x8xf32>
    %c10 = arith.constant 10 : index
    %c0_58 = arith.constant 0 : index
    %c0_59 = arith.constant 0 : index
    %120 = vector.load %arg3[%c10, %c0_58, %c0_59] : memref<16x32x8xf32, #tpu.memory_space<vmem>>, vector<1x32x8xf32>
    %121 = vector.shape_cast %120 : vector<1x32x8xf32> to vector<32x8xf32>
    %c14 = arith.constant 14 : index
    %c0_60 = arith.constant 0 : index
    %c0_61 = arith.constant 0 : index
    %122 = vector.load %arg3[%c14, %c0_60, %c0_61] : memref<16x32x8xf32, #tpu.memory_space<vmem>>, vector<1x32x8xf32>
    %123 = vector.shape_cast %122 : vector<1x32x8xf32> to vector<32x8xf32>
    %cst_62 = arith.constant dense<0.000000e+00> : vector<16x8xf32>
    %124 = tpu.matmul %0, %117, %cst_62 {dimension_numbers = #tpu.dot_dimension_numbers<[1], [0], [0], [1], [0, 0, 1, 1], [], []>} : vector<16x32xf32>, vector<32x8xf32>, vector<16x8xf32> -> vector<16x8xf32>
    %cst_63 = arith.constant 0.353553385 : f32
    %125 = vector.broadcast %cst_63 : f32 to vector<16x8xf32>
    %126 = arith.mulf %124, %125 : vector<16x8xf32>
    %cst_64 = arith.constant dense<0.000000e+00> : vector<16x8xf32>
    %127 = tpu.matmul %0, %119, %cst_64 {dimension_numbers = #tpu.dot_dimension_numbers<[1], [0], [0], [1], [0, 0, 1, 1], [], []>} : vector<16x32xf32>, vector<32x8xf32>, vector<16x8xf32> -> vector<16x8xf32>
    %cst_65 = arith.constant dense<0.000000e+00> : vector<16x8xf32>
    %128 = tpu.matmul %0, %121, %cst_65 {dimension_numbers = #tpu.dot_dimension_numbers<[1], [0], [0], [1], [0, 0, 1, 1], [], []>} : vector<16x32xf32>, vector<32x8xf32>, vector<16x8xf32> -> vector<16x8xf32>
    %129 = vector.extract_strided_slice %126 {offsets = [0, 0], sizes = [8, 8], strides = [1, 1]} : vector<16x8xf32> to vector<8x8xf32>
    %130 = vector.extract_strided_slice %127 {offsets = [0, 0], sizes = [8, 8], strides = [1, 1]} : vector<16x8xf32> to vector<8x8xf32>
    %cst_66 = arith.constant dense<0.000000e+00> : vector<8x8xf32>
    %131 = tpu.matmul %129, %130, %cst_66 {dimension_numbers = #tpu.dot_dimension_numbers<[1], [1], [0], [0], [0, 0, 1, 0], [], []>} : vector<8x8xf32>, vector<8x8xf32>, vector<8x8xf32> -> vector<8x8xf32>
    %cst_67 = arith.constant -1.000000e+06 : f32
    %132 = vector.broadcast %cst_67 : f32 to vector<8x8xf32>
    %133 = arith.select %11, %131, %132 : vector<8x8xi1>, vector<8x8xf32>
    %cst_68 = arith.constant dense<0xFF800000> : vector<8xf32>
    %134 = vector.multi_reduction <maximumf>, %133, %cst_68 [1] : vector<8x8xf32> to vector<8xf32>
    %135 = vector.shape_cast %134 : vector<8xf32> to vector<8x1xf32>
    %136 = vector.broadcast %135 : vector<8x1xf32> to vector<8x8xf32>
    %137 = arith.subf %133, %136 : vector<8x8xf32>
    %138 = math.exp %137 : vector<8x8xf32>
    %cst_69 = arith.constant dense<0.000000e+00> : vector<8xf32>
    %139 = vector.multi_reduction <add>, %138, %cst_69 [1] : vector<8x8xf32> to vector<8xf32>
    %140 = vector.shape_cast %139 : vector<8xf32> to vector<8x1xf32>
    %141 = tpu.reciprocal %140 {approx = true} : vector<8x1xf32> -> vector<8x1xf32>
    %142 = vector.broadcast %141 : vector<8x1xf32> to vector<8x8xf32>
    %143 = arith.mulf %138, %142 : vector<8x8xf32>
    %144 = vector.extract_strided_slice %128 {offsets = [0, 0], sizes = [8, 8], strides = [1, 1]} : vector<16x8xf32> to vector<8x8xf32>
    %cst_70 = arith.constant dense<0.000000e+00> : vector<8x8xf32>
    %145 = tpu.matmul %143, %144, %cst_70 {dimension_numbers = #tpu.dot_dimension_numbers<[1], [0], [0], [1], [0, 0, 1, 1], [], []>} : vector<8x8xf32>, vector<8x8xf32>, vector<8x8xf32> -> vector<8x8xf32>
    %146 = vector.extract_strided_slice %126 {offsets = [8, 0], sizes = [8, 8], strides = [1, 1]} : vector<16x8xf32> to vector<8x8xf32>
    %147 = vector.extract_strided_slice %127 {offsets = [8, 0], sizes = [8, 8], strides = [1, 1]} : vector<16x8xf32> to vector<8x8xf32>
    %cst_71 = arith.constant dense<0.000000e+00> : vector<8x8xf32>
    %148 = tpu.matmul %146, %147, %cst_71 {dimension_numbers = #tpu.dot_dimension_numbers<[1], [1], [0], [0], [0, 0, 1, 0], [], []>} : vector<8x8xf32>, vector<8x8xf32>, vector<8x8xf32> -> vector<8x8xf32>
    %cst_72 = arith.constant -1.000000e+06 : f32
    %149 = vector.broadcast %cst_72 : f32 to vector<8x8xf32>
    %150 = arith.select %14, %148, %149 : vector<8x8xi1>, vector<8x8xf32>
    %cst_73 = arith.constant dense<0xFF800000> : vector<8xf32>
    %151 = vector.multi_reduction <maximumf>, %150, %cst_73 [1] : vector<8x8xf32> to vector<8xf32>
    %152 = vector.shape_cast %151 : vector<8xf32> to vector<8x1xf32>
    %153 = vector.broadcast %152 : vector<8x1xf32> to vector<8x8xf32>
    %154 = arith.subf %150, %153 : vector<8x8xf32>
    %155 = math.exp %154 : vector<8x8xf32>
    %cst_74 = arith.constant dense<0.000000e+00> : vector<8xf32>
    %156 = vector.multi_reduction <add>, %155, %cst_74 [1] : vector<8x8xf32> to vector<8xf32>
    %157 = vector.shape_cast %156 : vector<8xf32> to vector<8x1xf32>
    %158 = tpu.reciprocal %157 {approx = true} : vector<8x1xf32> -> vector<8x1xf32>
    %159 = vector.broadcast %158 : vector<8x1xf32> to vector<8x8xf32>
    %160 = arith.mulf %155, %159 : vector<8x8xf32>
    %161 = vector.extract_strided_slice %128 {offsets = [8, 0], sizes = [8, 8], strides = [1, 1]} : vector<16x8xf32> to vector<8x8xf32>
    %cst_75 = arith.constant dense<0.000000e+00> : vector<8x8xf32>
    %162 = tpu.matmul %160, %161, %cst_75 {dimension_numbers = #tpu.dot_dimension_numbers<[1], [0], [0], [1], [0, 0, 1, 1], [], []>} : vector<8x8xf32>, vector<8x8xf32>, vector<8x8xf32> -> vector<8x8xf32>
    %163 = tpu.concatenate %145, %162 in 0 : vector<8x8xf32>, vector<8x8xf32> -> vector<16x8xf32>
    %cst_76 = arith.constant dense<0.000000e+00> : vector<16x32xf32>
    %164 = tpu.matmul %163, %123, %cst_76 {dimension_numbers = #tpu.dot_dimension_numbers<[1], [1], [0], [0], [0, 0, 1, 0], [], []>} : vector<16x8xf32>, vector<32x8xf32>, vector<16x32xf32> -> vector<16x32xf32>
    %165 = arith.addf %115, %164 : vector<16x32xf32>
    %c3 = arith.constant 3 : index
    %c0_77 = arith.constant 0 : index
    %c0_78 = arith.constant 0 : index
    %166 = vector.load %arg3[%c3, %c0_77, %c0_78] : memref<16x32x8xf32, #tpu.memory_space<vmem>>, vector<1x32x8xf32>
    %167 = vector.shape_cast %166 : vector<1x32x8xf32> to vector<32x8xf32>
    %c7 = arith.constant 7 : index
    %c0_79 = arith.constant 0 : index
    %c0_80 = arith.constant 0 : index
    %168 = vector.load %arg3[%c7, %c0_79, %c0_80] : memref<16x32x8xf32, #tpu.memory_space<vmem>>, vector<1x32x8xf32>
    %169 = vector.shape_cast %168 : vector<1x32x8xf32> to vector<32x8xf32>
    %c11 = arith.constant 11 : index
    %c0_81 = arith.constant 0 : index
    %c0_82 = arith.constant 0 : index
    %170 = vector.load %arg3[%c11, %c0_81, %c0_82] : memref<16x32x8xf32, #tpu.memory_space<vmem>>, vector<1x32x8xf32>
    %171 = vector.shape_cast %170 : vector<1x32x8xf32> to vector<32x8xf32>
    %c15 = arith.constant 15 : index
    %c0_83 = arith.constant 0 : index
    %c0_84 = arith.constant 0 : index
    %172 = vector.load %arg3[%c15, %c0_83, %c0_84] : memref<16x32x8xf32, #tpu.memory_space<vmem>>, vector<1x32x8xf32>
    %173 = vector.shape_cast %172 : vector<1x32x8xf32> to vector<32x8xf32>
    %cst_85 = arith.constant dense<0.000000e+00> : vector<16x8xf32>
    %174 = tpu.matmul %0, %167, %cst_85 {dimension_numbers = #tpu.dot_dimension_numbers<[1], [0], [0], [1], [0, 0, 1, 1], [], []>} : vector<16x32xf32>, vector<32x8xf32>, vector<16x8xf32> -> vector<16x8xf32>
    %cst_86 = arith.constant 0.353553385 : f32
    %175 = vector.broadcast %cst_86 : f32 to vector<16x8xf32>
    %176 = arith.mulf %174, %175 : vector<16x8xf32>
    %cst_87 = arith.constant dense<0.000000e+00> : vector<16x8xf32>
    %177 = tpu.matmul %0, %169, %cst_87 {dimension_numbers = #tpu.dot_dimension_numbers<[1], [0], [0], [1], [0, 0, 1, 1], [], []>} : vector<16x32xf32>, vector<32x8xf32>, vector<16x8xf32> -> vector<16x8xf32>
    %cst_88 = arith.constant dense<0.000000e+00> : vector<16x8xf32>
    %178 = tpu.matmul %0, %171, %cst_88 {dimension_numbers = #tpu.dot_dimension_numbers<[1], [0], [0], [1], [0, 0, 1, 1], [], []>} : vector<16x32xf32>, vector<32x8xf32>, vector<16x8xf32> -> vector<16x8xf32>
    %179 = vector.extract_strided_slice %176 {offsets = [0, 0], sizes = [8, 8], strides = [1, 1]} : vector<16x8xf32> to vector<8x8xf32>
    %180 = vector.extract_strided_slice %177 {offsets = [0, 0], sizes = [8, 8], strides = [1, 1]} : vector<16x8xf32> to vector<8x8xf32>
    %cst_89 = arith.constant dense<0.000000e+00> : vector<8x8xf32>
    %181 = tpu.matmul %179, %180, %cst_89 {dimension_numbers = #tpu.dot_dimension_numbers<[1], [1], [0], [0], [0, 0, 1, 0], [], []>} : vector<8x8xf32>, vector<8x8xf32>, vector<8x8xf32> -> vector<8x8xf32>
    %cst_90 = arith.constant -1.000000e+06 : f32
    %182 = vector.broadcast %cst_90 : f32 to vector<8x8xf32>
    %183 = arith.select %11, %181, %182 : vector<8x8xi1>, vector<8x8xf32>
    %cst_91 = arith.constant dense<0xFF800000> : vector<8xf32>
    %184 = vector.multi_reduction <maximumf>, %183, %cst_91 [1] : vector<8x8xf32> to vector<8xf32>
    %185 = vector.shape_cast %184 : vector<8xf32> to vector<8x1xf32>
    %186 = vector.broadcast %185 : vector<8x1xf32> to vector<8x8xf32>
    %187 = arith.subf %183, %186 : vector<8x8xf32>
    %188 = math.exp %187 : vector<8x8xf32>
    %cst_92 = arith.constant dense<0.000000e+00> : vector<8xf32>
    %189 = vector.multi_reduction <add>, %188, %cst_92 [1] : vector<8x8xf32> to vector<8xf32>
    %190 = vector.shape_cast %189 : vector<8xf32> to vector<8x1xf32>
    %191 = tpu.reciprocal %190 {approx = true} : vector<8x1xf32> -> vector<8x1xf32>
    %192 = vector.broadcast %191 : vector<8x1xf32> to vector<8x8xf32>
    %193 = arith.mulf %188, %192 : vector<8x8xf32>
    %194 = vector.extract_strided_slice %178 {offsets = [0, 0], sizes = [8, 8], strides = [1, 1]} : vector<16x8xf32> to vector<8x8xf32>
    %cst_93 = arith.constant dense<0.000000e+00> : vector<8x8xf32>
    %195 = tpu.matmul %193, %194, %cst_93 {dimension_numbers = #tpu.dot_dimension_numbers<[1], [0], [0], [1], [0, 0, 1, 1], [], []>} : vector<8x8xf32>, vector<8x8xf32>, vector<8x8xf32> -> vector<8x8xf32>
    %196 = vector.extract_strided_slice %176 {offsets = [8, 0], sizes = [8, 8], strides = [1, 1]} : vector<16x8xf32> to vector<8x8xf32>
    %197 = vector.extract_strided_slice %177 {offsets = [8, 0], sizes = [8, 8], strides = [1, 1]} : vector<16x8xf32> to vector<8x8xf32>
    %cst_94 = arith.constant dense<0.000000e+00> : vector<8x8xf32>
    %198 = tpu.matmul %196, %197, %cst_94 {dimension_numbers = #tpu.dot_dimension_numbers<[1], [1], [0], [0], [0, 0, 1, 0], [], []>} : vector<8x8xf32>, vector<8x8xf32>, vector<8x8xf32> -> vector<8x8xf32>
    %cst_95 = arith.constant -1.000000e+06 : f32
    %199 = vector.broadcast %cst_95 : f32 to vector<8x8xf32>
    %200 = arith.select %14, %198, %199 : vector<8x8xi1>, vector<8x8xf32>
    %cst_96 = arith.constant dense<0xFF800000> : vector<8xf32>
    %201 = vector.multi_reduction <maximumf>, %200, %cst_96 [1] : vector<8x8xf32> to vector<8xf32>
    %202 = vector.shape_cast %201 : vector<8xf32> to vector<8x1xf32>
    %203 = vector.broadcast %202 : vector<8x1xf32> to vector<8x8xf32>
    %204 = arith.subf %200, %203 : vector<8x8xf32>
    %205 = math.exp %204 : vector<8x8xf32>
    %cst_97 = arith.constant dense<0.000000e+00> : vector<8xf32>
    %206 = vector.multi_reduction <add>, %205, %cst_97 [1] : vector<8x8xf32> to vector<8xf32>
    %207 = vector.shape_cast %206 : vector<8xf32> to vector<8x1xf32>
    %208 = tpu.reciprocal %207 {approx = true} : vector<8x1xf32> -> vector<8x1xf32>
    %209 = vector.broadcast %208 : vector<8x1xf32> to vector<8x8xf32>
    %210 = arith.mulf %205, %209 : vector<8x8xf32>
    %211 = vector.extract_strided_slice %178 {offsets = [8, 0], sizes = [8, 8], strides = [1, 1]} : vector<16x8xf32> to vector<8x8xf32>
    %cst_98 = arith.constant dense<0.000000e+00> : vector<8x8xf32>
    %212 = tpu.matmul %210, %211, %cst_98 {dimension_numbers = #tpu.dot_dimension_numbers<[1], [0], [0], [1], [0, 0, 1, 1], [], []>} : vector<8x8xf32>, vector<8x8xf32>, vector<8x8xf32> -> vector<8x8xf32>
    %213 = tpu.concatenate %195, %212 in 0 : vector<8x8xf32>, vector<8x8xf32> -> vector<16x8xf32>
    %cst_99 = arith.constant dense<0.000000e+00> : vector<16x32xf32>
    %214 = tpu.matmul %213, %173, %cst_99 {dimension_numbers = #tpu.dot_dimension_numbers<[1], [1], [0], [0], [0, 0, 1, 0], [], []>} : vector<16x8xf32>, vector<32x8xf32>, vector<16x32xf32> -> vector<16x32xf32>
    %215 = arith.addf %165, %214 : vector<16x32xf32>
    %216 = arith.addf %0, %215 : vector<16x32xf32>
    %cst_100 = arith.constant dense<0.000000e+00> : vector<16xf32>
    %217 = vector.multi_reduction <add>, %216, %cst_100 [1] : vector<16x32xf32> to vector<16xf32>
    %218 = vector.shape_cast %217 : vector<16xf32> to vector<16x1xf32>
    %cst_101 = arith.constant 3.200000e+01 : f32
    %219 = vector.broadcast %cst_101 : f32 to vector<16x1xf32>
    %220 = arith.divf %218, %219 : vector<16x1xf32>
    %221 = vector.broadcast %220 : vector<16x1xf32> to vector<16x32xf32>
    %222 = arith.subf %216, %221 : vector<16x32xf32>
    %223 = arith.mulf %222, %222 : vector<16x32xf32>
    %cst_102 = arith.constant dense<0.000000e+00> : vector<16xf32>
    %224 = vector.multi_reduction <add>, %223, %cst_102 [1] : vector<16x32xf32> to vector<16xf32>
    %225 = vector.shape_cast %224 : vector<16xf32> to vector<16x1xf32>
    %cst_103 = arith.constant 3.200000e+01 : f32
    %226 = vector.broadcast %cst_103 : f32 to vector<16x1xf32>
    %227 = arith.divf %225, %226 : vector<16x1xf32>
    %228 = vector.broadcast %220 : vector<16x1xf32> to vector<16x32xf32>
    %229 = arith.subf %216, %228 : vector<16x32xf32>
    %cst_104 = arith.constant 9.99999974E-6 : f32
    %230 = vector.broadcast %cst_104 : f32 to vector<16x1xf32>
    %231 = arith.addf %227, %230 : vector<16x1xf32>
    %232 = math.rsqrt %231 : vector<16x1xf32>
    %233 = vector.broadcast %232 : vector<16x1xf32> to vector<16x32xf32>
    %234 = arith.mulf %229, %233 : vector<16x32xf32>
    %235 = vector.broadcast %2 : vector<1x32xf32> to vector<16x32xf32>
    %236 = arith.mulf %234, %235 : vector<16x32xf32>
    %237 = vector.broadcast %3 : vector<1x32xf32> to vector<16x32xf32>
    %238 = arith.addf %236, %237 : vector<16x32xf32>
    %c0_105 = arith.constant 0 : index
    %c0_106 = arith.constant 0 : index
    %c0_107 = arith.constant 0 : index
    %239 = vector.load %arg4[%c0_105, %c0_106, %c0_107] : memref<2x32x64xf32, #tpu.memory_space<vmem>>, vector<1x32x64xf32>
    %240 = vector.shape_cast %239 : vector<1x32x64xf32> to vector<32x64xf32>
    %cst_108 = arith.constant dense<0.000000e+00> : vector<16x64xf32>
    %241 = tpu.matmul %238, %240, %cst_108 {dimension_numbers = #tpu.dot_dimension_numbers<[1], [0], [0], [1], [0, 0, 1, 1], [], []>} : vector<16x32xf32>, vector<32x64xf32>, vector<16x64xf32> -> vector<16x64xf32>
    %242 = vector.broadcast %7 : vector<1x64xf32> to vector<16x64xf32>
    %243 = arith.addf %241, %242 : vector<16x64xf32>
    %cst_109 = arith.constant 0.000000e+00 : f32
    %244 = vector.broadcast %cst_109 : f32 to vector<16x64xf32>
    %245 = arith.maximumf %243, %244 : vector<16x64xf32>
    %c1_110 = arith.constant 1 : index
    %c0_111 = arith.constant 0 : index
    %c0_112 = arith.constant 0 : index
    %246 = vector.load %arg4[%c1_110, %c0_111, %c0_112] : memref<2x32x64xf32, #tpu.memory_space<vmem>>, vector<1x32x64xf32>
    %247 = vector.shape_cast %246 : vector<1x32x64xf32> to vector<32x64xf32>
    %cst_113 = arith.constant dense<0.000000e+00> : vector<16x32xf32>
    %248 = tpu.matmul %245, %247, %cst_113 {dimension_numbers = #tpu.dot_dimension_numbers<[1], [1], [0], [0], [0, 0, 1, 0], [], []>} : vector<16x64xf32>, vector<32x64xf32>, vector<16x32xf32> -> vector<16x32xf32>
    %249 = vector.broadcast %4 : vector<1x32xf32> to vector<16x32xf32>
    %250 = arith.addf %248, %249 : vector<16x32xf32>
    %251 = arith.addf %238, %250 : vector<16x32xf32>
    %cst_114 = arith.constant dense<0.000000e+00> : vector<16xf32>
    %252 = vector.multi_reduction <add>, %251, %cst_114 [1] : vector<16x32xf32> to vector<16xf32>
    %253 = vector.shape_cast %252 : vector<16xf32> to vector<16x1xf32>
    %cst_115 = arith.constant 3.200000e+01 : f32
    %254 = vector.broadcast %cst_115 : f32 to vector<16x1xf32>
    %255 = arith.divf %253, %254 : vector<16x1xf32>
    %256 = vector.broadcast %255 : vector<16x1xf32> to vector<16x32xf32>
    %257 = arith.subf %251, %256 : vector<16x32xf32>
    %258 = arith.mulf %257, %257 : vector<16x32xf32>
    %cst_116 = arith.constant dense<0.000000e+00> : vector<16xf32>
    %259 = vector.multi_reduction <add>, %258, %cst_116 [1] : vector<16x32xf32> to vector<16xf32>
    %260 = vector.shape_cast %259 : vector<16xf32> to vector<16x1xf32>
    %cst_117 = arith.constant 3.200000e+01 : f32
    %261 = vector.broadcast %cst_117 : f32 to vector<16x1xf32>
    %262 = arith.divf %260, %261 : vector<16x1xf32>
    %263 = vector.broadcast %255 : vector<16x1xf32> to vector<16x32xf32>
    %264 = arith.subf %251, %263 : vector<16x32xf32>
    %cst_118 = arith.constant 9.99999974E-6 : f32
    %265 = vector.broadcast %cst_118 : f32 to vector<16x1xf32>
    %266 = arith.addf %262, %265 : vector<16x1xf32>
    %267 = math.rsqrt %266 : vector<16x1xf32>
    %268 = vector.broadcast %267 : vector<16x1xf32> to vector<16x32xf32>
    %269 = arith.mulf %264, %268 : vector<16x32xf32>
    %270 = vector.broadcast %5 : vector<1x32xf32> to vector<16x32xf32>
    %271 = arith.mulf %269, %270 : vector<16x32xf32>
    %272 = vector.broadcast %6 : vector<1x32xf32> to vector<16x32xf32>
    %273 = arith.addf %271, %272 : vector<16x32xf32>
    %c0_119 = arith.constant 0 : index
    %c0_120 = arith.constant 0 : index
    %274 = vector.load %arg7[%c0_119, %c0_120] : memref<16x32xf32, #tpu.memory_space<vmem>>, vector<16x32xf32>
    tpu.vector_store %arg7[%c0_119, %c0_120], %273 {strides = array<i32>} : memref<16x32xf32, #tpu.memory_space<vmem>>, vector<16x32xf32>,
    return
  }
  func.func @transform_0(%arg0: i32, %arg1: memref<2xi32, #tpu.memory_space<smem>>) -> (i32, i32) {
    %c0_i32 = arith.constant 0 : i32
    %c0_i32_0 = arith.constant 0 : i32
    %c0_i32_1 = arith.constant 0 : i32
    return %c0_i32, %c0_i32_0 : i32, i32
  }
  func.func @transform_1(%arg0: i32, %arg1: memref<2xi32, #tpu.memory_space<smem>>) -> (i32, i32, i32) {
    %c0_i32 = arith.constant 0 : i32
    %c0_i32_0 = arith.constant 0 : i32
    %c0_i32_1 = arith.constant 0 : i32
    %c0_i32_2 = arith.constant 0 : i32
    return %c0_i32, %c0_i32_0, %c0_i32_1 : i32, i32, i32
  }
  func.func @transform_2(%arg0: i32, %arg1: memref<2xi32, #tpu.memory_space<smem>>) -> (i32, i32, i32) {
    %c0_i32 = arith.constant 0 : i32
    %c0_i32_0 = arith.constant 0 : i32
    %c0_i32_1 = arith.constant 0 : i32
    %c0_i32_2 = arith.constant 0 : i32
    return %c0_i32, %c0_i32_0, %c0_i32_1 : i32, i32, i32
  }
  func.func @transform_3(%arg0: i32, %arg1: memref<2xi32, #tpu.memory_space<smem>>) -> (i32, i32) {
    %c0_i32 = arith.constant 0 : i32
    %c0_i32_0 = arith.constant 0 : i32
    %c0_i32_1 = arith.constant 0 : i32
    return %c0_i32, %c0_i32_0 : i32, i32
  }
  func.func @transform_4(%arg0: i32, %arg1: memref<2xi32, #tpu.memory_space<smem>>) -> (i32, i32) {
    %c0_i32 = arith.constant 0 : i32
    %c0_i32_0 = arith.constant 0 : i32
    %c0_i32_1 = arith.constant 0 : i32
    return %c0_i32, %c0_i32_0 : i32, i32
  }
  func.func @transform_5(%arg0: i32, %arg1: memref<2xi32, #tpu.memory_space<smem>>) -> (i32, i32) {
    %c0_i32 = arith.constant 0 : i32
    %c0_i32_0 = arith.constant 0 : i32
    %c0_i32_1 = arith.constant 0 : i32
    return %c0_i32, %c0_i32_0 : i32, i32
  }
}

</mosaic_0001>

<llo_original>
// kernel: tpu_custom_call.1
$region0: #{tpu_custom_call.1}
  #allocation0 [shape = 'u32[]', space=smem, size = 0x4, offset = 0x4, fixed_abs, tag = 'smem constant byte address 0x4 - core index']
  #allocation1 [shape = 'u32[144,128]{1,0:T(1,128)}', space=vmem, size = 0x12000, scoped, tag = 'internal scratch']
  #allocation2 [shape = 's32[1]{0}', space=sflag, size = 0x4, scoped, tag = 'scoped memory for tpu_custom_call.1']
  #allocation3 [shape = 'u8[512]{0}', space=smem, size = 0x200, scoped, tag = 'prefetched SMEM operand 0']
  %s0 = inlined_call_operand.vmem [shape: s32[2], index: 0, kind: input, shape index: {}]
  %s1 = inlined_call_operand.vmem [shape: f32[16,32], index: 1, kind: input, shape index: {}]
  %s2 = inlined_call_operand.vmem [shape: f32[16,32,8], index: 2, kind: input, shape index: {}]
  %s3 = inlined_call_operand.vmem [shape: f32[2,32,64], index: 3, kind: input, shape index: {}]
  %s4 = inlined_call_operand.vmem [shape: f32[8,32], index: 4, kind: input, shape index: {}]
  %s5 = inlined_call_operand.vmem [shape: f32[1,64], index: 5, kind: input, shape index: {}]
  %s6 = inlined_call_operand.hbm [shape: f32[16,32], index: 6, kind: output, shape index: {}]
  %s7 = sld [smem:[#allocation0]]
  $region30: #{tpu_custom_call.1} parent=0
    _
  %s9 = ssub.s32 1, %s7
  %s10 = scalar_select 0, %s9, %s7
  %s11 = sshll.u32 %s0, 4
  %s12 = int_to_ptr.vmem [resolvable:$true] %s11
  %14 = dma.vmem_to_smem %s12, 16, [#allocation3], [#allocation2]
  %15 = dma.done [#allocation2], 16
  %16 = sfence
  $region1: #{tpu_custom_call.1} parent=0
    #allocation4 [shape = 'u8[8192]{0}', space=vmem, size = 0x2000, scoped, tag = 'output window, operand 0, single buffered']
    #allocation5 [shape = 's32[1]{0}', space=sflag, size = 0x4, scoped, tag = 'scoped memory for tpu_custom_call.1']
    %17 = vsyncpa [#allocation5], 0
    // Predicated region
    $region2: #{tpu_custom_call.1} parent=1 // pred_check
      _
    $region3: #{tpu_custom_call.1} parent=1 // pred_check_branch
      %19 = sbr.rel (0) target = $region5
    $region4: #{tpu_custom_call.1} parent=1 // pred_region
      _
    $region5: #{tpu_custom_call.1} parent=1 // pred_fallthru
      _
    // Predicated region
    $region6: #{tpu_custom_call.1} parent=1 // pred_check
      _
    $region7: #{tpu_custom_call.1} parent=1 // pred_check_branch
      %21 = sbr.rel (0) target = $region9
    $region8: #{tpu_custom_call.1} parent=1 // pred_region
      _
    $region9: #{tpu_custom_call.1} parent=1 // pred_fallthru
      _
    // Predicated region
    $region10: #{tpu_custom_call.1} parent=1 // pred_check
      _
    $region11: #{tpu_custom_call.1} parent=1 // pred_check_branch
      %23 = sbr.rel (0) target = $region13
    $region12: #{tpu_custom_call.1} parent=1 // pred_region
      _
    $region13: #{tpu_custom_call.1} parent=1 // pred_fallthru
      _
    // Predicated region
    $region14: #{tpu_custom_call.1} parent=1 // pred_check
      _
    $region15: #{tpu_custom_call.1} parent=1 // pred_check_branch
      %25 = sbr.rel (0) target = $region17
    $region16: #{tpu_custom_call.1} parent=1 // pred_region
      _
    $region17: #{tpu_custom_call.1} parent=1 // pred_fallthru
      _
    // Predicated region
    $region18: #{tpu_custom_call.1} parent=1 // pred_check
      _
    $region19: #{tpu_custom_call.1} parent=1 // pred_check_branch
      %27 = sbr.rel (0) target = $region21
    $region20: #{tpu_custom_call.1} parent=1 // pred_region
      _
    $region21: #{tpu_custom_call.1} parent=1 // pred_fallthru
      _
    %v28 = vld [vmem:[%s1] sm:$0xff]
    %v29 = vld [vmem:[%s1 + $0x8] sm:$0xff]
    %v30 = vld [vmem:[%s4] sm:$0xff]
    %v31 = vld [vmem:[%s5] sm:$0x1]
    %v32 = vlaneseq
    %v33 = vand.u32 %v32, 127
    %s34 = sld [smem:[#allocation3]]
    %v35 = vstv %s34
    %vm36 = vcmp.lt.s32.totalorder %v33, %v35
    %s37 = sld [smem:[#allocation3 + $0x1]]
    %v38 = vstv %s37
    %vm39 = vcmp.lt.s32.totalorder %v33, %v38
    %v40 = vld [vmem:[%s2] sm:$0xff]
    %v41 = vld [vmem:[%s2 + $0x8] sm:$0xff]
    %v42 = vld [vmem:[%s2 + $0x10] sm:$0xff]
    %v43 = vld [vmem:[%s2 + $0x18] sm:$0xff]
    %s44 = scalar_lea.vmem %s2, 128
    %v45 = vld [vmem:[%s44] sm:$0xff]
    %v46 = vld [vmem:[%s44 + $0x8] sm:$0xff]
    %v47 = vld [vmem:[%s44 + $0x10] sm:$0xff]
    %v48 = vld [vmem:[%s44 + $0x18] sm:$0xff]
    %s49 = scalar_lea.vmem %s2, 256
    %v50 = vld [vmem:[%s49] sm:$0xff]
    %v51 = vld [vmem:[%s49 + $0x8] sm:$0xff]
    %v52 = vld [vmem:[%s49 + $0x10] sm:$0xff]
    %v53 = vld [vmem:[%s49 + $0x18] sm:$0xff]
    %s54 = scalar_lea.vmem %s2, 384
    %v55 = vld [vmem:[%s54] sm:$0xff]
    %v56 = vld [vmem:[%s54 + $0x8] sm:$0xff]
    %v57 = vld [vmem:[%s54 + $0x10] sm:$0xff]
    %v58 = vld [vmem:[%s54 + $0x18] sm:$0xff]
    %vm59 = vcmask 261120
    %v61 = vsel %vm59, %v28, 0
    %v64 = vsel %vm59, %v29, 0
    %66 = vmatprep.subr.mxu0 0.0
    %67 = vmatpush1.msra.mxu0 %v40
    %68 = vmatprep.subr.mxu0 0.0
    %69 = vmatpush1.msra.mxu0 %v41
    %70 = vmatprep.subr.mxu0 0.0
    %71 = vmatpush1.msra.mxu0 %v42
    %72 = vmatprep.subr.mxu0 0.0
    %73 = vmatpush1.msra.mxu0 %v43
    %74 = vmatprep.subr.mxu0 0.0
    %75 = vmatpush1.msra.mxu0 0.0
    %76 = vmatprep.subr.mxu0 0.0
    %77 = vmatpush1.msra.mxu0 0.0
    %78 = vmatprep.subr.mxu0 0.0
    %79 = vmatpush1.msra.mxu0 0.0
    %80 = vmatprep.subr.mxu0 0.0
    %81 = vmatpush1.msra.mxu0 0.0
    %82 = vmatprep.subr.mxu0 0.0
    %83 = vmatpush1.msra.mxu0 0.0
    %84 = vmatprep.subr.mxu0 0.0
    %85 = vmatpush1.msra.mxu0 0.0
    %86 = vmatprep.subr.mxu0 0.0
    %87 = vmatpush1.msra.mxu0 0.0
    %88 = vmatprep.subr.mxu0 0.0
    %89 = vmatpush1.msra.mxu0 0.0
    %90 = vmatprep.subr.mxu0 0.0
    %91 = vmatpush1.msra.mxu0 0.0
    %92 = vmatprep.subr.mxu0 0.0
    %93 = vmatpush1.msra.mxu0 0.0
    %94 = vmatprep.subr.mxu0 0.0
    %95 = vmatpush1.msra.mxu0 0.0
    %96 = vmatprep.subr.mxu0 0.0
    %97 = vmatpush1.msra.mxu0 0.0
    %98 = vmatprep.subr.mxu0 0.0
    %99 = vmatpush1.msra.mxu0 0.0
    %100 = vmatprep.subr.mxu0 0.0
    %101 = vmatpush1.msra.mxu0 0.0
    %102 = vmatprep.subr.mxu0 0.0
    %103 = vmatpush1.msra.mxu0 0.0
    %104 = vmatprep.subr.mxu0 0.0
    %105 = vmatpush1.msra.mxu0 0.0
    %106 = vmatprep.subr.mxu0 0.0
    %107 = vmatpush1.msra.mxu0 0.0
    %108 = vmatprep.subr.mxu0 0.0
    %109 = vmatpush1.msra.mxu0 0.0
    %110 = vmatprep.subr.mxu0 0.0
    %111 = vmatpush1.msra.mxu0 0.0
    %112 = vmatprep.subr.mxu0 0.0
    %113 = vmatpush1.msra.mxu0 0.0
    %114 = vmatprep.subr.mxu0 0.0
    %115 = vmatpush1.msra.mxu0 0.0
    %116 = vmatprep.subr.mxu0 0.0
    %117 = vmatpush1.msra.mxu0 0.0
    %118 = vmatprep.subr.mxu0 0.0
    %119 = vmatpush1.msra.mxu0 0.0
    %120 = vmatprep.subr.mxu0 0.0
    %121 = vmatpush1.msra.mxu0 0.0
    %122 = vmatprep.subr.mxu0 0.0
    %123 = vmatpush1.msra.mxu0 0.0
    %124 = vmatprep.subr.mxu0 0.0
    %125 = vmatpush1.msra.mxu0 0.0
    %126 = vmatprep.subr.mxu0 0.0
    %127 = vmatpush1.msra.mxu0 0.0
    %128 = vmatprep.subr.mxu0 0.0
    %129 = vmatpush1.msra.mxu0 0.0
    %130 = vmatprep.mubr.f32.mxu0 0.0
    %131 = vmatmul.mubr.f32.gmra.mrb[0].mxu0 %v61
    %v132 = vpop.f32.mrb[0].mxu0
    %v133 = vadd.f32 0.0, %v132
    %v134 = vpop.f32.mrb[0].mxu0
    %135 = vmatprep.mubr.f32.mxu0 0.0
    %136 = vmatmul.mubr.f32.gmra.mrb[0].mxu0 %v64
    %v137 = vpop.f32.mrb[0].mxu0
    %v138 = vadd.f32 0.0, %v137
    %v139 = vpop.f32.mrb[0].mxu0
    %140 = vdwg.mxu0
    %v141 = vmul.f32 %v133, 0.35355338
    %v142 = vmul.f32 %v138, 0.35355338
    %143 = vmatprep.subr.mxu0 0.0
    %144 = vmatpush1.msra.mxu0 %v45
    %145 = vmatprep.subr.mxu0 0.0
    %146 = vmatpush1.msra.mxu0 %v46
    %147 = vmatprep.subr.mxu0 0.0
    %148 = vmatpush1.msra.mxu0 %v47
    %149 = vmatprep.subr.mxu0 0.0
    %150 = vmatpush1.msra.mxu0 %v48
    %151 = vmatprep.subr.mxu0 0.0
    %152 = vmatpush1.msra.mxu0 0.0
    %153 = vmatprep.subr.mxu0 0.0
    %154 = vmatpush1.msra.mxu0 0.0
    %155 = vmatprep.subr.mxu0 0.0
    %156 = vmatpush1.msra.mxu0 0.0
    %157 = vmatprep.subr.mxu0 0.0
    %158 = vmatpush1.msra.mxu0 0.0
    %159 = vmatprep.subr.mxu0 0.0
    %160 = vmatpush1.msra.mxu0 0.0
    %161 = vmatprep.subr.mxu0 0.0
    %162 = vmatpush1.msra.mxu0 0.0
    %163 = vmatprep.subr.mxu0 0.0
    %164 = vmatpush1.msra.mxu0 0.0
    %165 = vmatprep.subr.mxu0 0.0
    %166 = vmatpush1.msra.mxu0 0.0
    %167 = vmatprep.subr.mxu0 0.0
    %168 = vmatpush1.msra.mxu0 0.0
    %169 = vmatprep.subr.mxu0 0.0
    %170 = vmatpush1.msra.mxu0 0.0
    %171 = vmatprep.subr.mxu0 0.0
    %172 = vmatpush1.msra.mxu0 0.0
    %173 = vmatprep.subr.mxu0 0.0
    %174 = vmatpush1.msra.mxu0 0.0
    %175 = vmatprep.subr.mxu0 0.0
    %176 = vmatpush1.msra.mxu0 0.0
    %177 = vmatprep.subr.mxu0 0.0
    %178 = vmatpush1.msra.mxu0 0.0
    %179 = vmatprep.subr.mxu0 0.0
    %180 = vmatpush1.msra.mxu0 0.0
    %181 = vmatprep.subr.mxu0 0.0
    %182 = vmatpush1.msra.mxu0 0.0
    %183 = vmatprep.subr.mxu0 0.0
    %184 = vmatpush1.msra.mxu0 0.0
    %185 = vmatprep.subr.mxu0 0.0
    %186 = vmatpush1.msra.mxu0 0.0
    %187 = vmatprep.subr.mxu0 0.0
    %188 = vmatpush1.msra.mxu0 0.0
    %189 = vmatprep.subr.mxu0 0.0
    %190 = vmatpush1.msra.mxu0 0.0
    %191 = vmatprep.subr.mxu0 0.0
    %192 = vmatpush1.msra.mxu0 0.0
    %193 = vmatprep.subr.mxu0 0.0
    %194 = vmatpush1.msra.mxu0 0.0
    %195 = vmatprep.subr.mxu0 0.0
    %196 = vmatpush1.msra.mxu0 0.0
    %197 = vmatprep.subr.mxu0 0.0
    %198 = vmatpush1.msra.mxu0 0.0
    %199 = vmatprep.subr.mxu0 0.0
    %200 = vmatpush1.msra.mxu0 0.0
    %201 = vmatprep.subr.mxu0 0.0
    %202 = vmatpush1.msra.mxu0 0.0
    %203 = vmatprep.subr.mxu0 0.0
    %204 = vmatpush1.msra.mxu0 0.0
    %205 = vmatprep.subr.mxu0 0.0
    %206 = vmatpush1.msra.mxu0 0.0
    %207 = vmatprep.mubr.f32.mxu0 0.0
    %208 = vmatmul.mubr.f32.gmra.mrb[0].mxu0 %v61
    %v209 = vpop.f32.mrb[0].mxu0
    %v210 = vadd.f32 0.0, %v209
    %v211 = vpop.f32.mrb[0].mxu0
    %212 = vmatprep.mubr.f32.mxu0 0.0
    %213 = vmatmul.mubr.f32.gmra.mrb[0].mxu0 %v64
    %v214 = vpop.f32.mrb[0].mxu0
    %v215 = vadd.f32 0.0, %v214
    %v216 = vpop.f32.mrb[0].mxu0
    %217 = vdwg.mxu0
    %218 = vmatprep.subr.mxu0 0.0
    %219 = vmatpush1.msra.mxu0 %v50
    %220 = vmatprep.subr.mxu0 0.0
    %221 = vmatpush1.msra.mxu0 %v51
    %222 = vmatprep.subr.mxu0 0.0
    %223 = vmatpush1.msra.mxu0 %v52
    %224 = vmatprep.subr.mxu0 0.0
    %225 = vmatpush1.msra.mxu0 %v53
    %226 = vmatprep.subr.mxu0 0.0
    %227 = vmatpush1.msra.mxu0 0.0
    %228 = vmatprep.subr.mxu0 0.0
    %229 = vmatpush1.msra.mxu0 0.0
    %230 = vmatprep.subr.mxu0 0.0
    %231 = vmatpush1.msra.mxu0 0.0
    %232 = vmatprep.subr.mxu0 0.0
    %233 = vmatpush1.msra.mxu0 0.0
    %234 = vmatprep.subr.mxu0 0.0
    %235 = vmatpush1.msra.mxu0 0.0
    %236 = vmatprep.subr.mxu0 0.0
    %237 = vmatpush1.msra.mxu0 0.0
    %238 = vmatprep.subr.mxu0 0.0
    %239 = vmatpush1.msra.mxu0 0.0
    %240 = vmatprep.subr.mxu0 0.0
    %241 = vmatpush1.msra.mxu0 0.0
    %242 = vmatprep.subr.mxu0 0.0
    %243 = vmatpush1.msra.mxu0 0.0
    %244 = vmatprep.subr.mxu0 0.0
    %245 = vmatpush1.msra.mxu0 0.0
    %246 = vmatprep.subr.mxu0 0.0
    %247 = vmatpush1.msra.mxu0 0.0
    %248 = vmatprep.subr.mxu0 0.0
    %249 = vmatpush1.msra.mxu0 0.0
    %250 = vmatprep.subr.mxu0 0.0
    %251 = vmatpush1.msra.mxu0 0.0
    %252 = vmatprep.subr.mxu0 0.0
    %253 = vmatpush1.msra.mxu0 0.0
    %254 = vmatprep.subr.mxu0 0.0
    %255 = vmatpush1.msra.mxu0 0.0
    %256 = vmatprep.subr.mxu0 0.0
    %257 = vmatpush1.msra.mxu0 0.0
    %258 = vmatprep.subr.mxu0 0.0
    %259 = vmatpush1.msra.mxu0 0.0
    %260 = vmatprep.subr.mxu0 0.0
    %261 = vmatpush1.msra.mxu0 0.0
    %262 = vmatprep.subr.mxu0 0.0
    %263 = vmatpush1.msra.mxu0 0.0
    %264 = vmatprep.subr.mxu0 0.0
    %265 = vmatpush1.msra.mxu0 0.0
    %266 = vmatprep.subr.mxu0 0.0
    %267 = vmatpush1.msra.mxu0 0.0
    %268 = vmatprep.subr.mxu0 0.0
    %269 = vmatpush1.msra.mxu0 0.0
    %270 = vmatprep.subr.mxu0 0.0
    %271 = vmatpush1.msra.mxu0 0.0
    %272 = vmatprep.subr.mxu0 0.0
    %273 = vmatpush1.msra.mxu0 0.0
    %274 = vmatprep.subr.mxu0 0.0
    %275 = vmatpush1.msra.mxu0 0.0
    %276 = vmatprep.subr.mxu0 0.0
    %277 = vmatpush1.msra.mxu0 0.0
    %278 = vmatprep.subr.mxu0 0.0
    %279 = vmatpush1.msra.mxu0 0.0
    %280 = vmatprep.subr.mxu0 0.0
    %281 = vmatpush1.msra.mxu0 0.0
    %282 = vmatprep.mubr.f32.mxu0 0.0
    %283 = vmatmul.mubr.f32.gmra.mrb[0].mxu0 %v61
    %v284 = vpop.f32.mrb[0].mxu0
    %v285 = vadd.f32 0.0, %v284
    %v286 = vpop.f32.mrb[0].mxu0
    %287 = vmatprep.mubr.f32.mxu0 0.0
    %288 = vmatmul.mubr.f32.gmra.mrb[0].mxu0 %v64
    %v289 = vpop.f32.mrb[0].mxu0
    %v290 = vadd.f32 0.0, %v289
    %v291 = vpop.f32.mrb[0].mxu0
    %292 = vdwg.mxu0
    %vm293 = vcmask 64512
    %v295 = vsel %vm293, %v141, 0
    %v298 = vsel %vm293, %v210, 0
    %300 = vmatprep.subr.mxu0 0.0
    %301 = vmatpush1.xpose.msra.mxu0 %v298
    %302 = vmatprep.subr.mxu0 0.0
    %303 = vmatpush1.xpose.msra.mxu0 0.0
    %304 = vmatprep.subr.mxu0 0.0
    %305 = vmatpush1.xpose.msra.mxu0 0.0
    %306 = vmatprep.subr.mxu0 0.0
    %307 = vmatpush1.xpose.msra.mxu0 0.0
    %308 = vmatprep.subr.mxu0 0.0
    %309 = vmatpush1.xpose.msra.mxu0 0.0
    %310 = vmatprep.subr.mxu0 0.0
    %311 = vmatpush1.xpose.msra.mxu0 0.0
    %312 = vmatprep.subr.mxu0 0.0
    %313 = vmatpush1.xpose.msra.mxu0 0.0
    %314 = vmatprep.subr.mxu0 0.0
    %315 = vmatpush1.xpose.msra.mxu0 0.0
    %316 = vmatprep.subr.mxu0 0.0
    %317 = vmatpush1.xpose.msra.mxu0 0.0
    %318 = vmatprep.subr.mxu0 0.0
    %319 = vmatpush1.xpose.msra.mxu0 0.0
    %320 = vmatprep.subr.mxu0 0.0
    %321 = vmatpush1.xpose.msra.mxu0 0.0
    %322 = vmatprep.subr.mxu0 0.0
    %323 = vmatpush1.xpose.msra.mxu0 0.0
    %324 = vmatprep.subr.mxu0 0.0
    %325 = vmatpush1.xpose.msra.mxu0 0.0
    %326 = vmatprep.subr.mxu0 0.0
    %327 = vmatpush1.xpose.msra.mxu0 0.0
    %328 = vmatprep.subr.mxu0 0.0
    %329 = vmatpush1.xpose.msra.mxu0 0.0
    %330 = vmatprep.subr.mxu0 0.0
    %331 = vmatpush1.xpose.msra.mxu0 0.0
    %332 = vmatprep.subr.mxu0 0.0
    %333 = vmatpush1.xpose.msra.mxu0 0.0
    %334 = vmatprep.subr.mxu0 0.0
    %335 = vmatpush1.xpose.msra.mxu0 0.0
    %336 = vmatprep.subr.mxu0 0.0
    %337 = vmatpush1.xpose.msra.mxu0 0.0
    %338 = vmatprep.subr.mxu0 0.0
    %339 = vmatpush1.xpose.msra.mxu0 0.0
    %340 = vmatprep.subr.mxu0 0.0
    %341 = vmatpush1.xpose.msra.mxu0 0.0
    %342 = vmatprep.subr.mxu0 0.0
    %343 = vmatpush1.xpose.msra.mxu0 0.0
    %344 = vmatprep.subr.mxu0 0.0
    %345 = vmatpush1.xpose.msra.mxu0 0.0
    %346 = vmatprep.subr.mxu0 0.0
    %347 = vmatpush1.xpose.msra.mxu0 0.0
    %348 = vmatprep.subr.mxu0 0.0
    %349 = vmatpush1.xpose.msra.mxu0 0.0
    %350 = vmatprep.subr.mxu0 0.0
    %351 = vmatpush1.xpose.msra.mxu0 0.0
    %352 = vmatprep.subr.mxu0 0.0
    %353 = vmatpush1.xpose.msra.mxu0 0.0
    %354 = vmatprep.subr.mxu0 0.0
    %355 = vmatpush1.xpose.msra.mxu0 0.0
    %356 = vmatprep.subr.mxu0 0.0
    %357 = vmatpush1.xpose.msra.mxu0 0.0
    %358 = vmatprep.subr.mxu0 0.0
    %359 = vmatpush1.xpose.msra.mxu0 0.0
    %360 = vmatprep.subr.mxu0 0.0
    %361 = vmatpush1.xpose.msra.mxu0 0.0
    %362 = vmatprep.subr.mxu0 0.0
    %363 = vmatpush1.xpose.msra.mxu0 0.0
    %364 = vmatprep.mubr.f32.mxu0 0.0
    %365 = vmatmul.mubr.f32.gmra.mrb[0].mxu0 %v295
    %v366 = vpop.f32.mrb[0].mxu0
    %v367 = vadd.f32 0.0, %v366
    %v368 = vpop.f32.mrb[0].mxu0
    %369 = vdwg.mxu0
    %v370 = vsel %vm36, %v367, -1000000.0
    %v371 = vsel %vm293, %v370, -inf
    %372 = vmax.xlane.f32.xlu0 %v371
    %v373 = vpop.xlane.xlu0 %372
    %v374 = vsub.f32 %v370, %v373
    %v375 = vmul.f32 %v374, 1.442695
    %v376 = vpow.pop %v375
    %v377 = vsel %vm293, %v376, 0.0
    %378 = vadd.xlane.f32.xlu0 %v377
    %v379 = vpop.xlane.xlu0 %378
    %v380 = vrcp.pop %v379
    %v381 = vmul.f32 %v376, %v380
    %v383 = vsel %vm293, %v381, 0
    %385 = vmatprep.subr.mxu0 0.0
    %386 = vmatpush1.msra.mxu0 %v285
    %387 = vmatprep.subr.mxu0 0.0
    %388 = vmatpush1.msra.mxu0 0.0
    %389 = vmatprep.subr.mxu0 0.0
    %390 = vmatpush1.msra.mxu0 0.0
    %391 = vmatprep.subr.mxu0 0.0
    %392 = vmatpush1.msra.mxu0 0.0
    %393 = vmatprep.subr.mxu0 0.0
    %394 = vmatpush1.msra.mxu0 0.0
    %395 = vmatprep.subr.mxu0 0.0
    %396 = vmatpush1.msra.mxu0 0.0
    %397 = vmatprep.subr.mxu0 0.0
    %398 = vmatpush1.msra.mxu0 0.0
    %399 = vmatprep.subr.mxu0 0.0
    %400 = vmatpush1.msra.mxu0 0.0
    %401 = vmatprep.subr.mxu0 0.0
    %402 = vmatpush1.msra.mxu0 0.0
    %403 = vmatprep.subr.mxu0 0.0
    %404 = vmatpush1.msra.mxu0 0.0
    %405 = vmatprep.subr.mxu0 0.0
    %406 = vmatpush1.msra.mxu0 0.0
    %407 = vmatprep.subr.mxu0 0.0
    %408 = vmatpush1.msra.mxu0 0.0
    %409 = vmatprep.subr.mxu0 0.0
    %410 = vmatpush1.msra.mxu0 0.0
    %411 = vmatprep.subr.mxu0 0.0
    %412 = vmatpush1.msra.mxu0 0.0
    %413 = vmatprep.subr.mxu0 0.0
    %414 = vmatpush1.msra.mxu0 0.0
    %415 = vmatprep.subr.mxu0 0.0
    %416 = vmatpush1.msra.mxu0 0.0
    %417 = vmatprep.subr.mxu0 0.0
    %418 = vmatpush1.msra.mxu0 0.0
    %419 = vmatprep.subr.mxu0 0.0
    %420 = vmatpush1.msra.mxu0 0.0
    %421 = vmatprep.subr.mxu0 0.0
    %422 = vmatpush1.msra.mxu0 0.0
    %423 = vmatprep.subr.mxu0 0.0
    %424 = vmatpush1.msra.mxu0 0.0
    %425 = vmatprep.subr.mxu0 0.0
    %426 = vmatpush1.msra.mxu0 0.0
    %427 = vmatprep.subr.mxu0 0.0
    %428 = vmatpush1.msra.mxu0 0.0
    %429 = vmatprep.subr.mxu0 0.0
    %430 = vmatpush1.msra.mxu0 0.0
    %431 = vmatprep.subr.mxu0 0.0
    %432 = vmatpush1.msra.mxu0 0.0
    %433 = vmatprep.subr.mxu0 0.0
    %434 = vmatpush1.msra.mxu0 0.0
    %435 = vmatprep.subr.mxu0 0.0
    %436 = vmatpush1.msra.mxu0 0.0
    %437 = vmatprep.subr.mxu0 0.0
    %438 = vmatpush1.msra.mxu0 0.0
    %439 = vmatprep.subr.mxu0 0.0
    %440 = vmatpush1.msra.mxu0 0.0
    %441 = vmatprep.subr.mxu0 0.0
    %442 = vmatpush1.msra.mxu0 0.0
    %443 = vmatprep.subr.mxu0 0.0
    %444 = vmatpush1.msra.mxu0 0.0
    %445 = vmatprep.subr.mxu0 0.0
    %446 = vmatpush1.msra.mxu0 0.0
    %447 = vmatprep.subr.mxu0 0.0
    %448 = vmatpush1.msra.mxu0 0.0
    %449 = vmatprep.mubr.f32.mxu0 0.0
    %450 = vmatmul.mubr.f32.gmra.mrb[0].mxu0 %v383
    %v451 = vpop.f32.mrb[0].mxu0
    %v452 = vadd.f32 0.0, %v451
    %v453 = vpop.f32.mrb[0].mxu0
    %454 = vdwg.mxu0
    %v456 = vsel %vm293, %v142, 0
    %v459 = vsel %vm293, %v215, 0
    %461 = vmatprep.subr.mxu0 0.0
    %462 = vmatpush1.xpose.msra.mxu0 %v459
    %463 = vmatprep.subr.mxu0 0.0
    %464 = vmatpush1.xpose.msra.mxu0 0.0
    %465 = vmatprep.subr.mxu0 0.0
    %466 = vmatpush1.xpose.msra.mxu0 0.0
    %467 = vmatprep.subr.mxu0 0.0
    %468 = vmatpush1.xpose.msra.mxu0 0.0
    %469 = vmatprep.subr.mxu0 0.0
    %470 = vmatpush1.xpose.msra.mxu0 0.0
    %471 = vmatprep.subr.mxu0 0.0
    %472 = vmatpush1.xpose.msra.mxu0 0.0
    %473 = vmatprep.subr.mxu0 0.0
    %474 = vmatpush1.xpose.msra.mxu0 0.0
    %475 = vmatprep.subr.mxu0 0.0
    %476 = vmatpush1.xpose.msra.mxu0 0.0
    %477 = vmatprep.subr.mxu0 0.0
    %478 = vmatpush1.xpose.msra.mxu0 0.0
    %479 = vmatprep.subr.mxu0 0.0
    %480 = vmatpush1.xpose.msra.mxu0 0.0
    %481 = vmatprep.subr.mxu0 0.0
    %482 = vmatpush1.xpose.msra.mxu0 0.0
    %483 = vmatprep.subr.mxu0 0.0
    %484 = vmatpush1.xpose.msra.mxu0 0.0
    %485 = vmatprep.subr.mxu0 0.0
    %486 = vmatpush1.xpose.msra.mxu0 0.0
    %487 = vmatprep.subr.mxu0 0.0
    %488 = vmatpush1.xpose.msra.mxu0 0.0
    %489 = vmatprep.subr.mxu0 0.0
    %490 = vmatpush1.xpose.msra.mxu0 0.0
    %491 = vmatprep.subr.mxu0 0.0
    %492 = vmatpush1.xpose.msra.mxu0 0.0
    %493 = vmatprep.subr.mxu0 0.0
    %494 = vmatpush1.xpose.msra.mxu0 0.0
    %495 = vmatprep.subr.mxu0 0.0
    %496 = vmatpush1.xpose.msra.mxu0 0.0
    %497 = vmatprep.subr.mxu0 0.0
    %498 = vmatpush1.xpose.msra.mxu0 0.0
    %499 = vmatprep.subr.mxu0 0.0
    %500 = vmatpush1.xpose.msra.mxu0 0.0
    %501 = vmatprep.subr.mxu0 0.0
    %502 = vmatpush1.xpose.msra.mxu0 0.0
    %503 = vmatprep.subr.mxu0 0.0
    %504 = vmatpush1.xpose.msra.mxu0 0.0
    %505 = vmatprep.subr.mxu0 0.0
    %506 = vmatpush1.xpose.msra.mxu0 0.0
    %507 = vmatprep.subr.mxu0 0.0
    %508 = vmatpush1.xpose.msra.mxu0 0.0
    %509 = vmatprep.subr.mxu0 0.0
    %510 = vmatpush1.xpose.msra.mxu0 0.0
    %511 = vmatprep.subr.mxu0 0.0
    %512 = vmatpush1.xpose.msra.mxu0 0.0
    %513 = vmatprep.subr.mxu0 0.0
    %514 = vmatpush1.xpose.msra.mxu0 0.0
    %515 = vmatprep.subr.mxu0 0.0
    %516 = vmatpush1.xpose.msra.mxu0 0.0
    %517 = vmatprep.subr.mxu0 0.0
    %518 = vmatpush1.xpose.msra.mxu0 0.0
    %519 = vmatprep.subr.mxu0 0.0
    %520 = vmatpush1.xpose.msra.mxu0 0.0
    %521 = vmatprep.subr.mxu0 0.0
    %522 = vmatpush1.xpose.msra.mxu0 0.0
    %523 = vmatprep.subr.mxu0 0.0
    %524 = vmatpush1.xpose.msra.mxu0 0.0
    %525 = vmatprep.mubr.f32.mxu0 0.0
    %526 = vmatmul.mubr.f32.gmra.mrb[0].mxu0 %v456
    %v527 = vpop.f32.mrb[0].mxu0
    %v528 = vadd.f32 0.0, %v527
    %v529 = vpop.f32.mrb[0].mxu0
    %530 = vdwg.mxu0
    %v531 = vsel %vm39, %v528, -1000000.0
    %v532 = vsel %vm293, %v531, -inf
    %533 = vmax.xlane.f32.xlu0 %v532
    %v534 = vpop.xlane.xlu0 %533
    %v535 = vsub.f32 %v531, %v534
    %v536 = vmul.f32 %v535, 1.442695
    %v537 = vpow.pop %v536
    %v538 = vsel %vm293, %v537, 0.0
    %539 = vadd.xlane.f32.xlu0 %v538
    %v540 = vpop.xlane.xlu0 %539
    %v541 = vrcp.pop %v540
    %v542 = vmul.f32 %v537, %v541
    %v544 = vsel %vm293, %v542, 0
    %546 = vmatprep.subr.mxu0 0.0
    %547 = vmatpush1.msra.mxu0 %v290
    %548 = vmatprep.subr.mxu0 0.0
    %549 = vmatpush1.msra.mxu0 0.0
    %550 = vmatprep.subr.mxu0 0.0
    %551 = vmatpush1.msra.mxu0 0.0
    %552 = vmatprep.subr.mxu0 0.0
    %553 = vmatpush1.msra.mxu0 0.0
    %554 = vmatprep.subr.mxu0 0.0
    %555 = vmatpush1.msra.mxu0 0.0
    %556 = vmatprep.subr.mxu0 0.0
    %557 = vmatpush1.msra.mxu0 0.0
    %558 = vmatprep.subr.mxu0 0.0
    %559 = vmatpush1.msra.mxu0 0.0
    %560 = vmatprep.subr.mxu0 0.0
    %561 = vmatpush1.msra.mxu0 0.0
    %562 = vmatprep.subr.mxu0 0.0
    %563 = vmatpush1.msra.mxu0 0.0
    %564 = vmatprep.subr.mxu0 0.0
    %565 = vmatpush1.msra.mxu0 0.0
    %566 = vmatprep.subr.mxu0 0.0
    %567 = vmatpush1.msra.mxu0 0.0
    %568 = vmatprep.subr.mxu0 0.0
    %569 = vmatpush1.msra.mxu0 0.0
    %570 = vmatprep.subr.mxu0 0.0
    %571 = vmatpush1.msra.mxu0 0.0
    %572 = vmatprep.subr.mxu0 0.0
    %573 = vmatpush1.msra.mxu0 0.0
    %574 = vmatprep.subr.mxu0 0.0
    %575 = vmatpush1.msra.mxu0 0.0
    %576 = vmatprep.subr.mxu0 0.0
    %577 = vmatpush1.msra.mxu0 0.0
    %578 = vmatprep.subr.mxu0 0.0
    %579 = vmatpush1.msra.mxu0 0.0
    %580 = vmatprep.subr.mxu0 0.0
    %581 = vmatpush1.msra.mxu0 0.0
    %582 = vmatprep.subr.mxu0 0.0
    %583 = vmatpush1.msra.mxu0 0.0
    %584 = vmatprep.subr.mxu0 0.0
    %585 = vmatpush1.msra.mxu0 0.0
    %586 = vmatprep.subr.mxu0 0.0
    %587 = vmatpush1.msra.mxu0 0.0
    %588 = vmatprep.subr.mxu0 0.0
    %589 = vmatpush1.msra.mxu0 0.0
    %590 = vmatprep.subr.mxu0 0.0
    %591 = vmatpush1.msra.mxu0 0.0
    %592 = vmatprep.subr.mxu0 0.0
    %593 = vmatpush1.msra.mxu0 0.0
    %594 = vmatprep.subr.mxu0 0.0
    %595 = vmatpush1.msra.mxu0 0.0
    %596 = vmatprep.subr.mxu0 0.0
    %597 = vmatpush1.msra.mxu0 0.0
    %598 = vmatprep.subr.mxu0 0.0
    %599 = vmatpush1.msra.mxu0 0.0
    %600 = vmatprep.subr.mxu0 0.0
    %601 = vmatpush1.msra.mxu0 0.0
    %602 = vmatprep.subr.mxu0 0.0
    %603 = vmatpush1.msra.mxu0 0.0
    %604 = vmatprep.subr.mxu0 0.0
    %605 = vmatpush1.msra.mxu0 0.0
    %606 = vmatprep.subr.mxu0 0.0
    %607 = vmatpush1.msra.mxu0 0.0
    %608 = vmatprep.subr.mxu0 0.0
    %609 = vmatpush1.msra.mxu0 0.0
    %610 = vmatprep.mubr.f32.mxu0 0.0
    %611 = vmatmul.mubr.f32.gmra.mrb[0].mxu0 %v544
    %v612 = vpop.f32.mrb[0].mxu0
    %v613 = vadd.f32 0.0, %v612
    %v614 = vpop.f32.mrb[0].mxu0
    %615 = vdwg.mxu0
    %s616 = scalar_lea.vmem %s2, 32
    %v617 = vld [vmem:[%s616] sm:$0xff]
    %v618 = vld [vmem:[%s616 + $0x8] sm:$0xff]
    %v619 = vld [vmem:[%s616 + $0x10] sm:$0xff]
    %v620 = vld [vmem:[%s616 + $0x18] sm:$0xff]
    %s621 = scalar_lea.vmem %s2, 160
    %v622 = vld [vmem:[%s621] sm:$0xff]
    %v623 = vld [vmem:[%s621 + $0x8] sm:$0xff]
    %v624 = vld [vmem:[%s621 + $0x10] sm:$0xff]
    %v625 = vld [vmem:[%s621 + $0x18] sm:$0xff]
    %s626 = scalar_lea.vmem %s2, 288
    %v627 = vld [vmem:[%s626] sm:$0xff]
    %v628 = vld [vmem:[%s626 + $0x8] sm:$0xff]
    %v629 = vld [vmem:[%s626 + $0x10] sm:$0xff]
    %v630 = vld [vmem:[%s626 + $0x18] sm:$0xff]
    %s631 = scalar_lea.vmem %s2, 416
    %v632 = vld [vmem:[%s631] sm:$0xff]
    %v633 = vld [vmem:[%s631 + $0x8] sm:$0xff]
    %v634 = vld [vmem:[%s631 + $0x10] sm:$0xff]
    %v635 = vld [vmem:[%s631 + $0x18] sm:$0xff]
    %636 = vmatprep.subr.mxu0 0.0
    %637 = vmatpush1.msra.mxu0 %v617
    %638 = vmatprep.subr.mxu0 0.0
    %639 = vmatpush1.msra.mxu0 %v618
    %640 = vmatprep.subr.mxu0 0.0
    %641 = vmatpush1.msra.mxu0 %v619
    %642 = vmatprep.subr.mxu0 0.0
    %643 = vmatpush1.msra.mxu0 %v620
    %644 = vmatprep.subr.mxu0 0.0
    %645 = vmatpush1.msra.mxu0 0.0
    %646 = vmatprep.subr.mxu0 0.0
    %647 = vmatpush1.msra.mxu0 0.0
    %648 = vmatprep.subr.mxu0 0.0
    %649 = vmatpush1.msra.mxu0 0.0
    %650 = vmatprep.subr.mxu0 0.0
    %651 = vmatpush1.msra.mxu0 0.0
    %652 = vmatprep.subr.mxu0 0.0
    %653 = vmatpush1.msra.mxu0 0.0
    %654 = vmatprep.subr.mxu0 0.0
    %655 = vmatpush1.msra.mxu0 0.0
    %656 = vmatprep.subr.mxu0 0.0
    %657 = vmatpush1.msra.mxu0 0.0
    %658 = vmatprep.subr.mxu0 0.0
    %659 = vmatpush1.msra.mxu0 0.0
    %660 = vmatprep.subr.mxu0 0.0
    %661 = vmatpush1.msra.mxu0 0.0
    %662 = vmatprep.subr.mxu0 0.0
    %663 = vmatpush1.msra.mxu0 0.0
    %664 = vmatprep.subr.mxu0 0.0
    %665 = vmatpush1.msra.mxu0 0.0
    %666 = vmatprep.subr.mxu0 0.0
    %667 = vmatpush1.msra.mxu0 0.0
    %668 = vmatprep.subr.mxu0 0.0
    %669 = vmatpush1.msra.mxu0 0.0
    %670 = vmatprep.subr.mxu0 0.0
    %671 = vmatpush1.msra.mxu0 0.0
    %672 = vmatprep.subr.mxu0 0.0
    %673 = vmatpush1.msra.mxu0 0.0
    %674 = vmatprep.subr.mxu0 0.0
    %675 = vmatpush1.msra.mxu0 0.0
    %676 = vmatprep.subr.mxu0 0.0
    %677 = vmatpush1.msra.mxu0 0.0
    %678 = vmatprep.subr.mxu0 0.0
    %679 = vmatpush1.msra.mxu0 0.0
    %680 = vmatprep.subr.mxu0 0.0
    %681 = vmatpush1.msra.mxu0 0.0
    %682 = vmatprep.subr.mxu0 0.0
    %683 = vmatpush1.msra.mxu0 0.0
    %684 = vmatprep.subr.mxu0 0.0
    %685 = vmatpush1.msra.mxu0 0.0
    %686 = vmatprep.subr.mxu0 0.0
    %687 = vmatpush1.msra.mxu0 0.0
    %688 = vmatprep.subr.mxu0 0.0
    %689 = vmatpush1.msra.mxu0 0.0
    %690 = vmatprep.subr.mxu0 0.0
    %691 = vmatpush1.msra.mxu0 0.0
    %692 = vmatprep.subr.mxu0 0.0
    %693 = vmatpush1.msra.mxu0 0.0
    %694 = vmatprep.subr.mxu0 0.0
    %695 = vmatpush1.msra.mxu0 0.0
    %696 = vmatprep.subr.mxu0 0.0
    %697 = vmatpush1.msra.mxu0 0.0
    %698 = vmatprep.subr.mxu0 0.0
    %699 = vmatpush1.msra.mxu0 0.0
    %700 = vmatprep.mubr.f32.mxu0 0.0
    %701 = vmatmul.mubr.f32.gmra.mrb[0].mxu0 %v61
    %v702 = vpop.f32.mrb[0].mxu0
    %v703 = vadd.f32 0.0, %v702
    %v704 = vpop.f32.mrb[0].mxu0
    %705 = vmatprep.mubr.f32.mxu0 0.0
    %706 = vmatmul.mubr.f32.gmra.mrb[0].mxu0 %v64
    %v707 = vpop.f32.mrb[0].mxu0
    %v708 = vadd.f32 0.0, %v707
    %v709 = vpop.f32.mrb[0].mxu0
    %710 = vdwg.mxu0
    %v711 = vmul.f32 %v703, 0.35355338
    %v712 = vmul.f32 %v708, 0.35355338
    %713 = vmatprep.subr.mxu0 0.0
    %714 = vmatpush1.msra.mxu0 %v622
    %715 = vmatprep.subr.mxu0 0.0
    %716 = vmatpush1.msra.mxu0 %v623
    %717 = vmatprep.subr.mxu0 0.0
    %718 = vmatpush1.msra.mxu0 %v624
    %719 = vmatprep.subr.mxu0 0.0
    %720 = vmatpush1.msra.mxu0 %v625
    %721 = vmatprep.subr.mxu0 0.0
    %722 = vmatpush1.msra.mxu0 0.0
    %723 = vmatprep.subr.mxu0 0.0
    %724 = vmatpush1.msra.mxu0 0.0
    %725 = vmatprep.subr.mxu0 0.0
    %726 = vmatpush1.msra.mxu0 0.0
    %727 = vmatprep.subr.mxu0 0.0
    %728 = vmatpush1.msra.mxu0 0.0
    %729 = vmatprep.subr.mxu0 0.0
    %730 = vmatpush1.msra.mxu0 0.0
    %731 = vmatprep.subr.mxu0 0.0
    %732 = vmatpush1.msra.mxu0 0.0
    %733 = vmatprep.subr.mxu0 0.0
    %734 = vmatpush1.msra.mxu0 0.0
    %735 = vmatprep.subr.mxu0 0.0
    %736 = vmatpush1.msra.mxu0 0.0
    %737 = vmatprep.subr.mxu0 0.0
    %738 = vmatpush1.msra.mxu0 0.0
    %739 = vmatprep.subr.mxu0 0.0
    %740 = vmatpush1.msra.mxu0 0.0
    %741 = vmatprep.subr.mxu0 0.0
    %742 = vmatpush1.msra.mxu0 0.0
    %743 = vmatprep.subr.mxu0 0.0
    %744 = vmatpush1.msra.mxu0 0.0
    %745 = vmatprep.subr.mxu0 0.0
    %746 = vmatpush1.msra.mxu0 0.0
    %747 = vmatprep.subr.mxu0 0.0
    %748 = vmatpush1.msra.mxu0 0.0
    %749 = vmatprep.subr.mxu0 0.0
    %750 = vmatpush1.msra.mxu0 0.0
    %751 = vmatprep.subr.mxu0 0.0
    %752 = vmatpush1.msra.mxu0 0.0
    %753 = vmatprep.subr.mxu0 0.0
    %754 = vmatpush1.msra.mxu0 0.0
    %755 = vmatprep.subr.mxu0 0.0
    %756 = vmatpush1.msra.mxu0 0.0
    %757 = vmatprep.subr.mxu0 0.0
    %758 = vmatpush1.msra.mxu0 0.0
    %759 = vmatprep.subr.mxu0 0.0
    %760 = vmatpush1.msra.mxu0 0.0
    %761 = vmatprep.subr.mxu0 0.0
    %762 = vmatpush1.msra.mxu0 0.0
    %763 = vmatprep.subr.mxu0 0.0
    %764 = vmatpush1.msra.mxu0 0.0
    %765 = vmatprep.subr.mxu0 0.0
    %766 = vmatpush1.msra.mxu0 0.0
    %767 = vmatprep.subr.mxu0 0.0
    %768 = vmatpush1.msra.mxu0 0.0
    %769 = vmatprep.subr.mxu0 0.0
    %770 = vmatpush1.msra.mxu0 0.0
    %771 = vmatprep.subr.mxu0 0.0
    %772 = vmatpush1.msra.mxu0 0.0
    %773 = vmatprep.subr.mxu0 0.0
    %774 = vmatpush1.msra.mxu0 0.0
    %775 = vmatprep.subr.mxu0 0.0
    %776 = vmatpush1.msra.mxu0 0.0
    %777 = vmatprep.mubr.f32.mxu0 0.0
    %778 = vmatmul.mubr.f32.gmra.mrb[0].mxu0 %v61
    %v779 = vpop.f32.mrb[0].mxu0
    %v780 = vadd.f32 0.0, %v779
    %v781 = vpop.f32.mrb[0].mxu0
    %782 = vmatprep.mubr.f32.mxu0 0.0
    %783 = vmatmul.mubr.f32.gmra.mrb[0].mxu0 %v64
    %v784 = vpop.f32.mrb[0].mxu0
    %v785 = vadd.f32 0.0, %v784
    %v786 = vpop.f32.mrb[0].mxu0
    %787 = vdwg.mxu0
    %788 = vmatprep.subr.mxu0 0.0
    %789 = vmatpush1.msra.mxu0 %v627
    %790 = vmatprep.subr.mxu0 0.0
    %791 = vmatpush1.msra.mxu0 %v628
    %792 = vmatprep.subr.mxu0 0.0
    %793 = vmatpush1.msra.mxu0 %v629
    %794 = vmatprep.subr.mxu0 0.0
    %795 = vmatpush1.msra.mxu0 %v630
    %796 = vmatprep.subr.mxu0 0.0
    %797 = vmatpush1.msra.mxu0 0.0
    %798 = vmatprep.subr.mxu0 0.0
    %799 = vmatpush1.msra.mxu0 0.0
    %800 = vmatprep.subr.mxu0 0.0
    %801 = vmatpush1.msra.mxu0 0.0
    %802 = vmatprep.subr.mxu0 0.0
    %803 = vmatpush1.msra.mxu0 0.0
    %804 = vmatprep.subr.mxu0 0.0
    %805 = vmatpush1.msra.mxu0 0.0
    %806 = vmatprep.subr.mxu0 0.0
    %807 = vmatpush1.msra.mxu0 0.0
    %808 = vmatprep.subr.mxu0 0.0
    %809 = vmatpush1.msra.mxu0 0.0
    %810 = vmatprep.subr.mxu0 0.0
    %811 = vmatpush1.msra.mxu0 0.0
    %812 = vmatprep.subr.mxu0 0.0
    %813 = vmatpush1.msra.mxu0 0.0
    %814 = vmatprep.subr.mxu0 0.0
    %815 = vmatpush1.msra.mxu0 0.0
    %816 = vmatprep.subr.mxu0 0.0
    %817 = vmatpush1.msra.mxu0 0.0
    %818 = vmatprep.subr.mxu0 0.0
    %819 = vmatpush1.msra.mxu0 0.0
    %820 = vmatprep.subr.mxu0 0.0
    %821 = vmatpush1.msra.mxu0 0.0
    %822 = vmatprep.subr.mxu0 0.0
    %823 = vmatpush1.msra.mxu0 0.0
    %824 = vmatprep.subr.mxu0 0.0
    %825 = vmatpush1.msra.mxu0 0.0
    %826 = vmatprep.subr.mxu0 0.0
    %827 = vmatpush1.msra.mxu0 0.0
    %828 = vmatprep.subr.mxu0 0.0
    %829 = vmatpush1.msra.mxu0 0.0
    %830 = vmatprep.subr.mxu0 0.0
    %831 = vmatpush1.msra.mxu0 0.0
    %832 = vmatprep.subr.mxu0 0.0
    %833 = vmatpush1.msra.mxu0 0.0
    %834 = vmatprep.subr.mxu0 0.0
    %835 = vmatpush1.msra.mxu0 0.0
    %836 = vmatprep.subr.mxu0 0.0
    %837 = vmatpush1.msra.mxu0 0.0
    %838 = vmatprep.subr.mxu0 0.0
    %839 = vmatpush1.msra.mxu0 0.0
    %840 = vmatprep.subr.mxu0 0.0
    %841 = vmatpush1.msra.mxu0 0.0
    %842 = vmatprep.subr.mxu0 0.0
    %843 = vmatpush1.msra.mxu0 0.0
    %844 = vmatprep.subr.mxu0 0.0
    %845 = vmatpush1.msra.mxu0 0.0
    %846 = vmatprep.subr.mxu0 0.0
    %847 = vmatpush1.msra.mxu0 0.0
    %848 = vmatprep.subr.mxu0 0.0
    %849 = vmatpush1.msra.mxu0 0.0
    %850 = vmatprep.subr.mxu0 0.0
    %851 = vmatpush1.msra.mxu0 0.0
    %852 = vmatprep.mubr.f32.mxu0 0.0
    %853 = vmatmul.mubr.f32.gmra.mrb[0].mxu0 %v61
    %v854 = vpop.f32.mrb[0].mxu0
    %v855 = vadd.f32 0.0, %v854
    %v856 = vpop.f32.mrb[0].mxu0
    %857 = vmatprep.mubr.f32.mxu0 0.0
    %858 = vmatmul.mubr.f32.gmra.mrb[0].mxu0 %v64
    %v859 = vpop.f32.mrb[0].mxu0
    %v860 = vadd.f32 0.0, %v859
    %v861 = vpop.f32.mrb[0].mxu0
    %862 = vdwg.mxu0
    %v864 = vsel %vm293, %v711, 0
    %v867 = vsel %vm293, %v780, 0
    %869 = vmatprep.subr.mxu0 0.0
    %870 = vmatpush1.xpose.msra.mxu0 %v867
    %871 = vmatprep.subr.mxu0 0.0
    %872 = vmatpush1.xpose.msra.mxu0 0.0
    %873 = vmatprep.subr.mxu0 0.0
    %874 = vmatpush1.xpose.msra.mxu0 0.0
    %875 = vmatprep.subr.mxu0 0.0
    %876 = vmatpush1.xpose.msra.mxu0 0.0
    %877 = vmatprep.subr.mxu0 0.0
    %878 = vmatpush1.xpose.msra.mxu0 0.0
    %879 = vmatprep.subr.mxu0 0.0
    %880 = vmatpush1.xpose.msra.mxu0 0.0
    %881 = vmatprep.subr.mxu0 0.0
    %882 = vmatpush1.xpose.msra.mxu0 0.0
    %883 = vmatprep.subr.mxu0 0.0
    %884 = vmatpush1.xpose.msra.mxu0 0.0
    %885 = vmatprep.subr.mxu0 0.0
    %886 = vmatpush1.xpose.msra.mxu0 0.0
    %887 = vmatprep.subr.mxu0 0.0
    %888 = vmatpush1.xpose.msra.mxu0 0.0
    %889 = vmatprep.subr.mxu0 0.0
    %890 = vmatpush1.xpose.msra.mxu0 0.0
    %891 = vmatprep.subr.mxu0 0.0
    %892 = vmatpush1.xpose.msra.mxu0 0.0
    %893 = vmatprep.subr.mxu0 0.0
    %894 = vmatpush1.xpose.msra.mxu0 0.0
    %895 = vmatprep.subr.mxu0 0.0
    %896 = vmatpush1.xpose.msra.mxu0 0.0
    %897 = vmatprep.subr.mxu0 0.0
    %898 = vmatpush1.xpose.msra.mxu0 0.0
    %899 = vmatprep.subr.mxu0 0.0
    %900 = vmatpush1.xpose.msra.mxu0 0.0
    %901 = vmatprep.subr.mxu0 0.0
    %902 = vmatpush1.xpose.msra.mxu0 0.0
    %903 = vmatprep.subr.mxu0 0.0
    %904 = vmatpush1.xpose.msra.mxu0 0.0
    %905 = vmatprep.subr.mxu0 0.0
    %906 = vmatpush1.xpose.msra.mxu0 0.0
    %907 = vmatprep.subr.mxu0 0.0
    %908 = vmatpush1.xpose.msra.mxu0 0.0
    %909 = vmatprep.subr.mxu0 0.0
    %910 = vmatpush1.xpose.msra.mxu0 0.0
    %911 = vmatprep.subr.mxu0 0.0
    %912 = vmatpush1.xpose.msra.mxu0 0.0
    %913 = vmatprep.subr.mxu0 0.0
    %914 = vmatpush1.xpose.msra.mxu0 0.0
    %915 = vmatprep.subr.mxu0 0.0
    %916 = vmatpush1.xpose.msra.mxu0 0.0
    %917 = vmatprep.subr.mxu0 0.0
    %918 = vmatpush1.xpose.msra.mxu0 0.0
    %919 = vmatprep.subr.mxu0 0.0
    %920 = vmatpush1.xpose.msra.mxu0 0.0
    %921 = vmatprep.subr.mxu0 0.0
    %922 = vmatpush1.xpose.msra.mxu0 0.0
    %923 = vmatprep.subr.mxu0 0.0
    %924 = vmatpush1.xpose.msra.mxu0 0.0
    %925 = vmatprep.subr.mxu0 0.0
    %926 = vmatpush1.xpose.msra.mxu0 0.0
    %927 = vmatprep.subr.mxu0 0.0
    %928 = vmatpush1.xpose.msra.mxu0 0.0
    %929 = vmatprep.subr.mxu0 0.0
    %930 = vmatpush1.xpose.msra.mxu0 0.0
    %931 = vmatprep.subr.mxu0 0.0
    %932 = vmatpush1.xpose.msra.mxu0 0.0
    %933 = vmatprep.mubr.f32.mxu0 0.0
    %934 = vmatmul.mubr.f32.gmra.mrb[0].mxu0 %v864
    %v935 = vpop.f32.mrb[0].mxu0
    %v936 = vadd.f32 0.0, %v935
    %v937 = vpop.f32.mrb[0].mxu0
    %938 = vdwg.mxu0
    %v939 = vsel %vm36, %v936, -1000000.0
    %v940 = vsel %vm293, %v939, -inf
    %941 = vmax.xlane.f32.xlu0 %v940
    %v942 = vpop.xlane.xlu0 %941
    %v943 = vsub.f32 %v939, %v942
    %v944 = vmul.f32 %v943, 1.442695
    %v945 = vpow.pop %v944
    %v946 = vsel %vm293, %v945, 0.0
    %947 = vadd.xlane.f32.xlu0 %v946
    %v948 = vpop.xlane.xlu0 %947
    %v949 = vrcp.pop %v948
    %v950 = vmul.f32 %v945, %v949
    %v952 = vsel %vm293, %v950, 0
    %954 = vmatprep.subr.mxu0 0.0
    %955 = vmatpush1.msra.mxu0 %v855
    %956 = vmatprep.subr.mxu0 0.0
    %957 = vmatpush1.msra.mxu0 0.0
    %958 = vmatprep.subr.mxu0 0.0
    %959 = vmatpush1.msra.mxu0 0.0
    %960 = vmatprep.subr.mxu0 0.0
    %961 = vmatpush1.msra.mxu0 0.0
    %962 = vmatprep.subr.mxu0 0.0
    %963 = vmatpush1.msra.mxu0 0.0
    %964 = vmatprep.subr.mxu0 0.0
    %965 = vmatpush1.msra.mxu0 0.0
    %966 = vmatprep.subr.mxu0 0.0
    %967 = vmatpush1.msra.mxu0 0.0
    %968 = vmatprep.subr.mxu0 0.0
    %969 = vmatpush1.msra.mxu0 0.0
    %970 = vmatprep.subr.mxu0 0.0
    %971 = vmatpush1.msra.mxu0 0.0
    %972 = vmatprep.subr.mxu0 0.0
    %973 = vmatpush1.msra.mxu0 0.0
    %974 = vmatprep.subr.mxu0 0.0
    %975 = vmatpush1.msra.mxu0 0.0
    %976 = vmatprep.subr.mxu0 0.0
    %977 = vmatpush1.msra.mxu0 0.0
    %978 = vmatprep.subr.mxu0 0.0
    %979 = vmatpush1.msra.mxu0 0.0
    %980 = vmatprep.subr.mxu0 0.0
    %981 = vmatpush1.msra.mxu0 0.0
    %982 = vmatprep.subr.mxu0 0.0
    %983 = vmatpush1.msra.mxu0 0.0
    %984 = vmatprep.subr.mxu0 0.0
    %985 = vmatpush1.msra.mxu0 0.0
    %986 = vmatprep.subr.mxu0 0.0
    %987 = vmatpush1.msra.mxu0 0.0
    %988 = vmatprep.subr.mxu0 0.0
    %989 = vmatpush1.msra.mxu0 0.0
    %990 = vmatprep.subr.mxu0 0.0
    %991 = vmatpush1.msra.mxu0 0.0
    %992 = vmatprep.subr.mxu0 0.0
    %993 = vmatpush1.msra.mxu0 0.0
    %994 = vmatprep.subr.mxu0 0.0
    %995 = vmatpush1.msra.mxu0 0.0
    %996 = vmatprep.subr.mxu0 0.0
    %997 = vmatpush1.msra.mxu0 0.0
    %998 = vmatprep.subr.mxu0 0.0
    %999 = vmatpush1.msra.mxu0 0.0
    %1000 = vmatprep.subr.mxu0 0.0
    %1001 = vmatpush1.msra.mxu0 0.0
    %1002 = vmatprep.subr.mxu0 0.0
    %1003 = vmatpush1.msra.mxu0 0.0
    %1004 = vmatprep.subr.mxu0 0.0
    %1005 = vmatpush1.msra.mxu0 0.0
    %1006 = vmatprep.subr.mxu0 0.0
    %1007 = vmatpush1.msra.mxu0 0.0
    %1008 = vmatprep.subr.mxu0 0.0
    %1009 = vmatpush1.msra.mxu0 0.0
    %1010 = vmatprep.subr.mxu0 0.0
    %1011 = vmatpush1.msra.mxu0 0.0
    %1012 = vmatprep.subr.mxu0 0.0
    %1013 = vmatpush1.msra.mxu0 0.0
    %1014 = vmatprep.subr.mxu0 0.0
    %1015 = vmatpush1.msra.mxu0 0.0
    %1016 = vmatprep.subr.mxu0 0.0
    %1017 = vmatpush1.msra.mxu0 0.0
    %1018 = vmatprep.mubr.f32.mxu0 0.0
    %1019 = vmatmul.mubr.f32.gmra.mrb[0].mxu0 %v952
    %v1020 = vpop.f32.mrb[0].mxu0
    %v1021 = vadd.f32 0.0, %v1020
    %v1022 = vpop.f32.mrb[0].mxu0
    %1023 = vdwg.mxu0
    %v1025 = vsel %vm293, %v712, 0
    %v1028 = vsel %vm293, %v785, 0
    %1030 = vmatprep.subr.mxu0 0.0
    %1031 = vmatpush1.xpose.msra.mxu0 %v1028
    %1032 = vmatprep.subr.mxu0 0.0
    %1033 = vmatpush1.xpose.msra.mxu0 0.0
    %1034 = vmatprep.subr.mxu0 0.0
    %1035 = vmatpush1.xpose.msra.mxu0 0.0
    %1036 = vmatprep.subr.mxu0 0.0
    %1037 = vmatpush1.xpose.msra.mxu0 0.0
    %1038 = vmatprep.subr.mxu0 0.0
    %1039 = vmatpush1.xpose.msra.mxu0 0.0
    %1040 = vmatprep.subr.mxu0 0.0
    %1041 = vmatpush1.xpose.msra.mxu0 0.0
    %1042 = vmatprep.subr.mxu0 0.0
    %1043 = vmatpush1.xpose.msra.mxu0 0.0
    %1044 = vmatprep.subr.mxu0 0.0
    %1045 = vmatpush1.xpose.msra.mxu0 0.0
    %1046 = vmatprep.subr.mxu0 0.0
    %1047 = vmatpush1.xpose.msra.mxu0 0.0
    %1048 = vmatprep.subr.mxu0 0.0
    %1049 = vmatpush1.xpose.msra.mxu0 0.0
    %1050 = vmatprep.subr.mxu0 0.0
    %1051 = vmatpush1.xpose.msra.mxu0 0.0
    %1052 = vmatprep.subr.mxu0 0.0
    %1053 = vmatpush1.xpose.msra.mxu0 0.0
    %1054 = vmatprep.subr.mxu0 0.0
    %1055 = vmatpush1.xpose.msra.mxu0 0.0
    %1056 = vmatprep.subr.mxu0 0.0
    %1057 = vmatpush1.xpose.msra.mxu0 0.0
    %1058 = vmatprep.subr.mxu0 0.0
    %1059 = vmatpush1.xpose.msra.mxu0 0.0
    %1060 = vmatprep.subr.mxu0 0.0
    %1061 = vmatpush1.xpose.msra.mxu0 0.0
    %1062 = vmatprep.subr.mxu0 0.0
    %1063 = vmatpush1.xpose.msra.mxu0 0.0
    %1064 = vmatprep.subr.mxu0 0.0
    %1065 = vmatpush1.xpose.msra.mxu0 0.0
    %1066 = vmatprep.subr.mxu0 0.0
    %1067 = vmatpush1.xpose.msra.mxu0 0.0
    %1068 = vmatprep.subr.mxu0 0.0
    %1069 = vmatpush1.xpose.msra.mxu0 0.0
    %1070 = vmatprep.subr.mxu0 0.0
    %1071 = vmatpush1.xpose.msra.mxu0 0.0
    %1072 = vmatprep.subr.mxu0 0.0
    %1073 = vmatpush1.xpose.msra.mxu0 0.0
    %1074 = vmatprep.subr.mxu0 0.0
    %1075 = vmatpush1.xpose.msra.mxu0 0.0
    %1076 = vmatprep.subr.mxu0 0.0
    %1077 = vmatpush1.xpose.msra.mxu0 0.0
    %1078 = vmatprep.subr.mxu0 0.0
    %1079 = vmatpush1.xpose.msra.mxu0 0.0
    %1080 = vmatprep.subr.mxu0 0.0
    %1081 = vmatpush1.xpose.msra.mxu0 0.0
    %1082 = vmatprep.subr.mxu0 0.0
    %1083 = vmatpush1.xpose.msra.mxu0 0.0
    %1084 = vmatprep.subr.mxu0 0.0
    %1085 = vmatpush1.xpose.msra.mxu0 0.0
    %1086 = vmatprep.subr.mxu0 0.0
    %1087 = vmatpush1.xpose.msra.mxu0 0.0
    %1088 = vmatprep.subr.mxu0 0.0
    %1089 = vmatpush1.xpose.msra.mxu0 0.0
    %1090 = vmatprep.subr.mxu0 0.0
    %1091 = vmatpush1.xpose.msra.mxu0 0.0
    %1092 = vmatprep.subr.mxu0 0.0
    %1093 = vmatpush1.xpose.msra.mxu0 0.0
    %1094 = vmatprep.mubr.f32.mxu0 0.0
    %1095 = vmatmul.mubr.f32.gmra.mrb[0].mxu0 %v1025
    %v1096 = vpop.f32.mrb[0].mxu0
    %v1097 = vadd.f32 0.0, %v1096
    %v1098 = vpop.f32.mrb[0].mxu0
    %1099 = vdwg.mxu0
    %v1100 = vsel %vm39, %v1097, -1000000.0
    %v1101 = vsel %vm293, %v1100, -inf
    %1102 = vmax.xlane.f32.xlu0 %v1101
    %v1103 = vpop.xlane.xlu0 %1102
    %v1104 = vsub.f32 %v1100, %v1103
    %v1105 = vmul.f32 %v1104, 1.442695
    %v1106 = vpow.pop %v1105
    %v1107 = vsel %vm293, %v1106, 0.0
    %1108 = vadd.xlane.f32.xlu0 %v1107
    %v1109 = vpop.xlane.xlu0 %1108
    %v1110 = vrcp.pop %v1109
    %v1111 = vmul.f32 %v1106, %v1110
    %v1113 = vsel %vm293, %v1111, 0
    %1115 = vmatprep.subr.mxu0 0.0
    %1116 = vmatpush1.msra.mxu0 %v860
    %1117 = vmatprep.subr.mxu0 0.0
    %1118 = vmatpush1.msra.mxu0 0.0
    %1119 = vmatprep.subr.mxu0 0.0
    %1120 = vmatpush1.msra.mxu0 0.0
    %1121 = vmatprep.subr.mxu0 0.0
    %1122 = vmatpush1.msra.mxu0 0.0
    %1123 = vmatprep.subr.mxu0 0.0
    %1124 = vmatpush1.msra.mxu0 0.0
    %1125 = vmatprep.subr.mxu0 0.0
    %1126 = vmatpush1.msra.mxu0 0.0
    %1127 = vmatprep.subr.mxu0 0.0
    %1128 = vmatpush1.msra.mxu0 0.0
    %1129 = vmatprep.subr.mxu0 0.0
    %1130 = vmatpush1.msra.mxu0 0.0
    %1131 = vmatprep.subr.mxu0 0.0
    %1132 = vmatpush1.msra.mxu0 0.0
    %1133 = vmatprep.subr.mxu0 0.0
    %1134 = vmatpush1.msra.mxu0 0.0
    %1135 = vmatprep.subr.mxu0 0.0
    %1136 = vmatpush1.msra.mxu0 0.0
    %1137 = vmatprep.subr.mxu0 0.0
    %1138 = vmatpush1.msra.mxu0 0.0
    %1139 = vmatprep.subr.mxu0 0.0
    %1140 = vmatpush1.msra.mxu0 0.0
    %1141 = vmatprep.subr.mxu0 0.0
    %1142 = vmatpush1.msra.mxu0 0.0
    %1143 = vmatprep.subr.mxu0 0.0
    %1144 = vmatpush1.msra.mxu0 0.0
    %1145 = vmatprep.subr.mxu0 0.0
    %1146 = vmatpush1.msra.mxu0 0.0
    %1147 = vmatprep.subr.mxu0 0.0
    %1148 = vmatpush1.msra.mxu0 0.0
    %1149 = vmatprep.subr.mxu0 0.0
    %1150 = vmatpush1.msra.mxu0 0.0
    %1151 = vmatprep.subr.mxu0 0.0
    %1152 = vmatpush1.msra.mxu0 0.0
    %1153 = vmatprep.subr.mxu0 0.0
    %1154 = vmatpush1.msra.mxu0 0.0
    %1155 = vmatprep.subr.mxu0 0.0
    %1156 = vmatpush1.msra.mxu0 0.0
    %1157 = vmatprep.subr.mxu0 0.0
    %1158 = vmatpush1.msra.mxu0 0.0
    %1159 = vmatprep.subr.mxu0 0.0
    %1160 = vmatpush1.msra.mxu0 0.0
    %1161 = vmatprep.subr.mxu0 0.0
    %1162 = vmatpush1.msra.mxu0 0.0
    %1163 = vmatprep.subr.mxu0 0.0
    %1164 = vmatpush1.msra.mxu0 0.0
    %1165 = vmatprep.subr.mxu0 0.0
    %1166 = vmatpush1.msra.mxu0 0.0
    %1167 = vmatprep.subr.mxu0 0.0
    %1168 = vmatpush1.msra.mxu0 0.0
    %1169 = vmatprep.subr.mxu0 0.0
    %1170 = vmatpush1.msra.mxu0 0.0
    %1171 = vmatprep.subr.mxu0 0.0
    %1172 = vmatpush1.msra.mxu0 0.0
    %1173 = vmatprep.subr.mxu0 0.0
    %1174 = vmatpush1.msra.mxu0 0.0
    %1175 = vmatprep.subr.mxu0 0.0
    %1176 = vmatpush1.msra.mxu0 0.0
    %1177 = vmatprep.subr.mxu0 0.0
    %1178 = vmatpush1.msra.mxu0 0.0
    %1179 = vmatprep.mubr.f32.mxu0 0.0
    %1180 = vmatmul.mubr.f32.gmra.mrb[0].mxu0 %v1113
    %v1181 = vpop.f32.mrb[0].mxu0
    %v1182 = vadd.f32 0.0, %v1181
    %v1183 = vpop.f32.mrb[0].mxu0
    %1184 = vdwg.mxu0
    %v1186 = vsel %vm293, %v1021, 0
    %v1189 = vsel %vm293, %v1182, 0
    %v1192 = vsel %vm293, %v632, 0
    %v1195 = vsel %vm293, %v633, 0
    %v1198 = vsel %vm293, %v634, 0
    %v1201 = vsel %vm293, %v635, 0
    %1203 = vmatprep.subr.mxu0 0.0
    %1204 = vmatpush1.xpose.msra.mxu0 %v1192
    %1205 = vmatprep.subr.mxu0 0.0
    %1206 = vmatpush1.xpose.msra.mxu0 %v1195
    %1207 = vmatprep.subr.mxu0 0.0
    %1208 = vmatpush1.xpose.msra.mxu0 %v1198
    %1209 = vmatprep.subr.mxu0 0.0
    %1210 = vmatpush1.xpose.msra.mxu0 %v1201
    %1211 = vmatprep.subr.mxu0 0.0
    %1212 = vmatpush1.xpose.msra.mxu0 0.0
    %1213 = vmatprep.subr.mxu0 0.0
    %1214 = vmatpush1.xpose.msra.mxu0 0.0
    %1215 = vmatprep.subr.mxu0 0.0
    %1216 = vmatpush1.xpose.msra.mxu0 0.0
    %1217 = vmatprep.subr.mxu0 0.0
    %1218 = vmatpush1.xpose.msra.mxu0 0.0
    %1219 = vmatprep.subr.mxu0 0.0
    %1220 = vmatpush1.xpose.msra.mxu0 0.0
    %1221 = vmatprep.subr.mxu0 0.0
    %1222 = vmatpush1.xpose.msra.mxu0 0.0
    %1223 = vmatprep.subr.mxu0 0.0
    %1224 = vmatpush1.xpose.msra.mxu0 0.0
    %1225 = vmatprep.subr.mxu0 0.0
    %1226 = vmatpush1.xpose.msra.mxu0 0.0
    %1227 = vmatprep.subr.mxu0 0.0
    %1228 = vmatpush1.xpose.msra.mxu0 0.0
    %1229 = vmatprep.subr.mxu0 0.0
    %1230 = vmatpush1.xpose.msra.mxu0 0.0
    %1231 = vmatprep.subr.mxu0 0.0
    %1232 = vmatpush1.xpose.msra.mxu0 0.0
    %1233 = vmatprep.subr.mxu0 0.0
    %1234 = vmatpush1.xpose.msra.mxu0 0.0
    %1235 = vmatprep.subr.mxu0 0.0
    %1236 = vmatpush1.xpose.msra.mxu0 0.0
    %1237 = vmatprep.subr.mxu0 0.0
    %1238 = vmatpush1.xpose.msra.mxu0 0.0
    %1239 = vmatprep.subr.mxu0 0.0
    %1240 = vmatpush1.xpose.msra.mxu0 0.0
    %1241 = vmatprep.subr.mxu0 0.0
    %1242 = vmatpush1.xpose.msra.mxu0 0.0
    %1243 = vmatprep.subr.mxu0 0.0
    %1244 = vmatpush1.xpose.msra.mxu0 0.0
    %1245 = vmatprep.subr.mxu0 0.0
    %1246 = vmatpush1.xpose.msra.mxu0 0.0
    %1247 = vmatprep.subr.mxu0 0.0
    %1248 = vmatpush1.xpose.msra.mxu0 0.0
    %1249 = vmatprep.subr.mxu0 0.0
    %1250 = vmatpush1.xpose.msra.mxu0 0.0
    %1251 = vmatprep.subr.mxu0 0.0
    %1252 = vmatpush1.xpose.msra.mxu0 0.0
    %1253 = vmatprep.subr.mxu0 0.0
    %1254 = vmatpush1.xpose.msra.mxu0 0.0
    %1255 = vmatprep.subr.mxu0 0.0
    %1256 = vmatpush1.xpose.msra.mxu0 0.0
    %1257 = vmatprep.subr.mxu0 0.0
    %1258 = vmatpush1.xpose.msra.mxu0 0.0
    %1259 = vmatprep.subr.mxu0 0.0
    %1260 = vmatpush1.xpose.msra.mxu0 0.0
    %1261 = vmatprep.subr.mxu0 0.0
    %1262 = vmatpush1.xpose.msra.mxu0 0.0
    %1263 = vmatprep.subr.mxu0 0.0
    %1264 = vmatpush1.xpose.msra.mxu0 0.0
    %1265 = vmatprep.subr.mxu0 0.0
    %1266 = vmatpush1.xpose.msra.mxu0 0.0
    %1267 = vmatprep.mubr.f32.mxu0 0.0
    %1268 = vmatmul.mubr.f32.gmra.mrb[0].mxu0 %v1186
    %v1269 = vpop.f32.mrb[0].mxu0
    %v1270 = vadd.f32 0.0, %v1269
    %v1271 = vpop.f32.mrb[0].mxu0
    %1272 = vmatprep.mubr.f32.mxu0 0.0
    %1273 = vmatmul.mubr.f32.gmra.mrb[0].mxu0 %v1189
    %v1274 = vpop.f32.mrb[0].mxu0
    %v1275 = vadd.f32 0.0, %v1274
    %v1276 = vpop.f32.mrb[0].mxu0
    %1277 = vdwg.mxu0
    %v1279 = vsel %vm293, %v452, 0
    %v1282 = vsel %vm293, %v613, 0
    %v1285 = vsel %vm293, %v55, 0
    %v1288 = vsel %vm293, %v56, 0
    %v1291 = vsel %vm293, %v57, 0
    %v1294 = vsel %vm293, %v58, 0
    %1296 = vmatprep.subr.mxu0 0.0
    %1297 = vmatpush1.xpose.msra.mxu0 %v1285
    %1298 = vmatprep.subr.mxu0 0.0
    %1299 = vmatpush1.xpose.msra.mxu0 %v1288
    %1300 = vmatprep.subr.mxu0 0.0
    %1301 = vmatpush1.xpose.msra.mxu0 %v1291
    %1302 = vmatprep.subr.mxu0 0.0
    %1303 = vmatpush1.xpose.msra.mxu0 %v1294
    %1304 = vmatprep.subr.mxu0 0.0
    %1305 = vmatpush1.xpose.msra.mxu0 0.0
    %1306 = vmatprep.subr.mxu0 0.0
    %1307 = vmatpush1.xpose.msra.mxu0 0.0
    %1308 = vmatprep.subr.mxu0 0.0
    %1309 = vmatpush1.xpose.msra.mxu0 0.0
    %1310 = vmatprep.subr.mxu0 0.0
    %1311 = vmatpush1.xpose.msra.mxu0 0.0
    %1312 = vmatprep.subr.mxu0 0.0
    %1313 = vmatpush1.xpose.msra.mxu0 0.0
    %1314 = vmatprep.subr.mxu0 0.0
    %1315 = vmatpush1.xpose.msra.mxu0 0.0
    %1316 = vmatprep.subr.mxu0 0.0
    %1317 = vmatpush1.xpose.msra.mxu0 0.0
    %1318 = vmatprep.subr.mxu0 0.0
    %1319 = vmatpush1.xpose.msra.mxu0 0.0
    %1320 = vmatprep.subr.mxu0 0.0
    %1321 = vmatpush1.xpose.msra.mxu0 0.0
    %1322 = vmatprep.subr.mxu0 0.0
    %1323 = vmatpush1.xpose.msra.mxu0 0.0
    %1324 = vmatprep.subr.mxu0 0.0
    %1325 = vmatpush1.xpose.msra.mxu0 0.0
    %1326 = vmatprep.subr.mxu0 0.0
    %1327 = vmatpush1.xpose.msra.mxu0 0.0
    %1328 = vmatprep.subr.mxu0 0.0
    %1329 = vmatpush1.xpose.msra.mxu0 0.0
    %1330 = vmatprep.subr.mxu0 0.0
    %1331 = vmatpush1.xpose.msra.mxu0 0.0
    %1332 = vmatprep.subr.mxu0 0.0
    %1333 = vmatpush1.xpose.msra.mxu0 0.0
    %1334 = vmatprep.subr.mxu0 0.0
    %1335 = vmatpush1.xpose.msra.mxu0 0.0
    %1336 = vmatprep.subr.mxu0 0.0
    %1337 = vmatpush1.xpose.msra.mxu0 0.0
    %1338 = vmatprep.subr.mxu0 0.0
    %1339 = vmatpush1.xpose.msra.mxu0 0.0
    %1340 = vmatprep.subr.mxu0 0.0
    %1341 = vmatpush1.xpose.msra.mxu0 0.0
    %1342 = vmatprep.subr.mxu0 0.0
    %1343 = vmatpush1.xpose.msra.mxu0 0.0
    %1344 = vmatprep.subr.mxu0 0.0
    %1345 = vmatpush1.xpose.msra.mxu0 0.0
    %1346 = vmatprep.subr.mxu0 0.0
    %1347 = vmatpush1.xpose.msra.mxu0 0.0
    %1348 = vmatprep.subr.mxu0 0.0
    %1349 = vmatpush1.xpose.msra.mxu0 0.0
    %1350 = vmatprep.subr.mxu0 0.0
    %1351 = vmatpush1.xpose.msra.mxu0 0.0
    %1352 = vmatprep.subr.mxu0 0.0
    %1353 = vmatpush1.xpose.msra.mxu0 0.0
    %1354 = vmatprep.subr.mxu0 0.0
    %1355 = vmatpush1.xpose.msra.mxu0 0.0
    %1356 = vmatprep.subr.mxu0 0.0
    %1357 = vmatpush1.xpose.msra.mxu0 0.0
    %1358 = vmatprep.subr.mxu0 0.0
    %1359 = vmatpush1.xpose.msra.mxu0 0.0
    %1360 = vmatprep.mubr.f32.mxu0 0.0
    %1361 = vmatmul.mubr.f32.gmra.mrb[0].mxu0 %v1279
    %v1362 = vpop.f32.mrb[0].mxu0
    %v1363 = vadd.f32 %v1270, %v1362
    %v1364 = vpop.f32.mrb[0].mxu0
    %1365 = vmatprep.mubr.f32.mxu0 0.0
    %1366 = vmatmul.mubr.f32.gmra.mrb[0].mxu0 %v1282
    %v1367 = vpop.f32.mrb[0].mxu0
    %v1368 = vadd.f32 %v1275, %v1367
    %v1369 = vpop.f32.mrb[0].mxu0
    %1370 = vdwg.mxu0
    %s1371 = scalar_lea.vmem %s2, 64
    %v1372 = vld [vmem:[%s1371] sm:$0xff]
    %v1373 = vld [vmem:[%s1371 + $0x8] sm:$0xff]
    %v1374 = vld [vmem:[%s1371 + $0x10] sm:$0xff]
    %v1375 = vld [vmem:[%s1371 + $0x18] sm:$0xff]
    %s1376 = scalar_lea.vmem %s2, 192
    %v1377 = vld [vmem:[%s1376] sm:$0xff]
    %v1378 = vld [vmem:[%s1376 + $0x8] sm:$0xff]
    %v1379 = vld [vmem:[%s1376 + $0x10] sm:$0xff]
    %v1380 = vld [vmem:[%s1376 + $0x18] sm:$0xff]
    %s1381 = scalar_lea.vmem %s2, 320
    %v1382 = vld [vmem:[%s1381] sm:$0xff]
    %v1383 = vld [vmem:[%s1381 + $0x8] sm:$0xff]
    %v1384 = vld [vmem:[%s1381 + $0x10] sm:$0xff]
    %v1385 = vld [vmem:[%s1381 + $0x18] sm:$0xff]
    %s1386 = scalar_lea.vmem %s2, 448
    %v1387 = vld [vmem:[%s1386] sm:$0xff]
    %v1388 = vld [vmem:[%s1386 + $0x8] sm:$0xff]
    %v1389 = vld [vmem:[%s1386 + $0x10] sm:$0xff]
    %v1390 = vld [vmem:[%s1386 + $0x18] sm:$0xff]
    %1391 = vmatprep.subr.mxu0 0.0
    %1392 = vmatpush1.msra.mxu0 %v1372
    %1393 = vmatprep.subr.mxu0 0.0
    %1394 = vmatpush1.msra.mxu0 %v1373
    %1395 = vmatprep.subr.mxu0 0.0
    %1396 = vmatpush1.msra.mxu0 %v1374
    %1397 = vmatprep.subr.mxu0 0.0
    %1398 = vmatpush1.msra.mxu0 %v1375
    %1399 = vmatprep.subr.mxu0 0.0
    %1400 = vmatpush1.msra.mxu0 0.0
    %1401 = vmatprep.subr.mxu0 0.0
    %1402 = vmatpush1.msra.mxu0 0.0
    %1403 = vmatprep.subr.mxu0 0.0
    %1404 = vmatpush1.msra.mxu0 0.0
    %1405 = vmatprep.subr.mxu0 0.0
    %1406 = vmatpush1.msra.mxu0 0.0
    %1407 = vmatprep.subr.mxu0 0.0
    %1408 = vmatpush1.msra.mxu0 0.0
    %1409 = vmatprep.subr.mxu0 0.0
    %1410 = vmatpush1.msra.mxu0 0.0
    %1411 = vmatprep.subr.mxu0 0.0
    %1412 = vmatpush1.msra.mxu0 0.0
    %1413 = vmatprep.subr.mxu0 0.0
    %1414 = vmatpush1.msra.mxu0 0.0
    %1415 = vmatprep.subr.mxu0 0.0
    %1416 = vmatpush1.msra.mxu0 0.0
    %1417 = vmatprep.subr.mxu0 0.0
    %1418 = vmatpush1.msra.mxu0 0.0
    %1419 = vmatprep.subr.mxu0 0.0
    %1420 = vmatpush1.msra.mxu0 0.0
    %1421 = vmatprep.subr.mxu0 0.0
    %1422 = vmatpush1.msra.mxu0 0.0
    %1423 = vmatprep.subr.mxu0 0.0
    %1424 = vmatpush1.msra.mxu0 0.0
    %1425 = vmatprep.subr.mxu0 0.0
    %1426 = vmatpush1.msra.mxu0 0.0
    %1427 = vmatprep.subr.mxu0 0.0
    %1428 = vmatpush1.msra.mxu0 0.0
    %1429 = vmatprep.subr.mxu0 0.0
    %1430 = vmatpush1.msra.mxu0 0.0
    %1431 = vmatprep.subr.mxu0 0.0
    %1432 = vmatpush1.msra.mxu0 0.0
    %1433 = vmatprep.subr.mxu0 0.0
    %1434 = vmatpush1.msra.mxu0 0.0
    %1435 = vmatprep.subr.mxu0 0.0
    %1436 = vmatpush1.msra.mxu0 0.0
    %1437 = vmatprep.subr.mxu0 0.0
    %1438 = vmatpush1.msra.mxu0 0.0
    %1439 = vmatprep.subr.mxu0 0.0
    %1440 = vmatpush1.msra.mxu0 0.0
    %1441 = vmatprep.subr.mxu0 0.0
    %1442 = vmatpush1.msra.mxu0 0.0
    %1443 = vmatprep.subr.mxu0 0.0
    %1444 = vmatpush1.msra.mxu0 0.0
    %1445 = vmatprep.subr.mxu0 0.0
    %1446 = vmatpush1.msra.mxu0 0.0
    %1447 = vmatprep.subr.mxu0 0.0
    %1448 = vmatpush1.msra.mxu0 0.0
    %1449 = vmatprep.subr.mxu0 0.0
    %1450 = vmatpush1.msra.mxu0 0.0
    %1451 = vmatprep.subr.mxu0 0.0
    %1452 = vmatpush1.msra.mxu0 0.0
    %1453 = vmatprep.subr.mxu0 0.0
    %1454 = vmatpush1.msra.mxu0 0.0
    %1455 = vmatprep.mubr.f32.mxu0 0.0
    %1456 = vmatmul.mubr.f32.gmra.mrb[0].mxu0 %v61
    %v1457 = vpop.f32.mrb[0].mxu0
    %v1458 = vadd.f32 0.0, %v1457
    %v1459 = vpop.f32.mrb[0].mxu0
    %1460 = vmatprep.mubr.f32.mxu0 0.0
    %1461 = vmatmul.mubr.f32.gmra.mrb[0].mxu0 %v64
    %v1462 = vpop.f32.mrb[0].mxu0
    %v1463 = vadd.f32 0.0, %v1462
    %v1464 = vpop.f32.mrb[0].mxu0
    %1465 = vdwg.mxu0
    %v1466 = vmul.f32 %v1458, 0.35355338
    %v1467 = vmul.f32 %v1463, 0.35355338
    %1468 = vmatprep.subr.mxu0 0.0
    %1469 = vmatpush1.msra.mxu0 %v1377
    %1470 = vmatprep.subr.mxu0 0.0
    %1471 = vmatpush1.msra.mxu0 %v1378
    %1472 = vmatprep.subr.mxu0 0.0
    %1473 = vmatpush1.msra.mxu0 %v1379
    %1474 = vmatprep.subr.mxu0 0.0
    %1475 = vmatpush1.msra.mxu0 %v1380
    %1476 = vmatprep.subr.mxu0 0.0
    %1477 = vmatpush1.msra.mxu0 0.0
    %1478 = vmatprep.subr.mxu0 0.0
    %1479 = vmatpush1.msra.mxu0 0.0
    %1480 = vmatprep.subr.mxu0 0.0
    %1481 = vmatpush1.msra.mxu0 0.0
    %1482 = vmatprep.subr.mxu0 0.0
    %1483 = vmatpush1.msra.mxu0 0.0
    %1484 = vmatprep.subr.mxu0 0.0
    %1485 = vmatpush1.msra.mxu0 0.0
    %1486 = vmatprep.subr.mxu0 0.0
    %1487 = vmatpush1.msra.mxu0 0.0
    %1488 = vmatprep.subr.mxu0 0.0
    %1489 = vmatpush1.msra.mxu0 0.0
    %1490 = vmatprep.subr.mxu0 0.0
    %1491 = vmatpush1.msra.mxu0 0.0
    %1492 = vmatprep.subr.mxu0 0.0
    %1493 = vmatpush1.msra.mxu0 0.0
    %1494 = vmatprep.subr.mxu0 0.0
    %1495 = vmatpush1.msra.mxu0 0.0
    %1496 = vmatprep.subr.mxu0 0.0
    %1497 = vmatpush1.msra.mxu0 0.0
    %1498 = vmatprep.subr.mxu0 0.0
    %1499 = vmatpush1.msra.mxu0 0.0
    %1500 = vmatprep.subr.mxu0 0.0
    %1501 = vmatpush1.msra.mxu0 0.0
    %1502 = vmatprep.subr.mxu0 0.0
    %1503 = vmatpush1.msra.mxu0 0.0
    %1504 = vmatprep.subr.mxu0 0.0
    %1505 = vmatpush1.msra.mxu0 0.0
    %1506 = vmatprep.subr.mxu0 0.0
    %1507 = vmatpush1.msra.mxu0 0.0
    %1508 = vmatprep.subr.mxu0 0.0
    %1509 = vmatpush1.msra.mxu0 0.0
    %1510 = vmatprep.subr.mxu0 0.0
    %1511 = vmatpush1.msra.mxu0 0.0
    %1512 = vmatprep.subr.mxu0 0.0
    %1513 = vmatpush1.msra.mxu0 0.0
    %1514 = vmatprep.subr.mxu0 0.0
    %1515 = vmatpush1.msra.mxu0 0.0
    %1516 = vmatprep.subr.mxu0 0.0
    %1517 = vmatpush1.msra.mxu0 0.0
    %1518 = vmatprep.subr.mxu0 0.0
    %1519 = vmatpush1.msra.mxu0 0.0
    %1520 = vmatprep.subr.mxu0 0.0
    %1521 = vmatpush1.msra.mxu0 0.0
    %1522 = vmatprep.subr.mxu0 0.0
    %1523 = vmatpush1.msra.mxu0 0.0
    %1524 = vmatprep.subr.mxu0 0.0
    %1525 = vmatpush1.msra.mxu0 0.0
    %1526 = vmatprep.subr.mxu0 0.0
    %1527 = vmatpush1.msra.mxu0 0.0
    %1528 = vmatprep.subr.mxu0 0.0
    %1529 = vmatpush1.msra.mxu0 0.0
    %1530 = vmatprep.subr.mxu0 0.0
    %1531 = vmatpush1.msra.mxu0 0.0
    %1532 = vmatprep.mubr.f32.mxu0 0.0
    %1533 = vmatmul.mubr.f32.gmra.mrb[0].mxu0 %v61
    %v1534 = vpop.f32.mrb[0].mxu0
    %v1535 = vadd.f32 0.0, %v1534
    %v1536 = vpop.f32.mrb[0].mxu0
    %1537 = vmatprep.mubr.f32.mxu0 0.0
    %1538 = vmatmul.mubr.f32.gmra.mrb[0].mxu0 %v64
    %v1539 = vpop.f32.mrb[0].mxu0
    %v1540 = vadd.f32 0.0, %v1539
    %v1541 = vpop.f32.mrb[0].mxu0
    %1542 = vdwg.mxu0
    %1543 = vmatprep.subr.mxu0 0.0
    %1544 = vmatpush1.msra.mxu0 %v1382
    %1545 = vmatprep.subr.mxu0 0.0
    %1546 = vmatpush1.msra.mxu0 %v1383
    %1547 = vmatprep.subr.mxu0 0.0
    %1548 = vmatpush1.msra.mxu0 %v1384
    %1549 = vmatprep.subr.mxu0 0.0
    %1550 = vmatpush1.msra.mxu0 %v1385
    %1551 = vmatprep.subr.mxu0 0.0
    %1552 = vmatpush1.msra.mxu0 0.0
    %1553 = vmatprep.subr.mxu0 0.0
    %1554 = vmatpush1.msra.mxu0 0.0
    %1555 = vmatprep.subr.mxu0 0.0
    %1556 = vmatpush1.msra.mxu0 0.0
    %1557 = vmatprep.subr.mxu0 0.0
    %1558 = vmatpush1.msra.mxu0 0.0
    %1559 = vmatprep.subr.mxu0 0.0
    %1560 = vmatpush1.msra.mxu0 0.0
    %1561 = vmatprep.subr.mxu0 0.0
    %1562 = vmatpush1.msra.mxu0 0.0
    %1563 = vmatprep.subr.mxu0 0.0
    %1564 = vmatpush1.msra.mxu0 0.0
    %1565 = vmatprep.subr.mxu0 0.0
    %1566 = vmatpush1.msra.mxu0 0.0
    %1567 = vmatprep.subr.mxu0 0.0
    %1568 = vmatpush1.msra.mxu0 0.0
    %1569 = vmatprep.subr.mxu0 0.0
    %1570 = vmatpush1.msra.mxu0 0.0
    %1571 = vmatprep.subr.mxu0 0.0
    %1572 = vmatpush1.msra.mxu0 0.0
    %1573 = vmatprep.subr.mxu0 0.0
    %1574 = vmatpush1.msra.mxu0 0.0
    %1575 = vmatprep.subr.mxu0 0.0
    %1576 = vmatpush1.msra.mxu0 0.0
    %1577 = vmatprep.subr.mxu0 0.0
    %1578 = vmatpush1.msra.mxu0 0.0
    %1579 = vmatprep.subr.mxu0 0.0
    %1580 = vmatpush1.msra.mxu0 0.0
    %1581 = vmatprep.subr.mxu0 0.0
    %1582 = vmatpush1.msra.mxu0 0.0
    %1583 = vmatprep.subr.mxu0 0.0
    %1584 = vmatpush1.msra.mxu0 0.0
    %1585 = vmatprep.subr.mxu0 0.0
    %1586 = vmatpush1.msra.mxu0 0.0
    %1587 = vmatprep.subr.mxu0 0.0
    %1588 = vmatpush1.msra.mxu0 0.0
    %1589 = vmatprep.subr.mxu0 0.0
    %1590 = vmatpush1.msra.mxu0 0.0
    %1591 = vmatprep.subr.mxu0 0.0
    %1592 = vmatpush1.msra.mxu0 0.0
    %1593 = vmatprep.subr.mxu0 0.0
    %1594 = vmatpush1.msra.mxu0 0.0
    %1595 = vmatprep.subr.mxu0 0.0
    %1596 = vmatpush1.msra.mxu0 0.0
    %1597 = vmatprep.subr.mxu0 0.0
    %1598 = vmatpush1.msra.mxu0 0.0
    %1599 = vmatprep.subr.mxu0 0.0
    %1600 = vmatpush1.msra.mxu0 0.0
    %1601 = vmatprep.subr.mxu0 0.0
    %1602 = vmatpush1.msra.mxu0 0.0
    %1603 = vmatprep.subr.mxu0 0.0
    %1604 = vmatpush1.msra.mxu0 0.0
    %1605 = vmatprep.subr.mxu0 0.0
    %1606 = vmatpush1.msra.mxu0 0.0
    %1607 = vmatprep.mubr.f32.mxu0 0.0
    %1608 = vmatmul.mubr.f32.gmra.mrb[0].mxu0 %v61
    %v1609 = vpop.f32.mrb[0].mxu0
    %v1610 = vadd.f32 0.0, %v1609
    %v1611 = vpop.f32.mrb[0].mxu0
    %1612 = vmatprep.mubr.f32.mxu0 0.0
    %1613 = vmatmul.mubr.f32.gmra.mrb[0].mxu0 %v64
    %v1614 = vpop.f32.mrb[0].mxu0
    %v1615 = vadd.f32 0.0, %v1614
    %v1616 = vpop.f32.mrb[0].mxu0
    %1617 = vdwg.mxu0
    %v1619 = vsel %vm293, %v1466, 0
    %v1622 = vsel %vm293, %v1535, 0
    %1624 = vmatprep.subr.mxu0 0.0
    %1625 = vmatpush1.xpose.msra.mxu0 %v1622
    %1626 = vmatprep.subr.mxu0 0.0
    %1627 = vmatpush1.xpose.msra.mxu0 0.0
    %1628 = vmatprep.subr.mxu0 0.0
    %1629 = vmatpush1.xpose.msra.mxu0 0.0
    %1630 = vmatprep.subr.mxu0 0.0
    %1631 = vmatpush1.xpose.msra.mxu0 0.0
    %1632 = vmatprep.subr.mxu0 0.0
    %1633 = vmatpush1.xpose.msra.mxu0 0.0
    %1634 = vmatprep.subr.mxu0 0.0
    %1635 = vmatpush1.xpose.msra.mxu0 0.0
    %1636 = vmatprep.subr.mxu0 0.0
    %1637 = vmatpush1.xpose.msra.mxu0 0.0
    %1638 = vmatprep.subr.mxu0 0.0
    %1639 = vmatpush1.xpose.msra.mxu0 0.0
    %1640 = vmatprep.subr.mxu0 0.0
    %1641 = vmatpush1.xpose.msra.mxu0 0.0
    %1642 = vmatprep.subr.mxu0 0.0
    %1643 = vmatpush1.xpose.msra.mxu0 0.0
    %1644 = vmatprep.subr.mxu0 0.0
    %1645 = vmatpush1.xpose.msra.mxu0 0.0
    %1646 = vmatprep.subr.mxu0 0.0
    %1647 = vmatpush1.xpose.msra.mxu0 0.0
    %1648 = vmatprep.subr.mxu0 0.0
    %1649 = vmatpush1.xpose.msra.mxu0 0.0
    %1650 = vmatprep.subr.mxu0 0.0
    %1651 = vmatpush1.xpose.msra.mxu0 0.0
    %1652 = vmatprep.subr.mxu0 0.0
    %1653 = vmatpush1.xpose.msra.mxu0 0.0
    %1654 = vmatprep.subr.mxu0 0.0
    %1655 = vmatpush1.xpose.msra.mxu0 0.0
    %1656 = vmatprep.subr.mxu0 0.0
    %1657 = vmatpush1.xpose.msra.mxu0 0.0
    %1658 = vmatprep.subr.mxu0 0.0
    %1659 = vmatpush1.xpose.msra.mxu0 0.0
    %1660 = vmatprep.subr.mxu0 0.0
    %1661 = vmatpush1.xpose.msra.mxu0 0.0
    %1662 = vmatprep.subr.mxu0 0.0
    %1663 = vmatpush1.xpose.msra.mxu0 0.0
    %1664 = vmatprep.subr.mxu0 0.0
    %1665 = vmatpush1.xpose.msra.mxu0 0.0
    %1666 = vmatprep.subr.mxu0 0.0
    %1667 = vmatpush1.xpose.msra.mxu0 0.0
    %1668 = vmatprep.subr.mxu0 0.0
    %1669 = vmatpush1.xpose.msra.mxu0 0.0
    %1670 = vmatprep.subr.mxu0 0.0
    %1671 = vmatpush1.xpose.msra.mxu0 0.0
    %1672 = vmatprep.subr.mxu0 0.0
    %1673 = vmatpush1.xpose.msra.mxu0 0.0
    %1674 = vmatprep.subr.mxu0 0.0
    %1675 = vmatpush1.xpose.msra.mxu0 0.0
    %1676 = vmatprep.subr.mxu0 0.0
    %1677 = vmatpush1.xpose.msra.mxu0 0.0
    %1678 = vmatprep.subr.mxu0 0.0
    %1679 = vmatpush1.xpose.msra.mxu0 0.0
    %1680 = vmatprep.subr.mxu0 0.0
    %1681 = vmatpush1.xpose.msra.mxu0 0.0
    %1682 = vmatprep.subr.mxu0 0.0
    %1683 = vmatpush1.xpose.msra.mxu0 0.0
    %1684 = vmatprep.subr.mxu0 0.0
    %1685 = vmatpush1.xpose.msra.mxu0 0.0
    %1686 = vmatprep.subr.mxu0 0.0
    %1687 = vmatpush1.xpose.msra.mxu0 0.0
    %1688 = vmatprep.mubr.f32.mxu0 0.0
    %1689 = vmatmul.mubr.f32.gmra.mrb[0].mxu0 %v1619
    %v1690 = vpop.f32.mrb[0].mxu0
    %v1691 = vadd.f32 0.0, %v1690
    %v1692 = vpop.f32.mrb[0].mxu0
    %1693 = vdwg.mxu0
    %v1694 = vsel %vm36, %v1691, -1000000.0
    %v1695 = vsel %vm293, %v1694, -inf
    %1696 = vmax.xlane.f32.xlu0 %v1695
    %v1697 = vpop.xlane.xlu0 %1696
    %v1698 = vsub.f32 %v1694, %v1697
    %v1699 = vmul.f32 %v1698, 1.442695
    %v1700 = vpow.pop %v1699
    %v1701 = vsel %vm293, %v1700, 0.0
    %1702 = vadd.xlane.f32.xlu0 %v1701
    %v1703 = vpop.xlane.xlu0 %1702
    %v1704 = vrcp.pop %v1703
    %v1705 = vmul.f32 %v1700, %v1704
    %v1707 = vsel %vm293, %v1705, 0
    %1709 = vmatprep.subr.mxu0 0.0
    %1710 = vmatpush1.msra.mxu0 %v1610
    %1711 = vmatprep.subr.mxu0 0.0
    %1712 = vmatpush1.msra.mxu0 0.0
    %1713 = vmatprep.subr.mxu0 0.0
    %1714 = vmatpush1.msra.mxu0 0.0
    %1715 = vmatprep.subr.mxu0 0.0
    %1716 = vmatpush1.msra.mxu0 0.0
    %1717 = vmatprep.subr.mxu0 0.0
    %1718 = vmatpush1.msra.mxu0 0.0
    %1719 = vmatprep.subr.mxu0 0.0
    %1720 = vmatpush1.msra.mxu0 0.0
    %1721 = vmatprep.subr.mxu0 0.0
    %1722 = vmatpush1.msra.mxu0 0.0
    %1723 = vmatprep.subr.mxu0 0.0
    %1724 = vmatpush1.msra.mxu0 0.0
    %1725 = vmatprep.subr.mxu0 0.0
    %1726 = vmatpush1.msra.mxu0 0.0
    %1727 = vmatprep.subr.mxu0 0.0
    %1728 = vmatpush1.msra.mxu0 0.0
    %1729 = vmatprep.subr.mxu0 0.0
    %1730 = vmatpush1.msra.mxu0 0.0
    %1731 = vmatprep.subr.mxu0 0.0
    %1732 = vmatpush1.msra.mxu0 0.0
    %1733 = vmatprep.subr.mxu0 0.0
    %1734 = vmatpush1.msra.mxu0 0.0
    %1735 = vmatprep.subr.mxu0 0.0
    %1736 = vmatpush1.msra.mxu0 0.0
    %1737 = vmatprep.subr.mxu0 0.0
    %1738 = vmatpush1.msra.mxu0 0.0
    %1739 = vmatprep.subr.mxu0 0.0
    %1740 = vmatpush1.msra.mxu0 0.0
    %1741 = vmatprep.subr.mxu0 0.0
    %1742 = vmatpush1.msra.mxu0 0.0
    %1743 = vmatprep.subr.mxu0 0.0
    %1744 = vmatpush1.msra.mxu0 0.0
    %1745 = vmatprep.subr.mxu0 0.0
    %1746 = vmatpush1.msra.mxu0 0.0
    %1747 = vmatprep.subr.mxu0 0.0
    %1748 = vmatpush1.msra.mxu0 0.0
    %1749 = vmatprep.subr.mxu0 0.0
    %1750 = vmatpush1.msra.mxu0 0.0
    %1751 = vmatprep.subr.mxu0 0.0
    %1752 = vmatpush1.msra.mxu0 0.0
    %1753 = vmatprep.subr.mxu0 0.0
    %1754 = vmatpush1.msra.mxu0 0.0
    %1755 = vmatprep.subr.mxu0 0.0
    %1756 = vmatpush1.msra.mxu0 0.0
    %1757 = vmatprep.subr.mxu0 0.0
    %1758 = vmatpush1.msra.mxu0 0.0
    %1759 = vmatprep.subr.mxu0 0.0
    %1760 = vmatpush1.msra.mxu0 0.0
    %1761 = vmatprep.subr.mxu0 0.0
    %1762 = vmatpush1.msra.mxu0 0.0
    %1763 = vmatprep.subr.mxu0 0.0
    %1764 = vmatpush1.msra.mxu0 0.0
    %1765 = vmatprep.subr.mxu0 0.0
    %1766 = vmatpush1.msra.mxu0 0.0
    %1767 = vmatprep.subr.mxu0 0.0
    %1768 = vmatpush1.msra.mxu0 0.0
    %1769 = vmatprep.subr.mxu0 0.0
    %1770 = vmatpush1.msra.mxu0 0.0
    %1771 = vmatprep.subr.mxu0 0.0
    %1772 = vmatpush1.msra.mxu0 0.0
    %1773 = vmatprep.mubr.f32.mxu0 0.0
    %1774 = vmatmul.mubr.f32.gmra.mrb[0].mxu0 %v1707
    %v1775 = vpop.f32.mrb[0].mxu0
    %v1776 = vadd.f32 0.0, %v1775
    %v1777 = vpop.f32.mrb[0].mxu0
    %1778 = vdwg.mxu0
    %v1780 = vsel %vm293, %v1467, 0
    %v1783 = vsel %vm293, %v1540, 0
    %1785 = vmatprep.subr.mxu0 0.0
    %1786 = vmatpush1.xpose.msra.mxu0 %v1783
    %1787 = vmatprep.subr.mxu0 0.0
    %1788 = vmatpush1.xpose.msra.mxu0 0.0
    %1789 = vmatprep.subr.mxu0 0.0
    %1790 = vmatpush1.xpose.msra.mxu0 0.0
    %1791 = vmatprep.subr.mxu0 0.0
    %1792 = vmatpush1.xpose.msra.mxu0 0.0
    %1793 = vmatprep.subr.mxu0 0.0
    %1794 = vmatpush1.xpose.msra.mxu0 0.0
    %1795 = vmatprep.subr.mxu0 0.0
    %1796 = vmatpush1.xpose.msra.mxu0 0.0
    %1797 = vmatprep.subr.mxu0 0.0
    %1798 = vmatpush1.xpose.msra.mxu0 0.0
    %1799 = vmatprep.subr.mxu0 0.0
    %1800 = vmatpush1.xpose.msra.mxu0 0.0
    %1801 = vmatprep.subr.mxu0 0.0
    %1802 = vmatpush1.xpose.msra.mxu0 0.0
    %1803 = vmatprep.subr.mxu0 0.0
    %1804 = vmatpush1.xpose.msra.mxu0 0.0
    %1805 = vmatprep.subr.mxu0 0.0
    %1806 = vmatpush1.xpose.msra.mxu0 0.0
    %1807 = vmatprep.subr.mxu0 0.0
    %1808 = vmatpush1.xpose.msra.mxu0 0.0
    %1809 = vmatprep.subr.mxu0 0.0
    %1810 = vmatpush1.xpose.msra.mxu0 0.0
    %1811 = vmatprep.subr.mxu0 0.0
    %1812 = vmatpush1.xpose.msra.mxu0 0.0
    %1813 = vmatprep.subr.mxu0 0.0
    %1814 = vmatpush1.xpose.msra.mxu0 0.0
    %1815 = vmatprep.subr.mxu0 0.0
    %1816 = vmatpush1.xpose.msra.mxu0 0.0
    %1817 = vmatprep.subr.mxu0 0.0
    %1818 = vmatpush1.xpose.msra.mxu0 0.0
    %1819 = vmatprep.subr.mxu0 0.0
    %1820 = vmatpush1.xpose.msra.mxu0 0.0
    %1821 = vmatprep.subr.mxu0 0.0
    %1822 = vmatpush1.xpose.msra.mxu0 0.0
    %1823 = vmatprep.subr.mxu0 0.0
    %1824 = vmatpush1.xpose.msra.mxu0 0.0
    %1825 = vmatprep.subr.mxu0 0.0
    %1826 = vmatpush1.xpose.msra.mxu0 0.0
    %1827 = vmatprep.subr.mxu0 0.0
    %1828 = vmatpush1.xpose.msra.mxu0 0.0
    %1829 = vmatprep.subr.mxu0 0.0
    %1830 = vmatpush1.xpose.msra.mxu0 0.0
    %1831 = vmatprep.subr.mxu0 0.0
    %1832 = vmatpush1.xpose.msra.mxu0 0.0
    %1833 = vmatprep.subr.mxu0 0.0
    %1834 = vmatpush1.xpose.msra.mxu0 0.0
    %1835 = vmatprep.subr.mxu0 0.0
    %1836 = vmatpush1.xpose.msra.mxu0 0.0
    %1837 = vmatprep.subr.mxu0 0.0
    %1838 = vmatpush1.xpose.msra.mxu0 0.0
    %1839 = vmatprep.subr.mxu0 0.0
    %1840 = vmatpush1.xpose.msra.mxu0 0.0
    %1841 = vmatprep.subr.mxu0 0.0
    %1842 = vmatpush1.xpose.msra.mxu0 0.0
    %1843 = vmatprep.subr.mxu0 0.0
    %1844 = vmatpush1.xpose.msra.mxu0 0.0
    %1845 = vmatprep.subr.mxu0 0.0
    %1846 = vmatpush1.xpose.msra.mxu0 0.0
    %1847 = vmatprep.subr.mxu0 0.0
    %1848 = vmatpush1.xpose.msra.mxu0 0.0
    %1849 = vmatprep.mubr.f32.mxu0 0.0
    %1850 = vmatmul.mubr.f32.gmra.mrb[0].mxu0 %v1780
    %v1851 = vpop.f32.mrb[0].mxu0
    %v1852 = vadd.f32 0.0, %v1851
    %v1853 = vpop.f32.mrb[0].mxu0
    %1854 = vdwg.mxu0
    %v1855 = vsel %vm39, %v1852, -1000000.0
    %v1856 = vsel %vm293, %v1855, -inf
    %1857 = vmax.xlane.f32.xlu0 %v1856
    %v1858 = vpop.xlane.xlu0 %1857
    %v1859 = vsub.f32 %v1855, %v1858
    %v1860 = vmul.f32 %v1859, 1.442695
    %v1861 = vpow.pop %v1860
    %v1862 = vsel %vm293, %v1861, 0.0
    %1863 = vadd.xlane.f32.xlu0 %v1862
    %v1864 = vpop.xlane.xlu0 %1863
    %v1865 = vrcp.pop %v1864
    %v1866 = vmul.f32 %v1861, %v1865
    %v1868 = vsel %vm293, %v1866, 0
    %1870 = vmatprep.subr.mxu0 0.0
    %1871 = vmatpush1.msra.mxu0 %v1615
    %1872 = vmatprep.subr.mxu0 0.0
    %1873 = vmatpush1.msra.mxu0 0.0
    %1874 = vmatprep.subr.mxu0 0.0
    %1875 = vmatpush1.msra.mxu0 0.0
    %1876 = vmatprep.subr.mxu0 0.0
    %1877 = vmatpush1.msra.mxu0 0.0
    %1878 = vmatprep.subr.mxu0 0.0
    %1879 = vmatpush1.msra.mxu0 0.0
    %1880 = vmatprep.subr.mxu0 0.0
    %1881 = vmatpush1.msra.mxu0 0.0
    %1882 = vmatprep.subr.mxu0 0.0
    %1883 = vmatpush1.msra.mxu0 0.0
    %1884 = vmatprep.subr.mxu0 0.0
    %1885 = vmatpush1.msra.mxu0 0.0
    %1886 = vmatprep.subr.mxu0 0.0
    %1887 = vmatpush1.msra.mxu0 0.0
    %1888 = vmatprep.subr.mxu0 0.0
    %1889 = vmatpush1.msra.mxu0 0.0
    %1890 = vmatprep.subr.mxu0 0.0
    %1891 = vmatpush1.msra.mxu0 0.0
    %1892 = vmatprep.subr.mxu0 0.0
    %1893 = vmatpush1.msra.mxu0 0.0
    %1894 = vmatprep.subr.mxu0 0.0
    %1895 = vmatpush1.msra.mxu0 0.0
    %1896 = vmatprep.subr.mxu0 0.0
    %1897 = vmatpush1.msra.mxu0 0.0
    %1898 = vmatprep.subr.mxu0 0.0
    %1899 = vmatpush1.msra.mxu0 0.0
    %1900 = vmatprep.subr.mxu0 0.0
    %1901 = vmatpush1.msra.mxu0 0.0
    %1902 = vmatprep.subr.mxu0 0.0
    %1903 = vmatpush1.msra.mxu0 0.0
    %1904 = vmatprep.subr.mxu0 0.0
    %1905 = vmatpush1.msra.mxu0 0.0
    %1906 = vmatprep.subr.mxu0 0.0
    %1907 = vmatpush1.msra.mxu0 0.0
    %1908 = vmatprep.subr.mxu0 0.0
    %1909 = vmatpush1.msra.mxu0 0.0
    %1910 = vmatprep.subr.mxu0 0.0
    %1911 = vmatpush1.msra.mxu0 0.0
    %1912 = vmatprep.subr.mxu0 0.0
    %1913 = vmatpush1.msra.mxu0 0.0
    %1914 = vmatprep.subr.mxu0 0.0
    %1915 = vmatpush1.msra.mxu0 0.0
    %1916 = vmatprep.subr.mxu0 0.0
    %1917 = vmatpush1.msra.mxu0 0.0
    %1918 = vmatprep.subr.mxu0 0.0
    %1919 = vmatpush1.msra.mxu0 0.0
    %1920 = vmatprep.subr.mxu0 0.0
    %1921 = vmatpush1.msra.mxu0 0.0
    %1922 = vmatprep.subr.mxu0 0.0
    %1923 = vmatpush1.msra.mxu0 0.0
    %1924 = vmatprep.subr.mxu0 0.0
    %1925 = vmatpush1.msra.mxu0 0.0
    %1926 = vmatprep.subr.mxu0 0.0
    %1927 = vmatpush1.msra.mxu0 0.0
    %1928 = vmatprep.subr.mxu0 0.0
    %1929 = vmatpush1.msra.mxu0 0.0
    %1930 = vmatprep.subr.mxu0 0.0
    %1931 = vmatpush1.msra.mxu0 0.0
    %1932 = vmatprep.subr.mxu0 0.0
    %1933 = vmatpush1.msra.mxu0 0.0
    %1934 = vmatprep.mubr.f32.mxu0 0.0
    %1935 = vmatmul.mubr.f32.gmra.mrb[0].mxu0 %v1868
    %v1936 = vpop.f32.mrb[0].mxu0
    %v1937 = vadd.f32 0.0, %v1936
    %v1938 = vpop.f32.mrb[0].mxu0
    %1939 = vdwg.mxu0
    %v1941 = vsel %vm293, %v1776, 0
    %v1944 = vsel %vm293, %v1937, 0
    %v1947 = vsel %vm293, %v1387, 0
    %v1950 = vsel %vm293, %v1388, 0
    %v1953 = vsel %vm293, %v1389, 0
    %v1956 = vsel %vm293, %v1390, 0
    %1958 = vmatprep.subr.mxu0 0.0
    %1959 = vmatpush1.xpose.msra.mxu0 %v1947
    %1960 = vmatprep.subr.mxu0 0.0
    %1961 = vmatpush1.xpose.msra.mxu0 %v1950
    %1962 = vmatprep.subr.mxu0 0.0
    %1963 = vmatpush1.xpose.msra.mxu0 %v1953
    %1964 = vmatprep.subr.mxu0 0.0
    %1965 = vmatpush1.xpose.msra.mxu0 %v1956
    %1966 = vmatprep.subr.mxu0 0.0
    %1967 = vmatpush1.xpose.msra.mxu0 0.0
    %1968 = vmatprep.subr.mxu0 0.0
    %1969 = vmatpush1.xpose.msra.mxu0 0.0
    %1970 = vmatprep.subr.mxu0 0.0
    %1971 = vmatpush1.xpose.msra.mxu0 0.0
    %1972 = vmatprep.subr.mxu0 0.0
    %1973 = vmatpush1.xpose.msra.mxu0 0.0
    %1974 = vmatprep.subr.mxu0 0.0
    %1975 = vmatpush1.xpose.msra.mxu0 0.0
    %1976 = vmatprep.subr.mxu0 0.0
    %1977 = vmatpush1.xpose.msra.mxu0 0.0
    %1978 = vmatprep.subr.mxu0 0.0
    %1979 = vmatpush1.xpose.msra.mxu0 0.0
    %1980 = vmatprep.subr.mxu0 0.0
    %1981 = vmatpush1.xpose.msra.mxu0 0.0
    %1982 = vmatprep.subr.mxu0 0.0
    %1983 = vmatpush1.xpose.msra.mxu0 0.0
    %1984 = vmatprep.subr.mxu0 0.0
    %1985 = vmatpush1.xpose.msra.mxu0 0.0
    %1986 = vmatprep.subr.mxu0 0.0
    %1987 = vmatpush1.xpose.msra.mxu0 0.0
    %1988 = vmatprep.subr.mxu0 0.0
    %1989 = vmatpush1.xpose.msra.mxu0 0.0
    %1990 = vmatprep.subr.mxu0 0.0
    %1991 = vmatpush1.xpose.msra.mxu0 0.0
    %1992 = vmatprep.subr.mxu0 0.0
    %1993 = vmatpush1.xpose.msra.mxu0 0.0
    %1994 = vmatprep.subr.mxu0 0.0
    %1995 = vmatpush1.xpose.msra.mxu0 0.0
    %1996 = vmatprep.subr.mxu0 0.0
    %1997 = vmatpush1.xpose.msra.mxu0 0.0
    %1998 = vmatprep.subr.mxu0 0.0
    %1999 = vmatpush1.xpose.msra.mxu0 0.0
    %2000 = vmatprep.subr.mxu0 0.0
    %2001 = vmatpush1.xpose.msra.mxu0 0.0
    %2002 = vmatprep.subr.mxu0 0.0
    %2003 = vmatpush1.xpose.msra.mxu0 0.0
    %2004 = vmatprep.subr.mxu0 0.0
    %2005 = vmatpush1.xpose.msra.mxu0 0.0
    %2006 = vmatprep.subr.mxu0 0.0
    %2007 = vmatpush1.xpose.msra.mxu0 0.0
    %2008 = vmatprep.subr.mxu0 0.0
    %2009 = vmatpush1.xpose.msra.mxu0 0.0
    %2010 = vmatprep.subr.mxu0 0.0
    %2011 = vmatpush1.xpose.msra.mxu0 0.0
    %2012 = vmatprep.subr.mxu0 0.0
    %2013 = vmatpush1.xpose.msra.mxu0 0.0
    %2014 = vmatprep.subr.mxu0 0.0
    %2015 = vmatpush1.xpose.msra.mxu0 0.0
    %2016 = vmatprep.subr.mxu0 0.0
    %2017 = vmatpush1.xpose.msra.mxu0 0.0
    %2018 = vmatprep.subr.mxu0 0.0
    %2019 = vmatpush1.xpose.msra.mxu0 0.0
    %2020 = vmatprep.subr.mxu0 0.0
    %2021 = vmatpush1.xpose.msra.mxu0 0.0
    %2022 = vmatprep.mubr.f32.mxu0 0.0
    %2023 = vmatmul.mubr.f32.gmra.mrb[0].mxu0 %v1941
    %v2024 = vpop.f32.mrb[0].mxu0
    %v2025 = vadd.f32 0.0, %v2024
    %v2026 = vpop.f32.mrb[0].mxu0
    %2027 = vmatprep.mubr.f32.mxu0 0.0
    %2028 = vmatmul.mubr.f32.gmra.mrb[0].mxu0 %v1944
    %v2029 = vpop.f32.mrb[0].mxu0
    %v2030 = vadd.f32 0.0, %v2029
    %v2031 = vpop.f32.mrb[0].mxu0
    %2032 = vdwg.mxu0
    %v2033 = vadd.f32 %v1363, %v2025
    %v2034 = vadd.f32 %v1368, %v2030
    %s2035 = scalar_lea.vmem %s2, 96
    %v2036 = vld [vmem:[%s2035] sm:$0xff]
    %v2037 = vld [vmem:[%s2035 + $0x8] sm:$0xff]
    %v2038 = vld [vmem:[%s2035 + $0x10] sm:$0xff]
    %v2039 = vld [vmem:[%s2035 + $0x18] sm:$0xff]
    %s2040 = scalar_lea.vmem %s2, 224
    %v2041 = vld [vmem:[%s2040] sm:$0xff]
    %v2042 = vld [vmem:[%s2040 + $0x8] sm:$0xff]
    %v2043 = vld [vmem:[%s2040 + $0x10] sm:$0xff]
    %v2044 = vld [vmem:[%s2040 + $0x18] sm:$0xff]
    %s2045 = scalar_lea.vmem %s2, 352
    %v2046 = vld [vmem:[%s2045] sm:$0xff]
    %v2047 = vld [vmem:[%s2045 + $0x8] sm:$0xff]
    %v2048 = vld [vmem:[%s2045 + $0x10] sm:$0xff]
    %v2049 = vld [vmem:[%s2045 + $0x18] sm:$0xff]
    %s2050 = scalar_lea.vmem %s2, 480
    %v2051 = vld [vmem:[%s2050] sm:$0xff]
    %v2052 = vld [vmem:[%s2050 + $0x8] sm:$0xff]
    %v2053 = vld [vmem:[%s2050 + $0x10] sm:$0xff]
    %v2054 = vld [vmem:[%s2050 + $0x18] sm:$0xff]
    %2055 = vmatprep.subr.mxu0 0.0
    %2056 = vmatpush1.msra.mxu0 %v2036
    %2057 = vmatprep.subr.mxu0 0.0
    %2058 = vmatpush1.msra.mxu0 %v2037
    %2059 = vmatprep.subr.mxu0 0.0
    %2060 = vmatpush1.msra.mxu0 %v2038
    %2061 = vmatprep.subr.mxu0 0.0
    %2062 = vmatpush1.msra.mxu0 %v2039
    %2063 = vmatprep.subr.mxu0 0.0
    %2064 = vmatpush1.msra.mxu0 0.0
    %2065 = vmatprep.subr.mxu0 0.0
    %2066 = vmatpush1.msra.mxu0 0.0
    %2067 = vmatprep.subr.mxu0 0.0
    %2068 = vmatpush1.msra.mxu0 0.0
    %2069 = vmatprep.subr.mxu0 0.0
    %2070 = vmatpush1.msra.mxu0 0.0
    %2071 = vmatprep.subr.mxu0 0.0
    %2072 = vmatpush1.msra.mxu0 0.0
    %2073 = vmatprep.subr.mxu0 0.0
    %2074 = vmatpush1.msra.mxu0 0.0
    %2075 = vmatprep.subr.mxu0 0.0
    %2076 = vmatpush1.msra.mxu0 0.0
    %2077 = vmatprep.subr.mxu0 0.0
    %2078 = vmatpush1.msra.mxu0 0.0
    %2079 = vmatprep.subr.mxu0 0.0
    %2080 = vmatpush1.msra.mxu0 0.0
    %2081 = vmatprep.subr.mxu0 0.0
    %2082 = vmatpush1.msra.mxu0 0.0
    %2083 = vmatprep.subr.mxu0 0.0
    %2084 = vmatpush1.msra.mxu0 0.0
    %2085 = vmatprep.subr.mxu0 0.0
    %2086 = vmatpush1.msra.mxu0 0.0
    %2087 = vmatprep.subr.mxu0 0.0
    %2088 = vmatpush1.msra.mxu0 0.0
    %2089 = vmatprep.subr.mxu0 0.0
    %2090 = vmatpush1.msra.mxu0 0.0
    %2091 = vmatprep.subr.mxu0 0.0
    %2092 = vmatpush1.msra.mxu0 0.0
    %2093 = vmatprep.subr.mxu0 0.0
    %2094 = vmatpush1.msra.mxu0 0.0
    %2095 = vmatprep.subr.mxu0 0.0
    %2096 = vmatpush1.msra.mxu0 0.0
    %2097 = vmatprep.subr.mxu0 0.0
    %2098 = vmatpush1.msra.mxu0 0.0
    %2099 = vmatprep.subr.mxu0 0.0
    %2100 = vmatpush1.msra.mxu0 0.0
    %2101 = vmatprep.subr.mxu0 0.0
    %2102 = vmatpush1.msra.mxu0 0.0
    %2103 = vmatprep.subr.mxu0 0.0
    %2104 = vmatpush1.msra.mxu0 0.0
    %2105 = vmatprep.subr.mxu0 0.0
    %2106 = vmatpush1.msra.mxu0 0.0
    %2107 = vmatprep.subr.mxu0 0.0
    %2108 = vmatpush1.msra.mxu0 0.0
    %2109 = vmatprep.subr.mxu0 0.0
    %2110 = vmatpush1.msra.mxu0 0.0
    %2111 = vmatprep.subr.mxu0 0.0
    %2112 = vmatpush1.msra.mxu0 0.0
    %2113 = vmatprep.subr.mxu0 0.0
    %2114 = vmatpush1.msra.mxu0 0.0
    %2115 = vmatprep.subr.mxu0 0.0
    %2116 = vmatpush1.msra.mxu0 0.0
    %2117 = vmatprep.subr.mxu0 0.0
    %2118 = vmatpush1.msra.mxu0 0.0
    %2119 = vmatprep.mubr.f32.mxu0 0.0
    %2120 = vmatmul.mubr.f32.gmra.mrb[0].mxu0 %v61
    %v2121 = vpop.f32.mrb[0].mxu0
    %v2122 = vadd.f32 0.0, %v2121
    %v2123 = vpop.f32.mrb[0].mxu0
    %2124 = vmatprep.mubr.f32.mxu0 0.0
    %2125 = vmatmul.mubr.f32.gmra.mrb[0].mxu0 %v64
    %v2126 = vpop.f32.mrb[0].mxu0
    %v2127 = vadd.f32 0.0, %v2126
    %v2128 = vpop.f32.mrb[0].mxu0
    %2129 = vdwg.mxu0
    %v2130 = vmul.f32 %v2122, 0.35355338
    %v2131 = vmul.f32 %v2127, 0.35355338
    %2132 = vmatprep.subr.mxu0 0.0
    %2133 = vmatpush1.msra.mxu0 %v2041
    %2134 = vmatprep.subr.mxu0 0.0
    %2135 = vmatpush1.msra.mxu0 %v2042
    %2136 = vmatprep.subr.mxu0 0.0
    %2137 = vmatpush1.msra.mxu0 %v2043
    %2138 = vmatprep.subr.mxu0 0.0
    %2139 = vmatpush1.msra.mxu0 %v2044
    %2140 = vmatprep.subr.mxu0 0.0
    %2141 = vmatpush1.msra.mxu0 0.0
    %2142 = vmatprep.subr.mxu0 0.0
    %2143 = vmatpush1.msra.mxu0 0.0
    %2144 = vmatprep.subr.mxu0 0.0
    %2145 = vmatpush1.msra.mxu0 0.0
    %2146 = vmatprep.subr.mxu0 0.0
    %2147 = vmatpush1.msra.mxu0 0.0
    %2148 = vmatprep.subr.mxu0 0.0
    %2149 = vmatpush1.msra.mxu0 0.0
    %2150 = vmatprep.subr.mxu0 0.0
    %2151 = vmatpush1.msra.mxu0 0.0
    %2152 = vmatprep.subr.mxu0 0.0
    %2153 = vmatpush1.msra.mxu0 0.0
    %2154 = vmatprep.subr.mxu0 0.0
    %2155 = vmatpush1.msra.mxu0 0.0
    %2156 = vmatprep.subr.mxu0 0.0
    %2157 = vmatpush1.msra.mxu0 0.0
    %2158 = vmatprep.subr.mxu0 0.0
    %2159 = vmatpush1.msra.mxu0 0.0
    %2160 = vmatprep.subr.mxu0 0.0
    %2161 = vmatpush1.msra.mxu0 0.0
    %2162 = vmatprep.subr.mxu0 0.0
    %2163 = vmatpush1.msra.mxu0 0.0
    %2164 = vmatprep.subr.mxu0 0.0
    %2165 = vmatpush1.msra.mxu0 0.0
    %2166 = vmatprep.subr.mxu0 0.0
    %2167 = vmatpush1.msra.mxu0 0.0
    %2168 = vmatprep.subr.mxu0 0.0
    %2169 = vmatpush1.msra.mxu0 0.0
    %2170 = vmatprep.subr.mxu0 0.0
    %2171 = vmatpush1.msra.mxu0 0.0
    %2172 = vmatprep.subr.mxu0 0.0
    %2173 = vmatpush1.msra.mxu0 0.0
    %2174 = vmatprep.subr.mxu0 0.0
    %2175 = vmatpush1.msra.mxu0 0.0
    %2176 = vmatprep.subr.mxu0 0.0
    %2177 = vmatpush1.msra.mxu0 0.0
    %2178 = vmatprep.subr.mxu0 0.0
    %2179 = vmatpush1.msra.mxu0 0.0
    %2180 = vmatprep.subr.mxu0 0.0
    %2181 = vmatpush1.msra.mxu0 0.0
    %2182 = vmatprep.subr.mxu0 0.0
    %2183 = vmatpush1.msra.mxu0 0.0
    %2184 = vmatprep.subr.mxu0 0.0
    %2185 = vmatpush1.msra.mxu0 0.0
    %2186 = vmatprep.subr.mxu0 0.0
    %2187 = vmatpush1.msra.mxu0 0.0
    %2188 = vmatprep.subr.mxu0 0.0
    %2189 = vmatpush1.msra.mxu0 0.0
    %2190 = vmatprep.subr.mxu0 0.0
    %2191 = vmatpush1.msra.mxu0 0.0
    %2192 = vmatprep.subr.mxu0 0.0
    %2193 = vmatpush1.msra.mxu0 0.0
    %2194 = vmatprep.subr.mxu0 0.0
    %2195 = vmatpush1.msra.mxu0 0.0
    %2196 = vmatprep.mubr.f32.mxu0 0.0
    %2197 = vmatmul.mubr.f32.gmra.mrb[0].mxu0 %v61
    %v2198 = vpop.f32.mrb[0].mxu0
    %v2199 = vadd.f32 0.0, %v2198
    %v2200 = vpop.f32.mrb[0].mxu0
    %2201 = vmatprep.mubr.f32.mxu0 0.0
    %2202 = vmatmul.mubr.f32.gmra.mrb[0].mxu0 %v64
    %v2203 = vpop.f32.mrb[0].mxu0
    %v2204 = vadd.f32 0.0, %v2203
    %v2205 = vpop.f32.mrb[0].mxu0
    %2206 = vdwg.mxu0
    %2207 = vmatprep.subr.mxu0 0.0
    %2208 = vmatpush1.msra.mxu0 %v2046
    %2209 = vmatprep.subr.mxu0 0.0
    %2210 = vmatpush1.msra.mxu0 %v2047
    %2211 = vmatprep.subr.mxu0 0.0
    %2212 = vmatpush1.msra.mxu0 %v2048
    %2213 = vmatprep.subr.mxu0 0.0
    %2214 = vmatpush1.msra.mxu0 %v2049
    %2215 = vmatprep.subr.mxu0 0.0
    %2216 = vmatpush1.msra.mxu0 0.0
    %2217 = vmatprep.subr.mxu0 0.0
    %2218 = vmatpush1.msra.mxu0 0.0
    %2219 = vmatprep.subr.mxu0 0.0
    %2220 = vmatpush1.msra.mxu0 0.0
    %2221 = vmatprep.subr.mxu0 0.0
    %2222 = vmatpush1.msra.mxu0 0.0
    %2223 = vmatprep.subr.mxu0 0.0
    %2224 = vmatpush1.msra.mxu0 0.0
    %2225 = vmatprep.subr.mxu0 0.0
    %2226 = vmatpush1.msra.mxu0 0.0
    %2227 = vmatprep.subr.mxu0 0.0
    %2228 = vmatpush1.msra.mxu0 0.0
    %2229 = vmatprep.subr.mxu0 0.0
    %2230 = vmatpush1.msra.mxu0 0.0
    %2231 = vmatprep.subr.mxu0 0.0
    %2232 = vmatpush1.msra.mxu0 0.0
    %2233 = vmatprep.subr.mxu0 0.0
    %2234 = vmatpush1.msra.mxu0 0.0
    %2235 = vmatprep.subr.mxu0 0.0
    %2236 = vmatpush1.msra.mxu0 0.0
    %2237 = vmatprep.subr.mxu0 0.0
    %2238 = vmatpush1.msra.mxu0 0.0
    %2239 = vmatprep.subr.mxu0 0.0
    %2240 = vmatpush1.msra.mxu0 0.0
    %2241 = vmatprep.subr.mxu0 0.0
    %2242 = vmatpush1.msra.mxu0 0.0
    %2243 = vmatprep.subr.mxu0 0.0
    %2244 = vmatpush1.msra.mxu0 0.0
    %2245 = vmatprep.subr.mxu0 0.0
    %2246 = vmatpush1.msra.mxu0 0.0
    %2247 = vmatprep.subr.mxu0 0.0
    %2248 = vmatpush1.msra.mxu0 0.0
    %2249 = vmatprep.subr.mxu0 0.0
    %2250 = vmatpush1.msra.mxu0 0.0
    %2251 = vmatprep.subr.mxu0 0.0
    %2252 = vmatpush1.msra.mxu0 0.0
    %2253 = vmatprep.subr.mxu0 0.0
    %2254 = vmatpush1.msra.mxu0 0.0
    %2255 = vmatprep.subr.mxu0 0.0
    %2256 = vmatpush1.msra.mxu0 0.0
    %2257 = vmatprep.subr.mxu0 0.0
    %2258 = vmatpush1.msra.mxu0 0.0
    %2259 = vmatprep.subr.mxu0 0.0
    %2260 = vmatpush1.msra.mxu0 0.0
    %2261 = vmatprep.subr.mxu0 0.0
    %2262 = vmatpush1.msra.mxu0 0.0
    %2263 = vmatprep.subr.mxu0 0.0
    %2264 = vmatpush1.msra.mxu0 0.0
    %2265 = vmatprep.subr.mxu0 0.0
    %2266 = vmatpush1.msra.mxu0 0.0
    %2267 = vmatprep.subr.mxu0 0.0
    %2268 = vmatpush1.msra.mxu0 0.0
    %2269 = vmatprep.subr.mxu0 0.0
    %2270 = vmatpush1.msra.mxu0 0.0
    %2271 = vmatprep.mubr.f32.mxu0 0.0
    %2272 = vmatmul.mubr.f32.gmra.mrb[0].mxu0 %v61
    %v2273 = vpop.f32.mrb[0].mxu0
    %v2274 = vadd.f32 0.0, %v2273
    %v2275 = vpop.f32.mrb[0].mxu0
    %2276 = vmatprep.mubr.f32.mxu0 0.0
    %2277 = vmatmul.mubr.f32.gmra.mrb[0].mxu0 %v64
    %v2278 = vpop.f32.mrb[0].mxu0
    %v2279 = vadd.f32 0.0, %v2278
    %v2280 = vpop.f32.mrb[0].mxu0
    %2281 = vdwg.mxu0
    %v2283 = vsel %vm293, %v2130, 0
    %v2286 = vsel %vm293, %v2199, 0
    %2288 = vmatprep.subr.mxu0 0.0
    %2289 = vmatpush1.xpose.msra.mxu0 %v2286
    %2290 = vmatprep.subr.mxu0 0.0
    %2291 = vmatpush1.xpose.msra.mxu0 0.0
    %2292 = vmatprep.subr.mxu0 0.0
    %2293 = vmatpush1.xpose.msra.mxu0 0.0
    %2294 = vmatprep.subr.mxu0 0.0
    %2295 = vmatpush1.xpose.msra.mxu0 0.0
    %2296 = vmatprep.subr.mxu0 0.0
    %2297 = vmatpush1.xpose.msra.mxu0 0.0
    %2298 = vmatprep.subr.mxu0 0.0
    %2299 = vmatpush1.xpose.msra.mxu0 0.0
    %2300 = vmatprep.subr.mxu0 0.0
    %2301 = vmatpush1.xpose.msra.mxu0 0.0
    %2302 = vmatprep.subr.mxu0 0.0
    %2303 = vmatpush1.xpose.msra.mxu0 0.0
    %2304 = vmatprep.subr.mxu0 0.0
    %2305 = vmatpush1.xpose.msra.mxu0 0.0
    %2306 = vmatprep.subr.mxu0 0.0
    %2307 = vmatpush1.xpose.msra.mxu0 0.0
    %2308 = vmatprep.subr.mxu0 0.0
    %2309 = vmatpush1.xpose.msra.mxu0 0.0
    %2310 = vmatprep.subr.mxu0 0.0
    %2311 = vmatpush1.xpose.msra.mxu0 0.0
    %2312 = vmatprep.subr.mxu0 0.0
    %2313 = vmatpush1.xpose.msra.mxu0 0.0
    %2314 = vmatprep.subr.mxu0 0.0
    %2315 = vmatpush1.xpose.msra.mxu0 0.0
    %2316 = vmatprep.subr.mxu0 0.0
    %2317 = vmatpush1.xpose.msra.mxu0 0.0
    %2318 = vmatprep.subr.mxu0 0.0
    %2319 = vmatpush1.xpose.msra.mxu0 0.0
    %2320 = vmatprep.subr.mxu0 0.0
    %2321 = vmatpush1.xpose.msra.mxu0 0.0
    %2322 = vmatprep.subr.mxu0 0.0
    %2323 = vmatpush1.xpose.msra.mxu0 0.0
    %2324 = vmatprep.subr.mxu0 0.0
    %2325 = vmatpush1.xpose.msra.mxu0 0.0
    %2326 = vmatprep.subr.mxu0 0.0
    %2327 = vmatpush1.xpose.msra.mxu0 0.0
    %2328 = vmatprep.subr.mxu0 0.0
    %2329 = vmatpush1.xpose.msra.mxu0 0.0
    %2330 = vmatprep.subr.mxu0 0.0
    %2331 = vmatpush1.xpose.msra.mxu0 0.0
    %2332 = vmatprep.subr.mxu0 0.0
    %2333 = vmatpush1.xpose.msra.mxu0 0.0
    %2334 = vmatprep.subr.mxu0 0.0
    %2335 = vmatpush1.xpose.msra.mxu0 0.0
    %2336 = vmatprep.subr.mxu0 0.0
    %2337 = vmatpush1.xpose.msra.mxu0 0.0
    %2338 = vmatprep.subr.mxu0 0.0
    %2339 = vmatpush1.xpose.msra.mxu0 0.0
    %2340 = vmatprep.subr.mxu0 0.0
    %2341 = vmatpush1.xpose.msra.mxu0 0.0
    %2342 = vmatprep.subr.mxu0 0.0
    %2343 = vmatpush1.xpose.msra.mxu0 0.0
    %2344 = vmatprep.subr.mxu0 0.0
    %2345 = vmatpush1.xpose.msra.mxu0 0.0
    %2346 = vmatprep.subr.mxu0 0.0
    %2347 = vmatpush1.xpose.msra.mxu0 0.0
    %2348 = vmatprep.subr.mxu0 0.0
    %2349 = vmatpush1.xpose.msra.mxu0 0.0
    %2350 = vmatprep.subr.mxu0 0.0
    %2351 = vmatpush1.xpose.msra.mxu0 0.0
    %2352 = vmatprep.mubr.f32.mxu0 0.0
    %2353 = vmatmul.mubr.f32.gmra.mrb[0].mxu0 %v2283
    %v2354 = vpop.f32.mrb[0].mxu0
    %v2355 = vadd.f32 0.0, %v2354
    %v2356 = vpop.f32.mrb[0].mxu0
    %2357 = vdwg.mxu0
    %v2358 = vsel %vm36, %v2355, -1000000.0
    %v2359 = vsel %vm293, %v2358, -inf
    %2360 = vmax.xlane.f32.xlu0 %v2359
    %v2361 = vpop.xlane.xlu0 %2360
    %v2362 = vsub.f32 %v2358, %v2361
    %v2363 = vmul.f32 %v2362, 1.442695
    %v2364 = vpow.pop %v2363
    %v2365 = vsel %vm293, %v2364, 0.0
    %2366 = vadd.xlane.f32.xlu0 %v2365
    %v2367 = vpop.xlane.xlu0 %2366
    %v2368 = vrcp.pop %v2367
    %v2369 = vmul.f32 %v2364, %v2368
    %v2371 = vsel %vm293, %v2369, 0
    %2373 = vmatprep.subr.mxu0 0.0
    %2374 = vmatpush1.msra.mxu0 %v2274
    %2375 = vmatprep.subr.mxu0 0.0
    %2376 = vmatpush1.msra.mxu0 0.0
    %2377 = vmatprep.subr.mxu0 0.0
    %2378 = vmatpush1.msra.mxu0 0.0
    %2379 = vmatprep.subr.mxu0 0.0
    %2380 = vmatpush1.msra.mxu0 0.0
    %2381 = vmatprep.subr.mxu0 0.0
    %2382 = vmatpush1.msra.mxu0 0.0
    %2383 = vmatprep.subr.mxu0 0.0
    %2384 = vmatpush1.msra.mxu0 0.0
    %2385 = vmatprep.subr.mxu0 0.0
    %2386 = vmatpush1.msra.mxu0 0.0
    %2387 = vmatprep.subr.mxu0 0.0
    %2388 = vmatpush1.msra.mxu0 0.0
    %2389 = vmatprep.subr.mxu0 0.0
    %2390 = vmatpush1.msra.mxu0 0.0
    %2391 = vmatprep.subr.mxu0 0.0
    %2392 = vmatpush1.msra.mxu0 0.0
    %2393 = vmatprep.subr.mxu0 0.0
    %2394 = vmatpush1.msra.mxu0 0.0
    %2395 = vmatprep.subr.mxu0 0.0
    %2396 = vmatpush1.msra.mxu0 0.0
    %2397 = vmatprep.subr.mxu0 0.0
    %2398 = vmatpush1.msra.mxu0 0.0
    %2399 = vmatprep.subr.mxu0 0.0
    %2400 = vmatpush1.msra.mxu0 0.0
    %2401 = vmatprep.subr.mxu0 0.0
    %2402 = vmatpush1.msra.mxu0 0.0
    %2403 = vmatprep.subr.mxu0 0.0
    %2404 = vmatpush1.msra.mxu0 0.0
    %2405 = vmatprep.subr.mxu0 0.0
    %2406 = vmatpush1.msra.mxu0 0.0
    %2407 = vmatprep.subr.mxu0 0.0
    %2408 = vmatpush1.msra.mxu0 0.0
    %2409 = vmatprep.subr.mxu0 0.0
    %2410 = vmatpush1.msra.mxu0 0.0
    %2411 = vmatprep.subr.mxu0 0.0
    %2412 = vmatpush1.msra.mxu0 0.0
    %2413 = vmatprep.subr.mxu0 0.0
    %2414 = vmatpush1.msra.mxu0 0.0
    %2415 = vmatprep.subr.mxu0 0.0
    %2416 = vmatpush1.msra.mxu0 0.0
    %2417 = vmatprep.subr.mxu0 0.0
    %2418 = vmatpush1.msra.mxu0 0.0
    %2419 = vmatprep.subr.mxu0 0.0
    %2420 = vmatpush1.msra.mxu0 0.0
    %2421 = vmatprep.subr.mxu0 0.0
    %2422 = vmatpush1.msra.mxu0 0.0
    %2423 = vmatprep.subr.mxu0 0.0
    %2424 = vmatpush1.msra.mxu0 0.0
    %2425 = vmatprep.subr.mxu0 0.0
    %2426 = vmatpush1.msra.mxu0 0.0
    %2427 = vmatprep.subr.mxu0 0.0
    %2428 = vmatpush1.msra.mxu0 0.0
    %2429 = vmatprep.subr.mxu0 0.0
    %2430 = vmatpush1.msra.mxu0 0.0
    %2431 = vmatprep.subr.mxu0 0.0
    %2432 = vmatpush1.msra.mxu0 0.0
    %2433 = vmatprep.subr.mxu0 0.0
    %2434 = vmatpush1.msra.mxu0 0.0
    %2435 = vmatprep.subr.mxu0 0.0
    %2436 = vmatpush1.msra.mxu0 0.0
    %2437 = vmatprep.mubr.f32.mxu0 0.0
    %2438 = vmatmul.mubr.f32.gmra.mrb[0].mxu0 %v2371
    %v2439 = vpop.f32.mrb[0].mxu0
    %v2440 = vadd.f32 0.0, %v2439
    %v2441 = vpop.f32.mrb[0].mxu0
    %2442 = vdwg.mxu0
    %v2444 = vsel %vm293, %v2131, 0
    %v2447 = vsel %vm293, %v2204, 0
    %2449 = vmatprep.subr.mxu0 0.0
    %2450 = vmatpush1.xpose.msra.mxu0 %v2447
    %2451 = vmatprep.subr.mxu0 0.0
    %2452 = vmatpush1.xpose.msra.mxu0 0.0
    %2453 = vmatprep.subr.mxu0 0.0
    %2454 = vmatpush1.xpose.msra.mxu0 0.0
    %2455 = vmatprep.subr.mxu0 0.0
    %2456 = vmatpush1.xpose.msra.mxu0 0.0
    %2457 = vmatprep.subr.mxu0 0.0
    %2458 = vmatpush1.xpose.msra.mxu0 0.0
    %2459 = vmatprep.subr.mxu0 0.0
    %2460 = vmatpush1.xpose.msra.mxu0 0.0
    %2461 = vmatprep.subr.mxu0 0.0
    %2462 = vmatpush1.xpose.msra.mxu0 0.0
    %2463 = vmatprep.subr.mxu0 0.0
    %2464 = vmatpush1.xpose.msra.mxu0 0.0
    %2465 = vmatprep.subr.mxu0 0.0
    %2466 = vmatpush1.xpose.msra.mxu0 0.0
    %2467 = vmatprep.subr.mxu0 0.0
    %2468 = vmatpush1.xpose.msra.mxu0 0.0
    %2469 = vmatprep.subr.mxu0 0.0
    %2470 = vmatpush1.xpose.msra.mxu0 0.0
    %2471 = vmatprep.subr.mxu0 0.0
    %2472 = vmatpush1.xpose.msra.mxu0 0.0
    %2473 = vmatprep.subr.mxu0 0.0
    %2474 = vmatpush1.xpose.msra.mxu0 0.0
    %2475 = vmatprep.subr.mxu0 0.0
    %2476 = vmatpush1.xpose.msra.mxu0 0.0
    %2477 = vmatprep.subr.mxu0 0.0
    %2478 = vmatpush1.xpose.msra.mxu0 0.0
    %2479 = vmatprep.subr.mxu0 0.0
    %2480 = vmatpush1.xpose.msra.mxu0 0.0
    %2481 = vmatprep.subr.mxu0 0.0
    %2482 = vmatpush1.xpose.msra.mxu0 0.0
    %2483 = vmatprep.subr.mxu0 0.0
    %2484 = vmatpush1.xpose.msra.mxu0 0.0
    %2485 = vmatprep.subr.mxu0 0.0
    %2486 = vmatpush1.xpose.msra.mxu0 0.0
    %2487 = vmatprep.subr.mxu0 0.0
    %2488 = vmatpush1.xpose.msra.mxu0 0.0
    %2489 = vmatprep.subr.mxu0 0.0
    %2490 = vmatpush1.xpose.msra.mxu0 0.0
    %2491 = vmatprep.subr.mxu0 0.0
    %2492 = vmatpush1.xpose.msra.mxu0 0.0
    %2493 = vmatprep.subr.mxu0 0.0
    %2494 = vmatpush1.xpose.msra.mxu0 0.0
    %2495 = vmatprep.subr.mxu0 0.0
    %2496 = vmatpush1.xpose.msra.mxu0 0.0
    %2497 = vmatprep.subr.mxu0 0.0
    %2498 = vmatpush1.xpose.msra.mxu0 0.0
    %2499 = vmatprep.subr.mxu0 0.0
    %2500 = vmatpush1.xpose.msra.mxu0 0.0
    %2501 = vmatprep.subr.mxu0 0.0
    %2502 = vmatpush1.xpose.msra.mxu0 0.0
    %2503 = vmatprep.subr.mxu0 0.0
    %2504 = vmatpush1.xpose.msra.mxu0 0.0
    %2505 = vmatprep.subr.mxu0 0.0
    %2506 = vmatpush1.xpose.msra.mxu0 0.0
    %2507 = vmatprep.subr.mxu0 0.0
    %2508 = vmatpush1.xpose.msra.mxu0 0.0
    %2509 = vmatprep.subr.mxu0 0.0
    %2510 = vmatpush1.xpose.msra.mxu0 0.0
    %2511 = vmatprep.subr.mxu0 0.0
    %2512 = vmatpush1.xpose.msra.mxu0 0.0
    %2513 = vmatprep.mubr.f32.mxu0 0.0
    %2514 = vmatmul.mubr.f32.gmra.mrb[0].mxu0 %v2444
    %v2515 = vpop.f32.mrb[0].mxu0
    %v2516 = vadd.f32 0.0, %v2515
    %v2517 = vpop.f32.mrb[0].mxu0
    %2518 = vdwg.mxu0
    %v2519 = vsel %vm39, %v2516, -1000000.0
    %v2520 = vsel %vm293, %v2519, -inf
    %2521 = vmax.xlane.f32.xlu0 %v2520
    %v2522 = vpop.xlane.xlu0 %2521
    %v2523 = vsub.f32 %v2519, %v2522
    %v2524 = vmul.f32 %v2523, 1.442695
    %v2525 = vpow.pop %v2524
    %v2526 = vsel %vm293, %v2525, 0.0
    %2527 = vadd.xlane.f32.xlu0 %v2526
    %v2528 = vpop.xlane.xlu0 %2527
    %v2529 = vrcp.pop %v2528
    %v2530 = vmul.f32 %v2525, %v2529
    %v2532 = vsel %vm293, %v2530, 0
    %2534 = vmatprep.subr.mxu0 0.0
    %2535 = vmatpush1.msra.mxu0 %v2279
    %2536 = vmatprep.subr.mxu0 0.0
    %2537 = vmatpush1.msra.mxu0 0.0
    %2538 = vmatprep.subr.mxu0 0.0
    %2539 = vmatpush1.msra.mxu0 0.0
    %2540 = vmatprep.subr.mxu0 0.0
    %2541 = vmatpush1.msra.mxu0 0.0
    %2542 = vmatprep.subr.mxu0 0.0
    %2543 = vmatpush1.msra.mxu0 0.0
    %2544 = vmatprep.subr.mxu0 0.0
    %2545 = vmatpush1.msra.mxu0 0.0
    %2546 = vmatprep.subr.mxu0 0.0
    %2547 = vmatpush1.msra.mxu0 0.0
    %2548 = vmatprep.subr.mxu0 0.0
    %2549 = vmatpush1.msra.mxu0 0.0
    %2550 = vmatprep.subr.mxu0 0.0
    %2551 = vmatpush1.msra.mxu0 0.0
    %2552 = vmatprep.subr.mxu0 0.0
    %2553 = vmatpush1.msra.mxu0 0.0
    %2554 = vmatprep.subr.mxu0 0.0
    %2555 = vmatpush1.msra.mxu0 0.0
    %2556 = vmatprep.subr.mxu0 0.0
    %2557 = vmatpush1.msra.mxu0 0.0
    %2558 = vmatprep.subr.mxu0 0.0
    %2559 = vmatpush1.msra.mxu0 0.0
    %2560 = vmatprep.subr.mxu0 0.0
    %2561 = vmatpush1.msra.mxu0 0.0
    %2562 = vmatprep.subr.mxu0 0.0
    %2563 = vmatpush1.msra.mxu0 0.0
    %2564 = vmatprep.subr.mxu0 0.0
    %2565 = vmatpush1.msra.mxu0 0.0
    %2566 = vmatprep.subr.mxu0 0.0
    %2567 = vmatpush1.msra.mxu0 0.0
    %2568 = vmatprep.subr.mxu0 0.0
    %2569 = vmatpush1.msra.mxu0 0.0
    %2570 = vmatprep.subr.mxu0 0.0
    %2571 = vmatpush1.msra.mxu0 0.0
    %2572 = vmatprep.subr.mxu0 0.0
    %2573 = vmatpush1.msra.mxu0 0.0
    %2574 = vmatprep.subr.mxu0 0.0
    %2575 = vmatpush1.msra.mxu0 0.0
    %2576 = vmatprep.subr.mxu0 0.0
    %2577 = vmatpush1.msra.mxu0 0.0
    %2578 = vmatprep.subr.mxu0 0.0
    %2579 = vmatpush1.msra.mxu0 0.0
    %2580 = vmatprep.subr.mxu0 0.0
    %2581 = vmatpush1.msra.mxu0 0.0
    %2582 = vmatprep.subr.mxu0 0.0
    %2583 = vmatpush1.msra.mxu0 0.0
    %2584 = vmatprep.subr.mxu0 0.0
    %2585 = vmatpush1.msra.mxu0 0.0
    %2586 = vmatprep.subr.mxu0 0.0
    %2587 = vmatpush1.msra.mxu0 0.0
    %2588 = vmatprep.subr.mxu0 0.0
    %2589 = vmatpush1.msra.mxu0 0.0
    %2590 = vmatprep.subr.mxu0 0.0
    %2591 = vmatpush1.msra.mxu0 0.0
    %2592 = vmatprep.subr.mxu0 0.0
    %2593 = vmatpush1.msra.mxu0 0.0
    %2594 = vmatprep.subr.mxu0 0.0
    %2595 = vmatpush1.msra.mxu0 0.0
    %2596 = vmatprep.subr.mxu0 0.0
    %2597 = vmatpush1.msra.mxu0 0.0
    %2598 = vmatprep.mubr.f32.mxu0 0.0
    %2599 = vmatmul.mubr.f32.gmra.mrb[0].mxu0 %v2532
    %v2600 = vpop.f32.mrb[0].mxu0
    %v2601 = vadd.f32 0.0, %v2600
    %v2602 = vpop.f32.mrb[0].mxu0
    %2603 = vdwg.mxu0
    %v2605 = vsel %vm293, %v2440, 0
    %v2608 = vsel %vm293, %v2601, 0
    %v2611 = vsel %vm293, %v2051, 0
    %v2614 = vsel %vm293, %v2052, 0
    %v2617 = vsel %vm293, %v2053, 0
    %v2620 = vsel %vm293, %v2054, 0
    %2622 = vmatprep.subr.mxu0 0.0
    %2623 = vmatpush1.xpose.msra.mxu0 %v2611
    %2624 = vmatprep.subr.mxu0 0.0
    %2625 = vmatpush1.xpose.msra.mxu0 %v2614
    %2626 = vmatprep.subr.mxu0 0.0
    %2627 = vmatpush1.xpose.msra.mxu0 %v2617
    %2628 = vmatprep.subr.mxu0 0.0
    %2629 = vmatpush1.xpose.msra.mxu0 %v2620
    %2630 = vmatprep.subr.mxu0 0.0
    %2631 = vmatpush1.xpose.msra.mxu0 0.0
    %2632 = vmatprep.subr.mxu0 0.0
    %2633 = vmatpush1.xpose.msra.mxu0 0.0
    %2634 = vmatprep.subr.mxu0 0.0
    %2635 = vmatpush1.xpose.msra.mxu0 0.0
    %2636 = vmatprep.subr.mxu0 0.0
    %2637 = vmatpush1.xpose.msra.mxu0 0.0
    %2638 = vmatprep.subr.mxu0 0.0
    %2639 = vmatpush1.xpose.msra.mxu0 0.0
    %2640 = vmatprep.subr.mxu0 0.0
    %2641 = vmatpush1.xpose.msra.mxu0 0.0
    %2642 = vmatprep.subr.mxu0 0.0
    %2643 = vmatpush1.xpose.msra.mxu0 0.0
    %2644 = vmatprep.subr.mxu0 0.0
    %2645 = vmatpush1.xpose.msra.mxu0 0.0
    %2646 = vmatprep.subr.mxu0 0.0
    %2647 = vmatpush1.xpose.msra.mxu0 0.0
    %2648 = vmatprep.subr.mxu0 0.0
    %2649 = vmatpush1.xpose.msra.mxu0 0.0
    %2650 = vmatprep.subr.mxu0 0.0
    %2651 = vmatpush1.xpose.msra.mxu0 0.0
    %2652 = vmatprep.subr.mxu0 0.0
    %2653 = vmatpush1.xpose.msra.mxu0 0.0
    %2654 = vmatprep.subr.mxu0 0.0
    %2655 = vmatpush1.xpose.msra.mxu0 0.0
    %2656 = vmatprep.subr.mxu0 0.0
    %2657 = vmatpush1.xpose.msra.mxu0 0.0
    %2658 = vmatprep.subr.mxu0 0.0
    %2659 = vmatpush1.xpose.msra.mxu0 0.0
    %2660 = vmatprep.subr.mxu0 0.0
    %2661 = vmatpush1.xpose.msra.mxu0 0.0
    %2662 = vmatprep.subr.mxu0 0.0
    %2663 = vmatpush1.xpose.msra.mxu0 0.0
    %2664 = vmatprep.subr.mxu0 0.0
    %2665 = vmatpush1.xpose.msra.mxu0 0.0
    %2666 = vmatprep.subr.mxu0 0.0
    %2667 = vmatpush1.xpose.msra.mxu0 0.0
    %2668 = vmatprep.subr.mxu0 0.0
    %2669 = vmatpush1.xpose.msra.mxu0 0.0
    %2670 = vmatprep.subr.mxu0 0.0
    %2671 = vmatpush1.xpose.msra.mxu0 0.0
    %2672 = vmatprep.subr.mxu0 0.0
    %2673 = vmatpush1.xpose.msra.mxu0 0.0
    %2674 = vmatprep.subr.mxu0 0.0
    %2675 = vmatpush1.xpose.msra.mxu0 0.0
    %2676 = vmatprep.subr.mxu0 0.0
    %2677 = vmatpush1.xpose.msra.mxu0 0.0
    %2678 = vmatprep.subr.mxu0 0.0
    %2679 = vmatpush1.xpose.msra.mxu0 0.0
    %2680 = vmatprep.subr.mxu0 0.0
    %2681 = vmatpush1.xpose.msra.mxu0 0.0
    %2682 = vmatprep.subr.mxu0 0.0
    %2683 = vmatpush1.xpose.msra.mxu0 0.0
    %2684 = vmatprep.subr.mxu0 0.0
    %2685 = vmatpush1.xpose.msra.mxu0 0.0
    %2686 = vmatprep.mubr.f32.mxu0 0.0
    %2687 = vmatmul.mubr.f32.gmra.mrb[0].mxu0 %v2605
    %v2688 = vpop.f32.mrb[0].mxu0
    %v2689 = vadd.f32 0.0, %v2688
    %v2690 = vpop.f32.mrb[0].mxu0
    %2691 = vmatprep.mubr.f32.mxu0 0.0
    %2692 = vmatmul.mubr.f32.gmra.mrb[0].mxu0 %v2608
    %v2693 = vpop.f32.mrb[0].mxu0
    %v2694 = vadd.f32 0.0, %v2693
    %v2695 = vpop.f32.mrb[0].mxu0
    %2696 = vdwg.mxu0
    %v2697 = vadd.f32 %v2033, %v2689
    %v2698 = vadd.f32 %v2034, %v2694
    %v2699 = vadd.f32 %v28, %v2697
    %v2700 = vadd.f32 %v29, %v2698
    %v2701 = vsel %vm59, %v2699, 0.0
    %2702 = vadd.xlane.f32.xlu0 %v2701
    %v2703 = vpop.xlane.xlu0 %2702
    %v2704 = vsel %vm59, %v2700, 0.0
    %2705 = vadd.xlane.f32.xlu0 %v2704
    %v2706 = vpop.xlane.xlu0 %2705
    %v2707 = vrcp.pop 32.0
    %v2708 = vmul.f32 %v2703, %v2707
    %v2709 = vmul.f32 %v2706, %v2707
    %v2710 = vsub.f32 %v2699, %v2708
    %v2711 = vsub.f32 %v2700, %v2709
    %v2712 = vmul.f32 %v2710, %v2710
    %v2713 = vmul.f32 %v2711, %v2711
    %v2714 = vsel %vm59, %v2712, 0.0
    %2715 = vadd.xlane.f32.xlu0 %v2714
    %v2716 = vpop.xlane.xlu0 %2715
    %v2717 = vsel %vm59, %v2713, 0.0
    %2718 = vadd.xlane.f32.xlu0 %v2717
    %v2719 = vpop.xlane.xlu0 %2718
    %v2720 = vmul.f32 %v2716, %v2707
    %v2721 = vmul.f32 %v2719, %v2707
    %v2722 = vadd.f32 %v2720, 1e-05
    %v2723 = vadd.f32 %v2721, 1e-05
    %v2724 = vrsqrt.pop %v2722
    %v2725 = vrsqrt.pop %v2723
    %v2726 = vmul.f32 %v2710, %v2724
    %v2727 = vmul.f32 %v2711, %v2725
    %v2728 = vlaneseq
    %v2729 = vshrl.u32 %v2728, 7
    %v2730 = vsub.s32 0, %v2729
    %v2731 = vrot.slane %v30, %v2730
    %v2732 = vmul.f32 %v2726, %v2731
    %v2733 = vmul.f32 %v2727, %v2731
    %v2734 = vlaneseq
    %v2735 = vshrl.u32 %v2734, 7
    %v2736 = vsub.s32 1, %v2735
    %v2737 = vrot.slane %v30, %v2736
    %v2738 = vadd.f32 %v2732, %v2737
    %v2739 = vadd.f32 %v2733, %v2737
    %v2740 = vld [vmem:[%s3] sm:$0xff]
    %v2741 = vld [vmem:[%s3 + $0x8] sm:$0xff]
    %v2742 = vld [vmem:[%s3 + $0x10] sm:$0xff]
    %v2743 = vld [vmem:[%s3 + $0x18] sm:$0xff]
    %v2745 = vlaneseq
    %v2746 = vshrl.u32 %v2745, 7
    %v2747 = vsub.s32 0, %v2746
    %v2748 = vrot.slane %v31, %v2747
    %v2751 = vsel %vm59, %v2738, 0
    %v2754 = vsel %vm59, %v2739, 0
    %2756 = vmatprep.subr.mxu0 0.0
    %2757 = vmatpush1.msra.mxu0 %v2740
    %2758 = vmatprep.subr.mxu0 0.0
    %2759 = vmatpush1.msra.mxu0 %v2741
    %2760 = vmatprep.subr.mxu0 0.0
    %2761 = vmatpush1.msra.mxu0 %v2742
    %2762 = vmatprep.subr.mxu0 0.0
    %2763 = vmatpush1.msra.mxu0 %v2743
    %2764 = vmatprep.subr.mxu0 0.0
    %2765 = vmatpush1.msra.mxu0 0.0
    %2766 = vmatprep.subr.mxu0 0.0
    %2767 = vmatpush1.msra.mxu0 0.0
    %2768 = vmatprep.subr.mxu0 0.0
    %2769 = vmatpush1.msra.mxu0 0.0
    %2770 = vmatprep.subr.mxu0 0.0
    %2771 = vmatpush1.msra.mxu0 0.0
    %2772 = vmatprep.subr.mxu0 0.0
    %2773 = vmatpush1.msra.mxu0 0.0
    %2774 = vmatprep.subr.mxu0 0.0
    %2775 = vmatpush1.msra.mxu0 0.0
    %2776 = vmatprep.subr.mxu0 0.0
    %2777 = vmatpush1.msra.mxu0 0.0
    %2778 = vmatprep.subr.mxu0 0.0
    %2779 = vmatpush1.msra.mxu0 0.0
    %2780 = vmatprep.subr.mxu0 0.0
    %2781 = vmatpush1.msra.mxu0 0.0
    %2782 = vmatprep.subr.mxu0 0.0
    %2783 = vmatpush1.msra.mxu0 0.0
    %2784 = vmatprep.subr.mxu0 0.0
    %2785 = vmatpush1.msra.mxu0 0.0
    %2786 = vmatprep.subr.mxu0 0.0
    %2787 = vmatpush1.msra.mxu0 0.0
    %2788 = vmatprep.subr.mxu0 0.0
    %2789 = vmatpush1.msra.mxu0 0.0
    %2790 = vmatprep.subr.mxu0 0.0
    %2791 = vmatpush1.msra.mxu0 0.0
    %2792 = vmatprep.subr.mxu0 0.0
    %2793 = vmatpush1.msra.mxu0 0.0
    %2794 = vmatprep.subr.mxu0 0.0
    %2795 = vmatpush1.msra.mxu0 0.0
    %2796 = vmatprep.subr.mxu0 0.0
    %2797 = vmatpush1.msra.mxu0 0.0
    %2798 = vmatprep.subr.mxu0 0.0
    %2799 = vmatpush1.msra.mxu0 0.0
    %2800 = vmatprep.subr.mxu0 0.0
    %2801 = vmatpush1.msra.mxu0 0.0
    %2802 = vmatprep.subr.mxu0 0.0
    %2803 = vmatpush1.msra.mxu0 0.0
    %2804 = vmatprep.subr.mxu0 0.0
    %2805 = vmatpush1.msra.mxu0 0.0
    %2806 = vmatprep.subr.mxu0 0.0
    %2807 = vmatpush1.msra.mxu0 0.0
    %2808 = vmatprep.subr.mxu0 0.0
    %2809 = vmatpush1.msra.mxu0 0.0
    %2810 = vmatprep.subr.mxu0 0.0
    %2811 = vmatpush1.msra.mxu0 0.0
    %2812 = vmatprep.subr.mxu0 0.0
    %2813 = vmatpush1.msra.mxu0 0.0
    %2814 = vmatprep.subr.mxu0 0.0
    %2815 = vmatpush1.msra.mxu0 0.0
    %2816 = vmatprep.subr.mxu0 0.0
    %2817 = vmatpush1.msra.mxu0 0.0
    %2818 = vmatprep.subr.mxu0 0.0
    %2819 = vmatpush1.msra.mxu0 0.0
    %2820 = vmatprep.mubr.f32.mxu0 0.0
    %2821 = vmatmul.mubr.f32.gmra.mrb[0].mxu0 %v2751
    %v2822 = vpop.f32.mrb[0].mxu0
    %v2823 = vadd.f32 %v2748, %v2822
    %v2824 = vpop.f32.mrb[0].mxu0
    %2825 = vmatprep.mubr.f32.mxu0 0.0
    %2826 = vmatmul.mubr.f32.gmra.mrb[0].mxu0 %v2754
    %v2827 = vpop.f32.mrb[0].mxu0
    %v2828 = vadd.f32 %v2748, %v2827
    %v2829 = vpop.f32.mrb[0].mxu0
    %2830 = vdwg.mxu0
    %v2831 = vmax.f32 %v2823, 0.0
    %v2832 = vmax.f32 %v2828, 0.0
    %s2833 = scalar_lea.vmem %s3, 32
    %v2834 = vld [vmem:[%s2833] sm:$0xff]
    %v2835 = vld [vmem:[%s2833 + $0x8] sm:$0xff]
    %v2836 = vld [vmem:[%s2833 + $0x10] sm:$0xff]
    %v2837 = vld [vmem:[%s2833 + $0x18] sm:$0xff]
    %v2838 = vlaneseq
    %v2839 = vshrl.u32 %v2838, 7
    %v2840 = vsub.s32 2, %v2839
    %v2841 = vrot.slane %v30, %v2840
    %vm2842 = vcmask 523264
    %v2844 = vsel %vm2842, %v2831, 0
    %v2847 = vsel %vm2842, %v2832, 0
    %v2850 = vsel %vm2842, %v2834, 0
    %v2853 = vsel %vm2842, %v2835, 0
    %v2856 = vsel %vm2842, %v2836, 0
    %v2859 = vsel %vm2842, %v2837, 0
    %2861 = vmatprep.subr.mxu0 0.0
    %2862 = vmatpush1.xpose.msra.mxu0 %v2850
    %2863 = vmatprep.subr.mxu0 0.0
    %2864 = vmatpush1.xpose.msra.mxu0 %v2853
    %2865 = vmatprep.subr.mxu0 0.0
    %2866 = vmatpush1.xpose.msra.mxu0 %v2856
    %2867 = vmatprep.subr.mxu0 0.0
    %2868 = vmatpush1.xpose.msra.mxu0 %v2859
    %2869 = vmatprep.subr.mxu0 0.0
    %2870 = vmatpush1.xpose.msra.mxu0 0.0
    %2871 = vmatprep.subr.mxu0 0.0
    %2872 = vmatpush1.xpose.msra.mxu0 0.0
    %2873 = vmatprep.subr.mxu0 0.0
    %2874 = vmatpush1.xpose.msra.mxu0 0.0
    %2875 = vmatprep.subr.mxu0 0.0
    %2876 = vmatpush1.xpose.msra.mxu0 0.0
    %2877 = vmatprep.subr.mxu0 0.0
    %2878 = vmatpush1.xpose.msra.mxu0 0.0
    %2879 = vmatprep.subr.mxu0 0.0
    %2880 = vmatpush1.xpose.msra.mxu0 0.0
    %2881 = vmatprep.subr.mxu0 0.0
    %2882 = vmatpush1.xpose.msra.mxu0 0.0
    %2883 = vmatprep.subr.mxu0 0.0
    %2884 = vmatpush1.xpose.msra.mxu0 0.0
    %2885 = vmatprep.subr.mxu0 0.0
    %2886 = vmatpush1.xpose.msra.mxu0 0.0
    %2887 = vmatprep.subr.mxu0 0.0
    %2888 = vmatpush1.xpose.msra.mxu0 0.0
    %2889 = vmatprep.subr.mxu0 0.0
    %2890 = vmatpush1.xpose.msra.mxu0 0.0
    %2891 = vmatprep.subr.mxu0 0.0
    %2892 = vmatpush1.xpose.msra.mxu0 0.0
    %2893 = vmatprep.subr.mxu0 0.0
    %2894 = vmatpush1.xpose.msra.mxu0 0.0
    %2895 = vmatprep.subr.mxu0 0.0
    %2896 = vmatpush1.xpose.msra.mxu0 0.0
    %2897 = vmatprep.subr.mxu0 0.0
    %2898 = vmatpush1.xpose.msra.mxu0 0.0
    %2899 = vmatprep.subr.mxu0 0.0
    %2900 = vmatpush1.xpose.msra.mxu0 0.0
    %2901 = vmatprep.subr.mxu0 0.0
    %2902 = vmatpush1.xpose.msra.mxu0 0.0
    %2903 = vmatprep.subr.mxu0 0.0
    %2904 = vmatpush1.xpose.msra.mxu0 0.0
    %2905 = vmatprep.subr.mxu0 0.0
    %2906 = vmatpush1.xpose.msra.mxu0 0.0
    %2907 = vmatprep.subr.mxu0 0.0
    %2908 = vmatpush1.xpose.msra.mxu0 0.0
    %2909 = vmatprep.subr.mxu0 0.0
    %2910 = vmatpush1.xpose.msra.mxu0 0.0
    %2911 = vmatprep.subr.mxu0 0.0
    %2912 = vmatpush1.xpose.msra.mxu0 0.0
    %2913 = vmatprep.subr.mxu0 0.0
    %2914 = vmatpush1.xpose.msra.mxu0 0.0
    %2915 = vmatprep.subr.mxu0 0.0
    %2916 = vmatpush1.xpose.msra.mxu0 0.0
    %2917 = vmatprep.subr.mxu0 0.0
    %2918 = vmatpush1.xpose.msra.mxu0 0.0
    %2919 = vmatprep.subr.mxu0 0.0
    %2920 = vmatpush1.xpose.msra.mxu0 0.0
    %2921 = vmatprep.subr.mxu0 0.0
    %2922 = vmatpush1.xpose.msra.mxu0 0.0
    %2923 = vmatprep.subr.mxu0 0.0
    %2924 = vmatpush1.xpose.msra.mxu0 0.0
    %2925 = vmatprep.mubr.f32.mxu0 0.0
    %2926 = vmatmul.mubr.f32.gmra.mrb[0].mxu0 %v2844
    %v2927 = vpop.f32.mrb[0].mxu0
    %v2928 = vadd.f32 %v2841, %v2927
    %v2929 = vpop.f32.mrb[0].mxu0
    %2930 = vmatprep.mubr.f32.mxu0 0.0
    %2931 = vmatmul.mubr.f32.gmra.mrb[0].mxu0 %v2847
    %v2932 = vpop.f32.mrb[0].mxu0
    %v2933 = vadd.f32 %v2841, %v2932
    %v2934 = vpop.f32.mrb[0].mxu0
    %2935 = vdwg.mxu0
    %v2936 = vadd.f32 %v2738, %v2928
    %v2937 = vadd.f32 %v2739, %v2933
    %v2938 = vsel %vm59, %v2936, 0.0
    %2939 = vadd.xlane.f32.xlu0 %v2938
    %v2940 = vpop.xlane.xlu0 %2939
    %v2941 = vsel %vm59, %v2937, 0.0
    %2942 = vadd.xlane.f32.xlu0 %v2941
    %v2943 = vpop.xlane.xlu0 %2942
    %v2944 = vmul.f32 %v2940, %v2707
    %v2945 = vmul.f32 %v2943, %v2707
    %v2946 = vsub.f32 %v2936, %v2944
    %v2947 = vsub.f32 %v2937, %v2945
    %v2948 = vmul.f32 %v2946, %v2946
    %v2949 = vmul.f32 %v2947, %v2947
    %v2950 = vsel %vm59, %v2948, 0.0
    %2951 = vadd.xlane.f32.xlu0 %v2950
    %v2952 = vpop.xlane.xlu0 %2951
    %v2953 = vsel %vm59, %v2949, 0.0
    %2954 = vadd.xlane.f32.xlu0 %v2953
    %v2955 = vpop.xlane.xlu0 %2954
    %v2956 = vmul.f32 %v2952, %v2707
    %v2957 = vmul.f32 %v2955, %v2707
    %v2958 = vadd.f32 %v2956, 1e-05
    %v2959 = vadd.f32 %v2957, 1e-05
    %v2960 = vrsqrt.pop %v2958
    %v2961 = vrsqrt.pop %v2959
    %v2962 = vmul.f32 %v2946, %v2960
    %v2963 = vmul.f32 %v2947, %v2961
    %v2964 = vlaneseq
    %v2965 = vshrl.u32 %v2964, 7
    %v2966 = vsub.s32 3, %v2965
    %v2967 = vrot.slane %v30, %v2966
    %v2968 = vmul.f32 %v2962, %v2967
    %v2969 = vmul.f32 %v2963, %v2967
    %v2970 = vlaneseq
    %v2971 = vshrl.u32 %v2970, 7
    %v2972 = vsub.s32 4, %v2971
    %v2973 = vrot.slane %v30, %v2972
    %v2974 = vadd.f32 %v2968, %v2973
    %v2975 = vadd.f32 %v2969, %v2973
    %2976 = vst.msk [vmem:[#allocation4] sm:$0xff] %vm59, %v2974
    %2977 = vst.msk [vmem:[#allocation4 + $0x8] sm:$0xff] %vm59, %v2975
    // Predicated region
    $region22: #{tpu_custom_call.1} parent=1 // pred_check
      _
    $region23: #{tpu_custom_call.1} parent=1 // pred_check_branch
      %2979 = sbr.rel (0) target = $region25
    $region24: #{tpu_custom_call.1} parent=1 // pred_region
      %s2981 = ssub.s32 256, 256
      %2982 = vsyncadd [#allocation5], %s2981
      %s2983 = sshll.u32 [#allocation4], 4
      %s2984 = int_to_ptr.vmem [resolvable:$true] %s2983
      %2989 = dma.vmem_to_hbm [thread:$0]  %s2984, 256, %s6, [#allocation5], 128, 128, 8
    $region25: #{tpu_custom_call.1} parent=1 // pred_fallthru
      _
    // Predicated region
    $region26: #{tpu_custom_call.1} parent=1 // pred_check
      _
    $region27: #{tpu_custom_call.1} parent=1 // pred_check_branch
      %2991 = sbr.rel (0) target = $region29
    $region28: #{tpu_custom_call.1} parent=1 // pred_region
      %2992 = dma.done [#allocation5], 256
    $region29: #{tpu_custom_call.1} parent=1 // pred_fallthru
      _
    %2993 = vsyncpa [#allocation5], 1

</llo_original>
